<compile_context>
chip_gen: v7x
topology: tpu7x:2x2x1
jax: 0.10.0
libtpu: 0.0.40
codegen_flags: <defaults>
</compile_context>

<pallas_src>
import jax
import jax.numpy as jnp
import numpy as np
from jax import lax
from jax.experimental import pallas as pl
from jax.experimental.pallas import tpu as pltpu

# ---- hyperparameters (opt.*) ----
LAYERS = 2          # opt.layers
WORD_VEC = 16       # opt.word_vec_size
ENC_RNN = 32        # opt.enc_rnn_size
DEC_RNN = 32        # opt.dec_rnn_size
ATT_VEC = 32        # opt.att_vec_size
POOL = 2            # opt.maxout_pool_size
VOCAB = 32
PAD_IDX = 0


def decoder_kernel(gi0_ref, ro_ref, ctx_ref, pre_ref, mask_ref, h_init_ref, att0_ref,
                   wpack_ref,
                   g_out_ref, h_out_ref, attn_out_ref, ctx_out_ref):
    H = DEC_RNN
    T, B, _ = gi0_ref.shape
    S = ctx_ref.shape[1]
    Hout = H // POOL

    # ---- time-invariant loads / precompute, hoisted out of the recurrence ----
    ctx = ctx_ref[...]                                    # (B, S, E)
    pre = pre_ref[...]                                    # (B, S, ATT) = ctx @ Wpre + bpre
    mask = mask_ref[...]                                  # (B, S); 1.0 == PAD
    keep = 1.0 - mask
    bias = mask * (-1000000.0)

    # Packed-parameter row offsets (single DMA'd array, sliced once here).
    o1 = ENC_RNN
    o2 = o1 + DEC_RNN
    o3 = o2 + DEC_RNN
    o4 = o3 + DEC_RNN
    o5 = o4 + DEC_RNN
    o6 = o5 + ENC_RNN
    w0c = wpack_ref[0:o1, :]                              # (E, 3H)  cur_context part of Wih0
    whh0 = wpack_ref[o1:o2, :]                            # (H, 3H)
    wih1 = wpack_ref[o2:o3, :]                            # (H, 3H)
    whh1 = wpack_ref[o3:o4, :]                            # (H, 3H)
    wqo = wpack_ref[o4:o5, 0:ATT_VEC + H]                 # (H, ATT+H) fused [Wq | Wr_o(perm)]
    wr_c = wpack_ref[o5:o6, 0:H]                          # (E, H)    readout cur_context part
    bhh0 = wpack_ref[o6:o6 + 1, :]                        # (1, 3H)
    bih1 = wpack_ref[o6 + 1:o6 + 2, :]                    # (1, 3H)
    bhh1 = wpack_ref[o6 + 2:o6 + 3, :]                    # (1, 3H)
    wv = wpack_ref[o6 + 3:o6 + 4, 0:ATT_VEC]              # (1, ATT)
    wvb = jnp.broadcast_to(wv.reshape(1, 1, ATT_VEC), (B, S, ATT_VEC))

    def gru_gates(gi, gh, h):
        """PyTorch nn.GRUCell semantics (gate order r, z, n)."""
        r = jax.nn.sigmoid(gi[:, :H] + gh[:, :H])
        z = jax.nn.sigmoid(gi[:, H:2 * H] + gh[:, H:2 * H])
        n = jnp.tanh(gi[:, 2 * H:] + r * gh[:, 2 * H:])
        return (1.0 - z) * n + z * h

    def step(t, carry):
        h0, h1, cc, _ = carry

        # ---- StackedGRU (dropout between layers is identity in eval) ----
        # layer 0: the emb-dependent part (emb_t @ W0e + bih0) was hoisted to the wrapper.
        gi0 = gi0_ref[t] + jnp.dot(cc, w0c, preferred_element_type=jnp.float32)
        gh0 = jnp.dot(h0, whh0, preferred_element_type=jnp.float32) + bhh0
        h0n = gru_gates(gi0, gh0, h0)
        gi1 = jnp.dot(h0n, wih1, preferred_element_type=jnp.float32) + bih1
        gh1 = jnp.dot(h1, whh1, preferred_element_type=jnp.float32) + bhh1
        h1n = gru_gates(gi1, gh1, h1)
        output = h1n

        # ---- ConcatAttention (query matmul fused with readout-output matmul) ----
        qo = jnp.dot(output, wqo, preferred_element_type=jnp.float32)   # (B, ATT+H)
        targetT = qo[:, :ATT_VEC]                                       # output @ Wq
        ro_out = qo[:, ATT_VEC:]                                        # output @ Wr_o (perm)
        tmp = jnp.tanh(pre + targetT[:, None, :])                       # (B, S, ATT)
        energy = jnp.sum(tmp * wvb, axis=-1)                            # (B, S)
        energy = energy * keep + bias
        # Max-subtraction dropped: non-PAD energies are small and the -1e6 PAD bias
        # underflows exp to 0. Requires at least one non-PAD source position per row.
        e = jnp.exp(energy)
        score = e * pl.reciprocal(jnp.sum(e, axis=1, keepdims=True), approx=False)
        wctx = jnp.sum(score[:, :, None] * ctx, axis=1)                 # (B, E)
        # TODO(synk): at production B*S on v6e/v7x, cast pre/ctx/tmp to bf16 (keep GRU
        # state + softmax sum f32) and tile S (online-softmax) to respect v7x's 64MiB VMEM.

        # ---- readout + MaxOut ----
        # readout columns were permuted in the wrapper so each pool group is a contiguous
        # block of width Hout; the emb part (emb_t @ Wr_e + bread) was hoisted (ro_ref).
        readout = ro_ref[t] + ro_out + jnp.dot(wctx, wr_c, preferred_element_type=jnp.float32)
        mx = readout[:, :Hout]
        for p in range(1, POOL):
            mx = jnp.maximum(mx, readout[:, p * Hout:(p + 1) * Hout])

        # TODO(synk): for long T, accumulate mx into a lane-packed slab and store once at
        # the end instead of T small masked stores (biggest effect on v5e's single vst slot).
        g_out_ref[t] = mx
        return (h0n, h1n, wctx, score)

    init = (h_init_ref[0], h_init_ref[1], att0_ref[...], jnp.zeros((B, S), jnp.float32))
    unroll = True if T <= 16 else 8
    h0, h1, cc, score = lax.fori_loop(0, T, step, init, unroll=unroll)

    h_out_ref[0] = h0
    h_out_ref[1] = h1
    attn_out_ref[...] = score
    ctx_out_ref[...] = cc


def make_params(key):
    ks = jax.random.split(key, 16)
    u = lambda k, shape: jax.random.uniform(k, shape, jnp.float32, -0.1, 0.1)
    emb = u(ks[0], (VOCAB, WORD_VEC))
    emb = emb.at[PAD_IDX].set(0.0)                       # nn.Embedding padding_idx
    in0 = WORD_VEC + ENC_RNN                             # input_feed concat
    params = {
        'embedding': emb,
        # GRU layer 0 / 1 (PyTorch layout (3H, in) -> pre-transposed to (in, 3H))
        'wih0_t': u(ks[1], (3 * DEC_RNN, in0)).T,
        'whh0_t': u(ks[2], (3 * DEC_RNN, DEC_RNN)).T,
        'bih0': u(ks[3], (3 * DEC_RNN,)).reshape(1, -1),
        'bhh0': u(ks[4], (3 * DEC_RNN,)).reshape(1, -1),
        'wih1_t': u(ks[5], (3 * DEC_RNN, DEC_RNN)).T,
        'whh1_t': u(ks[6], (3 * DEC_RNN, DEC_RNN)).T,
        'bih1': u(ks[7], (3 * DEC_RNN,)).reshape(1, -1),
        'bhh1': u(ks[8], (3 * DEC_RNN,)).reshape(1, -1),
        # ConcatAttention
        'wpre_t': u(ks[9], (ATT_VEC, ENC_RNN)).T,
        'bpre': u(ks[10], (ATT_VEC,)).reshape(1, -1),
        'wq_t': u(ks[11], (ATT_VEC, DEC_RNN)).T,
        'wv': u(ks[12], (1, ATT_VEC)),
        # readout Linear(WORD_VEC + DEC_RNN + ENC_RNN -> DEC_RNN)
        'wread_t': u(ks[13], (DEC_RNN, WORD_VEC + DEC_RNN + ENC_RNN)).T,
        'bread': u(ks[14], (DEC_RNN,)).reshape(1, -1),
    }
    return params


def decoder_forward(params, input_ids, hidden, context, src_pad_mask, init_att):
    T, B = input_ids.shape
    S = context.shape[0]
    H = DEC_RNN
    Hout = H // POOL

    # ---- glue / time-invariant precompute done once, outside the recurrence ----
    emb = params['embedding'][input_ids]             # (T, B, WORD_VEC)
    ctx_bse = jnp.transpose(context, (1, 0, 2))      # (B, S, ENC_RNN)
    pre = jnp.einsum('bse,ea->bsa', ctx_bse, params['wpre_t']) + params['bpre']

    # Maxout column permutation: new column p*Hout + j = old column j*POOL + p, so each
    # pool group occupies a contiguous block of width Hout inside the kernel.
    perm = jnp.concatenate([jnp.arange(Hout, dtype=jnp.int32) * POOL + p for p in range(POOL)])
    wread_perm = params['wread_t'][:, perm]
    bread_perm = params['bread'][:, perm]
    wr_e = wread_perm[:WORD_VEC, :]
    wr_o = wread_perm[WORD_VEC:WORD_VEC + H, :]
    wr_c = wread_perm[WORD_VEC + H:, :]

    # Carry-independent matmuls hoisted out of the recurrence (single (T*B, K) GEMMs).
    emb2 = emb.reshape(T * B, WORD_VEC)
    gi0_emb = (emb2 @ params['wih0_t'][:WORD_VEC, :] + params['bih0']).reshape(T, B, 3 * H)
    ro_emb = (emb2 @ wr_e + bread_perm).reshape(T, B, H)

    # Fuse the two matmuls that consume h1 (query + readout-output) into one weight.
    wqo = jnp.concatenate([params['wq_t'], wr_o], axis=1)            # (H, ATT_VEC + H)

    # Pack every remaining small parameter into ONE array -> a single HBM->VMEM DMA.
    PCOLS = 3 * H
    pad_cols = lambda x: jnp.pad(x, ((0, 0), (0, PCOLS - x.shape[1])))
    wpack = jnp.concatenate([
        params['wih0_t'][WORD_VEC:, :],    # rows   0: 32  W0c (cur_context part of Wih0)
        params['whh0_t'],                  # rows  32: 64
        params['wih1_t'],                  # rows  64: 96
        params['whh1_t'],                  # rows  96:128
        pad_cols(wqo),                     # rows 128:160  (cols 0:ATT+H valid)
        pad_cols(wr_c),                    # rows 160:192  (cols 0:H valid)
        params['bhh0'],                    # row 192
        params['bih1'],                    # row 193
        params['bhh1'],                    # row 194
        pad_cols(params['wv']),            # row 195       (cols 0:ATT valid)
    ], axis=0)                             # (196, 96)

    args = (gi0_emb, ro_emb, ctx_bse, pre, src_pad_mask, hidden, init_att, wpack)

    def full(shape):
        return pl.BlockSpec(shape, lambda i, _r=len(shape): (0,) * _r)

    in_specs = [full(a.shape) for a in args]
    out_shapes = (
        jax.ShapeDtypeStruct((T, B, Hout), jnp.float32),
        jax.ShapeDtypeStruct((LAYERS, B, DEC_RNN), jnp.float32),
        jax.ShapeDtypeStruct((B, S), jnp.float32),
        jax.ShapeDtypeStruct((B, ENC_RNN), jnp.float32),
    )
    out_specs = tuple(full(s.shape) for s in out_shapes)

    grid_spec = pltpu.PrefetchScalarGridSpec(
        num_scalar_prefetch=0, grid=(1,),
        in_specs=in_specs, out_specs=out_specs)

    # TODO(synk): on v7x with production batches (B >= ~16), add a leading "parallel"
    # grid axis splitting B across the two TensorCores (recurrence is independent per
    # batch row) and set vmem_limit_bytes explicitly once ctx/pre are S-tiled.
    fn = pl.pallas_call(
        decoder_kernel, out_shape=out_shapes, grid_spec=grid_spec,
        compiler_params=pltpu.CompilerParams(dimension_semantics=("arbitrary",)))
    return fn(*args)


def decoder_reference(params, input_ids, hidden, context, src_pad_mask, init_att):
    """Pure-JAX reference mirroring the PyTorch forward (eval mode)."""
    H = DEC_RNN
    emb = params['embedding'][input_ids]
    ctx = jnp.transpose(context, (1, 0, 2))
    precompute = jnp.einsum('bse,ea->bsa', ctx, params['wpre_t']) + params['bpre']

    def gru(xp, h, wih_t, whh_t, bih, bhh):
        gi = xp @ wih_t + bih
        gh = h @ whh_t + bhh
        r = jax.nn.sigmoid(gi[:, :H] + gh[:, :H])
        z = jax.nn.sigmoid(gi[:, H:2 * H] + gh[:, H:2 * H])
        n = jnp.tanh(gi[:, 2 * H:] + r * gh[:, 2 * H:])
        return (1 - z) * n + z * h

    h = hidden
    cur_ctx = init_att
    g_list = []
    score = None
    for t in range(input_ids.shape[0]):
        emb_t = emb[t]
        x = jnp.concatenate([emb_t, cur_ctx], axis=1)
        h0 = gru(x, h[0], params['wih0_t'], params['whh0_t'], params['bih0'], params['bhh0'])
        h1 = gru(h0, h[1], params['wih1_t'], params['whh1_t'], params['bih1'], params['bhh1'])
        h = jnp.stack([h0, h1])
        output = h1
        targetT = output @ params['wq_t']
        tmp = jnp.tanh(precompute + targetT[:, None, :])
        energy = jnp.sum(tmp * params['wv'], axis=-1)
        energy = energy * (1 - src_pad_mask) + src_pad_mask * (-1000000.0)
        score = jax.nn.softmax(energy, axis=1)
        cur_ctx = jnp.einsum('bs,bse->be', score, ctx)
        r_in = jnp.concatenate([emb_t, output, cur_ctx], axis=1)
        readout = r_in @ params['wread_t'] + params['bread']
        g_list.append(jnp.max(readout.reshape(readout.shape[0], H // POOL, POOL), axis=-1))
    return jnp.stack(g_list), h, score, cur_ctx


if __name__ == "__main__":
    key = jax.random.PRNGKey(0)
    kp, k1, k2, k3, k4 = jax.random.split(key, 5)
    params = make_params(kp)

    T, B, S = 5, 2, 8
    input_ids = jax.random.randint(k1, (T, B), 1, VOCAB, dtype=jnp.int32)
    hidden = jax.random.uniform(k2, (LAYERS, B, DEC_RNN), jnp.float32, -0.5, 0.5)
    context = jax.random.uniform(k3, (S, B, ENC_RNN), jnp.float32, -0.5, 0.5)
    init_att = jax.random.uniform(k4, (B, ENC_RNN), jnp.float32, -0.5, 0.5)
    src_pad_mask = jnp.zeros((B, S), jnp.float32).at[0, -2:].set(1.0)  # last 2 src tokens of batch 0 are PAD

    outs = decoder_forward(params, input_ids, hidden, context, src_pad_mask, init_att)
    outs = jax.block_until_ready(outs)

    refs = decoder_reference(params, input_ids, hidden, context, src_pad_mask, init_att)
    for o, r in zip(outs, refs):
        np.testing.assert_allclose(np.asarray(o), np.asarray(r), rtol=1e-3, atol=1e-3)

    print("KERNEL_OK")
</pallas_src>

<mosaic_0001>
module attributes {stable_mosaic.version = 11 : i64} {
  func.func @decoder_kernel(%arg0: i32, %arg1: memref<5x2x96xf32, #tpu.memory_space<vmem>>, %arg2: memref<5x2x32xf32, #tpu.memory_space<vmem>>, %arg3: memref<2x8x32xf32, #tpu.memory_space<vmem>>, %arg4: memref<2x8x32xf32, #tpu.memory_space<vmem>>, %arg5: memref<2x8xf32, #tpu.memory_space<vmem>>, %arg6: memref<2x2x32xf32, #tpu.memory_space<vmem>>, %arg7: memref<2x32xf32, #tpu.memory_space<vmem>>, %arg8: memref<196x96xf32, #tpu.memory_space<vmem>>, %arg9: memref<5x2x16xf32, #tpu.memory_space<vmem>>, %arg10: memref<2x2x32xf32, #tpu.memory_space<vmem>>, %arg11: memref<2x8xf32, #tpu.memory_space<vmem>>, %arg12: memref<2x32xf32, #tpu.memory_space<vmem>>) attributes {dimension_semantics = [#tpu.dimension_semantics<arbitrary>], iteration_bounds = array<i64: 1>, scalar_prefetch = 0 : i64, scratch_operands = 0 : i64, tpu.core_type = #tpu.core_type<tc>, window_params = [{pipeline_mode = #tpu.pipeline_mode<synchronous>, transform_indices = @transform_0, window_bounds = array<i64: 5, 2, 96>}, {pipeline_mode = #tpu.pipeline_mode<synchronous>, transform_indices = @transform_1, window_bounds = array<i64: 5, 2, 32>}, {pipeline_mode = #tpu.pipeline_mode<synchronous>, transform_indices = @transform_2, window_bounds = array<i64: 2, 8, 32>}, {pipeline_mode = #tpu.pipeline_mode<synchronous>, transform_indices = @transform_3, window_bounds = array<i64: 2, 8, 32>}, {pipeline_mode = #tpu.pipeline_mode<synchronous>, transform_indices = @transform_4, window_bounds = array<i64: 2, 8>}, {pipeline_mode = #tpu.pipeline_mode<synchronous>, transform_indices = @transform_5, window_bounds = array<i64: 2, 2, 32>}, {pipeline_mode = #tpu.pipeline_mode<synchronous>, transform_indices = @transform_6, window_bounds = array<i64: 2, 32>}, {pipeline_mode = #tpu.pipeline_mode<synchronous>, transform_indices = @transform_7, window_bounds = array<i64: 196, 96>}, {pipeline_mode = #tpu.pipeline_mode<synchronous>, transform_indices = @transform_8, window_bounds = array<i64: 5, 2, 16>}, {pipeline_mode = #tpu.pipeline_mode<synchronous>, transform_indices = @transform_9, window_bounds = array<i64: 2, 2, 32>}, {pipeline_mode = #tpu.pipeline_mode<synchronous>, transform_indices = @transform_10, window_bounds = array<i64: 2, 8>}, {pipeline_mode = #tpu.pipeline_mode<synchronous>, transform_indices = @transform_11, window_bounds = array<i64: 2, 32>}]} {
    %c0 = arith.constant 0 : index
    %c0_0 = arith.constant 0 : index
    %c0_1 = arith.constant 0 : index
    %0 = vector.load %arg3[%c0, %c0_0, %c0_1] : memref<2x8x32xf32, #tpu.memory_space<vmem>>, vector<2x8x32xf32>
    %c0_2 = arith.constant 0 : index
    %c0_3 = arith.constant 0 : index
    %c0_4 = arith.constant 0 : index
    %1 = vector.load %arg4[%c0_2, %c0_3, %c0_4] : memref<2x8x32xf32, #tpu.memory_space<vmem>>, vector<2x8x32xf32>
    %c0_5 = arith.constant 0 : index
    %c0_6 = arith.constant 0 : index
    %2 = vector.load %arg5[%c0_5, %c0_6] : memref<2x8xf32, #tpu.memory_space<vmem>>, vector<2x8xf32>
    %cst = arith.constant 1.000000e+00 : f32
    %3 = vector.broadcast %cst : f32 to vector<2x8xf32>
    %4 = arith.subf %3, %2 : vector<2x8xf32>
    %cst_7 = arith.constant -1.000000e+06 : f32
    %5 = vector.broadcast %cst_7 : f32 to vector<2x8xf32>
    %6 = arith.mulf %2, %5 : vector<2x8xf32>
    %c0_8 = arith.constant 0 : index
    %c0_9 = arith.constant 0 : index
    %7 = vector.load %arg8[%c0_8, %c0_9] : memref<196x96xf32, #tpu.memory_space<vmem>>, vector<32x96xf32>
    %c32 = arith.constant 32 : index
    %c0_10 = arith.constant 0 : index
    %8 = vector.load %arg8[%c32, %c0_10] : memref<196x96xf32, #tpu.memory_space<vmem>>, vector<32x96xf32>
    %c64 = arith.constant 64 : index
    %c0_11 = arith.constant 0 : index
    %9 = vector.load %arg8[%c64, %c0_11] : memref<196x96xf32, #tpu.memory_space<vmem>>, vector<32x96xf32>
    %c96 = arith.constant 96 : index
    %c0_12 = arith.constant 0 : index
    %10 = vector.load %arg8[%c96, %c0_12] : memref<196x96xf32, #tpu.memory_space<vmem>>, vector<32x96xf32>
    %c128 = arith.constant 128 : index
    %c0_13 = arith.constant 0 : index
    %11 = vector.load %arg8[%c128, %c0_13] : memref<196x96xf32, #tpu.memory_space<vmem>>, vector<32x64xf32>
    %c160 = arith.constant 160 : index
    %c0_14 = arith.constant 0 : index
    %12 = vector.load %arg8[%c160, %c0_14] : memref<196x96xf32, #tpu.memory_space<vmem>>, vector<32x32xf32>
    %c192 = arith.constant 192 : index
    %c0_15 = arith.constant 0 : index
    %13 = vector.load %arg8[%c192, %c0_15] : memref<196x96xf32, #tpu.memory_space<vmem>>, vector<1x96xf32>
    %c193 = arith.constant 193 : index
    %c0_16 = arith.constant 0 : index
    %14 = vector.load %arg8[%c193, %c0_16] : memref<196x96xf32, #tpu.memory_space<vmem>>, vector<1x96xf32>
    %c194 = arith.constant 194 : index
    %c0_17 = arith.constant 0 : index
    %15 = vector.load %arg8[%c194, %c0_17] : memref<196x96xf32, #tpu.memory_space<vmem>>, vector<1x96xf32>
    %c195 = arith.constant 195 : index
    %c0_18 = arith.constant 0 : index
    %16 = vector.load %arg8[%c195, %c0_18] : memref<196x96xf32, #tpu.memory_space<vmem>>, vector<1x32xf32>
    %17 = vector.shape_cast %16 : vector<1x32xf32> to vector<1x1x32xf32>
    %18 = vector.shape_cast %17 : vector<1x1x32xf32> to vector<1x1x32xf32>
    %19 = vector.broadcast %18 : vector<1x1x32xf32> to vector<2x8x32xf32>
    %c0_19 = arith.constant 0 : index
    %c0_20 = arith.constant 0 : index
    %c0_21 = arith.constant 0 : index
    %20 = vector.load %arg6[%c0_19, %c0_20, %c0_21] : memref<2x2x32xf32, #tpu.memory_space<vmem>>, vector<1x2x32xf32>
    %21 = vector.shape_cast %20 : vector<1x2x32xf32> to vector<2x32xf32>
    %c1 = arith.constant 1 : index
    %c0_22 = arith.constant 0 : index
    %c0_23 = arith.constant 0 : index
    %22 = vector.load %arg6[%c1, %c0_22, %c0_23] : memref<2x2x32xf32, #tpu.memory_space<vmem>>, vector<1x2x32xf32>
    %23 = vector.shape_cast %22 : vector<1x2x32xf32> to vector<2x32xf32>
    %c0_24 = arith.constant 0 : index
    %c0_25 = arith.constant 0 : index
    %24 = vector.load %arg7[%c0_24, %c0_25] : memref<2x32xf32, #tpu.memory_space<vmem>>, vector<2x32xf32>
    %cst_26 = arith.constant 0.000000e+00 : f32
    %25 = vector.broadcast %cst_26 : f32 to vector<2x8xf32>
    %c0_i32 = arith.constant 0 : i32
    %26 = arith.index_cast %c0_i32 : i32 to index
    %c0_27 = arith.constant 0 : index
    %c0_28 = arith.constant 0 : index
    %27 = vector.load %arg1[%26, %c0_27, %c0_28] : memref<5x2x96xf32, #tpu.memory_space<vmem>>, vector<1x2x96xf32>
    %28 = vector.shape_cast %27 : vector<1x2x96xf32> to vector<2x96xf32>
    %cst_29 = arith.constant dense<0.000000e+00> : vector<2x96xf32>
    %29 = tpu.matmul %24, %7, %cst_29 {dimension_numbers = #tpu.dot_dimension_numbers<[1], [0], [0], [1], [0, 0, 1, 1], [], []>} : vector<2x32xf32>, vector<32x96xf32>, vector<2x96xf32> -> vector<2x96xf32>
    %30 = arith.addf %28, %29 : vector<2x96xf32>
    %cst_30 = arith.constant dense<0.000000e+00> : vector<2x96xf32>
    %31 = tpu.matmul %21, %8, %cst_30 {dimension_numbers = #tpu.dot_dimension_numbers<[1], [0], [0], [1], [0, 0, 1, 1], [], []>} : vector<2x32xf32>, vector<32x96xf32>, vector<2x96xf32> -> vector<2x96xf32>
    %32 = vector.broadcast %13 : vector<1x96xf32> to vector<2x96xf32>
    %33 = arith.addf %31, %32 : vector<2x96xf32>
    %34 = vector.extract_strided_slice %30 {offsets = [0, 0], sizes = [2, 32], strides = [1, 1]} : vector<2x96xf32> to vector<2x32xf32>
    %35 = vector.extract_strided_slice %33 {offsets = [0, 0], sizes = [2, 32], strides = [1, 1]} : vector<2x96xf32> to vector<2x32xf32>
    %36 = arith.addf %34, %35 : vector<2x32xf32>
    %37 = arith.negf %36 : vector<2x32xf32>
    %38 = math.exp %37 : vector<2x32xf32>
    %cst_31 = arith.constant 1.000000e+00 : f32
    %39 = vector.broadcast %cst_31 : f32 to vector<2x32xf32>
    %40 = arith.addf %39, %38 : vector<2x32xf32>
    %41 = arith.divf %39, %40 : vector<2x32xf32>
    %42 = vector.extract_strided_slice %30 {offsets = [0, 32], sizes = [2, 32], strides = [1, 1]} : vector<2x96xf32> to vector<2x32xf32>
    %43 = vector.extract_strided_slice %33 {offsets = [0, 32], sizes = [2, 32], strides = [1, 1]} : vector<2x96xf32> to vector<2x32xf32>
    %44 = arith.addf %42, %43 : vector<2x32xf32>
    %45 = arith.negf %44 : vector<2x32xf32>
    %46 = math.exp %45 : vector<2x32xf32>
    %cst_32 = arith.constant 1.000000e+00 : f32
    %47 = vector.broadcast %cst_32 : f32 to vector<2x32xf32>
    %48 = arith.addf %47, %46 : vector<2x32xf32>
    %49 = arith.divf %47, %48 : vector<2x32xf32>
    %50 = vector.extract_strided_slice %30 {offsets = [0, 64], sizes = [2, 32], strides = [1, 1]} : vector<2x96xf32> to vector<2x32xf32>
    %51 = vector.extract_strided_slice %33 {offsets = [0, 64], sizes = [2, 32], strides = [1, 1]} : vector<2x96xf32> to vector<2x32xf32>
    %52 = arith.mulf %41, %51 : vector<2x32xf32>
    %53 = arith.addf %50, %52 : vector<2x32xf32>
    %54 = math.tanh %53 : vector<2x32xf32>
    %cst_33 = arith.constant 1.000000e+00 : f32
    %55 = vector.broadcast %cst_33 : f32 to vector<2x32xf32>
    %56 = arith.subf %55, %49 : vector<2x32xf32>
    %57 = arith.mulf %56, %54 : vector<2x32xf32>
    %58 = arith.mulf %49, %21 : vector<2x32xf32>
    %59 = arith.addf %57, %58 : vector<2x32xf32>
    %cst_34 = arith.constant dense<0.000000e+00> : vector<2x96xf32>
    %60 = tpu.matmul %59, %9, %cst_34 {dimension_numbers = #tpu.dot_dimension_numbers<[1], [0], [0], [1], [0, 0, 1, 1], [], []>} : vector<2x32xf32>, vector<32x96xf32>, vector<2x96xf32> -> vector<2x96xf32>
    %61 = vector.broadcast %14 : vector<1x96xf32> to vector<2x96xf32>
    %62 = arith.addf %60, %61 : vector<2x96xf32>
    %cst_35 = arith.constant dense<0.000000e+00> : vector<2x96xf32>
    %63 = tpu.matmul %23, %10, %cst_35 {dimension_numbers = #tpu.dot_dimension_numbers<[1], [0], [0], [1], [0, 0, 1, 1], [], []>} : vector<2x32xf32>, vector<32x96xf32>, vector<2x96xf32> -> vector<2x96xf32>
    %64 = vector.broadcast %15 : vector<1x96xf32> to vector<2x96xf32>
    %65 = arith.addf %63, %64 : vector<2x96xf32>
    %66 = vector.extract_strided_slice %62 {offsets = [0, 0], sizes = [2, 32], strides = [1, 1]} : vector<2x96xf32> to vector<2x32xf32>
    %67 = vector.extract_strided_slice %65 {offsets = [0, 0], sizes = [2, 32], strides = [1, 1]} : vector<2x96xf32> to vector<2x32xf32>
    %68 = arith.addf %66, %67 : vector<2x32xf32>
    %69 = arith.negf %68 : vector<2x32xf32>
    %70 = math.exp %69 : vector<2x32xf32>
    %cst_36 = arith.constant 1.000000e+00 : f32
    %71 = vector.broadcast %cst_36 : f32 to vector<2x32xf32>
    %72 = arith.addf %71, %70 : vector<2x32xf32>
    %73 = arith.divf %71, %72 : vector<2x32xf32>
    %74 = vector.extract_strided_slice %62 {offsets = [0, 32], sizes = [2, 32], strides = [1, 1]} : vector<2x96xf32> to vector<2x32xf32>
    %75 = vector.extract_strided_slice %65 {offsets = [0, 32], sizes = [2, 32], strides = [1, 1]} : vector<2x96xf32> to vector<2x32xf32>
    %76 = arith.addf %74, %75 : vector<2x32xf32>
    %77 = arith.negf %76 : vector<2x32xf32>
    %78 = math.exp %77 : vector<2x32xf32>
    %cst_37 = arith.constant 1.000000e+00 : f32
    %79 = vector.broadcast %cst_37 : f32 to vector<2x32xf32>
    %80 = arith.addf %79, %78 : vector<2x32xf32>
    %81 = arith.divf %79, %80 : vector<2x32xf32>
    %82 = vector.extract_strided_slice %62 {offsets = [0, 64], sizes = [2, 32], strides = [1, 1]} : vector<2x96xf32> to vector<2x32xf32>
    %83 = vector.extract_strided_slice %65 {offsets = [0, 64], sizes = [2, 32], strides = [1, 1]} : vector<2x96xf32> to vector<2x32xf32>
    %84 = arith.mulf %73, %83 : vector<2x32xf32>
    %85 = arith.addf %82, %84 : vector<2x32xf32>
    %86 = math.tanh %85 : vector<2x32xf32>
    %cst_38 = arith.constant 1.000000e+00 : f32
    %87 = vector.broadcast %cst_38 : f32 to vector<2x32xf32>
    %88 = arith.subf %87, %81 : vector<2x32xf32>
    %89 = arith.mulf %88, %86 : vector<2x32xf32>
    %90 = arith.mulf %81, %23 : vector<2x32xf32>
    %91 = arith.addf %89, %90 : vector<2x32xf32>
    %cst_39 = arith.constant dense<0.000000e+00> : vector<2x64xf32>
    %92 = tpu.matmul %91, %11, %cst_39 {dimension_numbers = #tpu.dot_dimension_numbers<[1], [0], [0], [1], [0, 0, 1, 1], [], []>} : vector<2x32xf32>, vector<32x64xf32>, vector<2x64xf32> -> vector<2x64xf32>
    %93 = vector.extract_strided_slice %92 {offsets = [0, 0], sizes = [2, 32], strides = [1, 1]} : vector<2x64xf32> to vector<2x32xf32>
    %94 = vector.extract_strided_slice %92 {offsets = [0, 32], sizes = [2, 32], strides = [1, 1]} : vector<2x64xf32> to vector<2x32xf32>
    %95 = vector.shape_cast %93 : vector<2x32xf32> to vector<2x1x32xf32>
    %96 = vector.broadcast %95 : vector<2x1x32xf32> to vector<2x8x32xf32>
    %97 = arith.addf %1, %96 : vector<2x8x32xf32>
    %98 = math.tanh %97 : vector<2x8x32xf32>
    %99 = arith.mulf %98, %19 : vector<2x8x32xf32>
    %cst_40 = arith.constant dense<0.000000e+00> : vector<2x8xf32>
    %100 = vector.multi_reduction <add>, %99, %cst_40 [2] : vector<2x8x32xf32> to vector<2x8xf32>
    %101 = arith.mulf %100, %4 : vector<2x8xf32>
    %102 = arith.addf %101, %6 : vector<2x8xf32>
    %103 = math.exp %102 : vector<2x8xf32>
    %cst_41 = arith.constant dense<0.000000e+00> : vector<2xf32>
    %104 = vector.multi_reduction <add>, %103, %cst_41 [1] : vector<2x8xf32> to vector<2xf32>
    %105 = vector.shape_cast %104 : vector<2xf32> to vector<2x1xf32>
    %106 = tpu.reciprocal %105 : vector<2x1xf32> -> vector<2x1xf32>
    %107 = vector.broadcast %106 : vector<2x1xf32> to vector<2x8xf32>
    %108 = arith.mulf %103, %107 : vector<2x8xf32>
    %109 = vector.shape_cast %108 : vector<2x8xf32> to vector<2x8x1xf32>
    %110 = vector.broadcast %109 : vector<2x8x1xf32> to vector<2x8x32xf32>
    %111 = arith.mulf %110, %0 : vector<2x8x32xf32>
    %cst_42 = arith.constant dense<0.000000e+00> : vector<2x32xf32>
    %112 = vector.multi_reduction <add>, %111, %cst_42 [1] : vector<2x8x32xf32> to vector<2x32xf32>
    %113 = arith.index_cast %c0_i32 : i32 to index
    %c0_43 = arith.constant 0 : index
    %c0_44 = arith.constant 0 : index
    %114 = vector.load %arg2[%113, %c0_43, %c0_44] : memref<5x2x32xf32, #tpu.memory_space<vmem>>, vector<1x2x32xf32>
    %115 = vector.shape_cast %114 : vector<1x2x32xf32> to vector<2x32xf32>
    %116 = arith.addf %115, %94 : vector<2x32xf32>
    %cst_45 = arith.constant dense<0.000000e+00> : vector<2x32xf32>
    %117 = tpu.matmul %112, %12, %cst_45 {dimension_numbers = #tpu.dot_dimension_numbers<[1], [0], [0], [1], [0, 0, 1, 1], [], []>} : vector<2x32xf32>, vector<32x32xf32>, vector<2x32xf32> -> vector<2x32xf32>
    %118 = arith.addf %116, %117 : vector<2x32xf32>
    %119 = vector.extract_strided_slice %118 {offsets = [0, 0], sizes = [2, 16], strides = [1, 1]} : vector<2x32xf32> to vector<2x16xf32>
    %120 = vector.extract_strided_slice %118 {offsets = [0, 16], sizes = [2, 16], strides = [1, 1]} : vector<2x32xf32> to vector<2x16xf32>
    %121 = arith.maximumf %119, %120 : vector<2x16xf32>
    %122 = arith.index_cast %c0_i32 : i32 to index
    %c0_46 = arith.constant 0 : index
    %c0_47 = arith.constant 0 : index
    %123 = vector.load %arg9[%122, %c0_46, %c0_47] : memref<5x2x16xf32, #tpu.memory_space<vmem>>, vector<1x2x16xf32>
    %124 = vector.shape_cast %123 : vector<1x2x16xf32> to vector<2x16xf32>
    %125 = vector.shape_cast %121 : vector<2x16xf32> to vector<1x2x16xf32>
    tpu.vector_store %arg9[%122, %c0_46, %c0_47], %125 {strides = array<i32>} : memref<5x2x16xf32, #tpu.memory_space<vmem>>, vector<1x2x16xf32>,
    %c1_i32 = arith.constant 1 : i32
    %126 = arith.index_cast %c1_i32 : i32 to index
    %c0_48 = arith.constant 0 : index
    %c0_49 = arith.constant 0 : index
    %127 = vector.load %arg1[%126, %c0_48, %c0_49] : memref<5x2x96xf32, #tpu.memory_space<vmem>>, vector<1x2x96xf32>
    %128 = vector.shape_cast %127 : vector<1x2x96xf32> to vector<2x96xf32>
    %cst_50 = arith.constant dense<0.000000e+00> : vector<2x96xf32>
    %129 = tpu.matmul %112, %7, %cst_50 {dimension_numbers = #tpu.dot_dimension_numbers<[1], [0], [0], [1], [0, 0, 1, 1], [], []>} : vector<2x32xf32>, vector<32x96xf32>, vector<2x96xf32> -> vector<2x96xf32>
    %130 = arith.addf %128, %129 : vector<2x96xf32>
    %cst_51 = arith.constant dense<0.000000e+00> : vector<2x96xf32>
    %131 = tpu.matmul %59, %8, %cst_51 {dimension_numbers = #tpu.dot_dimension_numbers<[1], [0], [0], [1], [0, 0, 1, 1], [], []>} : vector<2x32xf32>, vector<32x96xf32>, vector<2x96xf32> -> vector<2x96xf32>
    %132 = vector.broadcast %13 : vector<1x96xf32> to vector<2x96xf32>
    %133 = arith.addf %131, %132 : vector<2x96xf32>
    %134 = vector.extract_strided_slice %130 {offsets = [0, 0], sizes = [2, 32], strides = [1, 1]} : vector<2x96xf32> to vector<2x32xf32>
    %135 = vector.extract_strided_slice %133 {offsets = [0, 0], sizes = [2, 32], strides = [1, 1]} : vector<2x96xf32> to vector<2x32xf32>
    %136 = arith.addf %134, %135 : vector<2x32xf32>
    %137 = arith.negf %136 : vector<2x32xf32>
    %138 = math.exp %137 : vector<2x32xf32>
    %cst_52 = arith.constant 1.000000e+00 : f32
    %139 = vector.broadcast %cst_52 : f32 to vector<2x32xf32>
    %140 = arith.addf %139, %138 : vector<2x32xf32>
    %141 = arith.divf %139, %140 : vector<2x32xf32>
    %142 = vector.extract_strided_slice %130 {offsets = [0, 32], sizes = [2, 32], strides = [1, 1]} : vector<2x96xf32> to vector<2x32xf32>
    %143 = vector.extract_strided_slice %133 {offsets = [0, 32], sizes = [2, 32], strides = [1, 1]} : vector<2x96xf32> to vector<2x32xf32>
    %144 = arith.addf %142, %143 : vector<2x32xf32>
    %145 = arith.negf %144 : vector<2x32xf32>
    %146 = math.exp %145 : vector<2x32xf32>
    %cst_53 = arith.constant 1.000000e+00 : f32
    %147 = vector.broadcast %cst_53 : f32 to vector<2x32xf32>
    %148 = arith.addf %147, %146 : vector<2x32xf32>
    %149 = arith.divf %147, %148 : vector<2x32xf32>
    %150 = vector.extract_strided_slice %130 {offsets = [0, 64], sizes = [2, 32], strides = [1, 1]} : vector<2x96xf32> to vector<2x32xf32>
    %151 = vector.extract_strided_slice %133 {offsets = [0, 64], sizes = [2, 32], strides = [1, 1]} : vector<2x96xf32> to vector<2x32xf32>
    %152 = arith.mulf %141, %151 : vector<2x32xf32>
    %153 = arith.addf %150, %152 : vector<2x32xf32>
    %154 = math.tanh %153 : vector<2x32xf32>
    %cst_54 = arith.constant 1.000000e+00 : f32
    %155 = vector.broadcast %cst_54 : f32 to vector<2x32xf32>
    %156 = arith.subf %155, %149 : vector<2x32xf32>
    %157 = arith.mulf %156, %154 : vector<2x32xf32>
    %158 = arith.mulf %149, %59 : vector<2x32xf32>
    %159 = arith.addf %157, %158 : vector<2x32xf32>
    %cst_55 = arith.constant dense<0.000000e+00> : vector<2x96xf32>
    %160 = tpu.matmul %159, %9, %cst_55 {dimension_numbers = #tpu.dot_dimension_numbers<[1], [0], [0], [1], [0, 0, 1, 1], [], []>} : vector<2x32xf32>, vector<32x96xf32>, vector<2x96xf32> -> vector<2x96xf32>
    %161 = vector.broadcast %14 : vector<1x96xf32> to vector<2x96xf32>
    %162 = arith.addf %160, %161 : vector<2x96xf32>
    %cst_56 = arith.constant dense<0.000000e+00> : vector<2x96xf32>
    %163 = tpu.matmul %91, %10, %cst_56 {dimension_numbers = #tpu.dot_dimension_numbers<[1], [0], [0], [1], [0, 0, 1, 1], [], []>} : vector<2x32xf32>, vector<32x96xf32>, vector<2x96xf32> -> vector<2x96xf32>
    %164 = vector.broadcast %15 : vector<1x96xf32> to vector<2x96xf32>
    %165 = arith.addf %163, %164 : vector<2x96xf32>
    %166 = vector.extract_strided_slice %162 {offsets = [0, 0], sizes = [2, 32], strides = [1, 1]} : vector<2x96xf32> to vector<2x32xf32>
    %167 = vector.extract_strided_slice %165 {offsets = [0, 0], sizes = [2, 32], strides = [1, 1]} : vector<2x96xf32> to vector<2x32xf32>
    %168 = arith.addf %166, %167 : vector<2x32xf32>
    %169 = arith.negf %168 : vector<2x32xf32>
    %170 = math.exp %169 : vector<2x32xf32>
    %cst_57 = arith.constant 1.000000e+00 : f32
    %171 = vector.broadcast %cst_57 : f32 to vector<2x32xf32>
    %172 = arith.addf %171, %170 : vector<2x32xf32>
    %173 = arith.divf %171, %172 : vector<2x32xf32>
    %174 = vector.extract_strided_slice %162 {offsets = [0, 32], sizes = [2, 32], strides = [1, 1]} : vector<2x96xf32> to vector<2x32xf32>
    %175 = vector.extract_strided_slice %165 {offsets = [0, 32], sizes = [2, 32], strides = [1, 1]} : vector<2x96xf32> to vector<2x32xf32>
    %176 = arith.addf %174, %175 : vector<2x32xf32>
    %177 = arith.negf %176 : vector<2x32xf32>
    %178 = math.exp %177 : vector<2x32xf32>
    %cst_58 = arith.constant 1.000000e+00 : f32
    %179 = vector.broadcast %cst_58 : f32 to vector<2x32xf32>
    %180 = arith.addf %179, %178 : vector<2x32xf32>
    %181 = arith.divf %179, %180 : vector<2x32xf32>
    %182 = vector.extract_strided_slice %162 {offsets = [0, 64], sizes = [2, 32], strides = [1, 1]} : vector<2x96xf32> to vector<2x32xf32>
    %183 = vector.extract_strided_slice %165 {offsets = [0, 64], sizes = [2, 32], strides = [1, 1]} : vector<2x96xf32> to vector<2x32xf32>
    %184 = arith.mulf %173, %183 : vector<2x32xf32>
    %185 = arith.addf %182, %184 : vector<2x32xf32>
    %186 = math.tanh %185 : vector<2x32xf32>
    %cst_59 = arith.constant 1.000000e+00 : f32
    %187 = vector.broadcast %cst_59 : f32 to vector<2x32xf32>
    %188 = arith.subf %187, %181 : vector<2x32xf32>
    %189 = arith.mulf %188, %186 : vector<2x32xf32>
    %190 = arith.mulf %181, %91 : vector<2x32xf32>
    %191 = arith.addf %189, %190 : vector<2x32xf32>
    %cst_60 = arith.constant dense<0.000000e+00> : vector<2x64xf32>
    %192 = tpu.matmul %191, %11, %cst_60 {dimension_numbers = #tpu.dot_dimension_numbers<[1], [0], [0], [1], [0, 0, 1, 1], [], []>} : vector<2x32xf32>, vector<32x64xf32>, vector<2x64xf32> -> vector<2x64xf32>
    %193 = vector.extract_strided_slice %192 {offsets = [0, 0], sizes = [2, 32], strides = [1, 1]} : vector<2x64xf32> to vector<2x32xf32>
    %194 = vector.extract_strided_slice %192 {offsets = [0, 32], sizes = [2, 32], strides = [1, 1]} : vector<2x64xf32> to vector<2x32xf32>
    %195 = vector.shape_cast %193 : vector<2x32xf32> to vector<2x1x32xf32>
    %196 = vector.broadcast %195 : vector<2x1x32xf32> to vector<2x8x32xf32>
    %197 = arith.addf %1, %196 : vector<2x8x32xf32>
    %198 = math.tanh %197 : vector<2x8x32xf32>
    %199 = arith.mulf %198, %19 : vector<2x8x32xf32>
    %cst_61 = arith.constant dense<0.000000e+00> : vector<2x8xf32>
    %200 = vector.multi_reduction <add>, %199, %cst_61 [2] : vector<2x8x32xf32> to vector<2x8xf32>
    %201 = arith.mulf %200, %4 : vector<2x8xf32>
    %202 = arith.addf %201, %6 : vector<2x8xf32>
    %203 = math.exp %202 : vector<2x8xf32>
    %cst_62 = arith.constant dense<0.000000e+00> : vector<2xf32>
    %204 = vector.multi_reduction <add>, %203, %cst_62 [1] : vector<2x8xf32> to vector<2xf32>
    %205 = vector.shape_cast %204 : vector<2xf32> to vector<2x1xf32>
    %206 = tpu.reciprocal %205 : vector<2x1xf32> -> vector<2x1xf32>
    %207 = vector.broadcast %206 : vector<2x1xf32> to vector<2x8xf32>
    %208 = arith.mulf %203, %207 : vector<2x8xf32>
    %209 = vector.shape_cast %208 : vector<2x8xf32> to vector<2x8x1xf32>
    %210 = vector.broadcast %209 : vector<2x8x1xf32> to vector<2x8x32xf32>
    %211 = arith.mulf %210, %0 : vector<2x8x32xf32>
    %cst_63 = arith.constant dense<0.000000e+00> : vector<2x32xf32>
    %212 = vector.multi_reduction <add>, %211, %cst_63 [1] : vector<2x8x32xf32> to vector<2x32xf32>
    %213 = arith.index_cast %c1_i32 : i32 to index
    %c0_64 = arith.constant 0 : index
    %c0_65 = arith.constant 0 : index
    %214 = vector.load %arg2[%213, %c0_64, %c0_65] : memref<5x2x32xf32, #tpu.memory_space<vmem>>, vector<1x2x32xf32>
    %215 = vector.shape_cast %214 : vector<1x2x32xf32> to vector<2x32xf32>
    %216 = arith.addf %215, %194 : vector<2x32xf32>
    %cst_66 = arith.constant dense<0.000000e+00> : vector<2x32xf32>
    %217 = tpu.matmul %212, %12, %cst_66 {dimension_numbers = #tpu.dot_dimension_numbers<[1], [0], [0], [1], [0, 0, 1, 1], [], []>} : vector<2x32xf32>, vector<32x32xf32>, vector<2x32xf32> -> vector<2x32xf32>
    %218 = arith.addf %216, %217 : vector<2x32xf32>
    %219 = vector.extract_strided_slice %218 {offsets = [0, 0], sizes = [2, 16], strides = [1, 1]} : vector<2x32xf32> to vector<2x16xf32>
    %220 = vector.extract_strided_slice %218 {offsets = [0, 16], sizes = [2, 16], strides = [1, 1]} : vector<2x32xf32> to vector<2x16xf32>
    %221 = arith.maximumf %219, %220 : vector<2x16xf32>
    %222 = arith.index_cast %c1_i32 : i32 to index
    %c0_67 = arith.constant 0 : index
    %c0_68 = arith.constant 0 : index
    %223 = vector.load %arg9[%222, %c0_67, %c0_68] : memref<5x2x16xf32, #tpu.memory_space<vmem>>, vector<1x2x16xf32>
    %224 = vector.shape_cast %223 : vector<1x2x16xf32> to vector<2x16xf32>
    %225 = vector.shape_cast %221 : vector<2x16xf32> to vector<1x2x16xf32>
    tpu.vector_store %arg9[%222, %c0_67, %c0_68], %225 {strides = array<i32>} : memref<5x2x16xf32, #tpu.memory_space<vmem>>, vector<1x2x16xf32>,
    %c2_i32 = arith.constant 2 : i32
    %226 = arith.index_cast %c2_i32 : i32 to index
    %c0_69 = arith.constant 0 : index
    %c0_70 = arith.constant 0 : index
    %227 = vector.load %arg1[%226, %c0_69, %c0_70] : memref<5x2x96xf32, #tpu.memory_space<vmem>>, vector<1x2x96xf32>
    %228 = vector.shape_cast %227 : vector<1x2x96xf32> to vector<2x96xf32>
    %cst_71 = arith.constant dense<0.000000e+00> : vector<2x96xf32>
    %229 = tpu.matmul %212, %7, %cst_71 {dimension_numbers = #tpu.dot_dimension_numbers<[1], [0], [0], [1], [0, 0, 1, 1], [], []>} : vector<2x32xf32>, vector<32x96xf32>, vector<2x96xf32> -> vector<2x96xf32>
    %230 = arith.addf %228, %229 : vector<2x96xf32>
    %cst_72 = arith.constant dense<0.000000e+00> : vector<2x96xf32>
    %231 = tpu.matmul %159, %8, %cst_72 {dimension_numbers = #tpu.dot_dimension_numbers<[1], [0], [0], [1], [0, 0, 1, 1], [], []>} : vector<2x32xf32>, vector<32x96xf32>, vector<2x96xf32> -> vector<2x96xf32>
    %232 = vector.broadcast %13 : vector<1x96xf32> to vector<2x96xf32>
    %233 = arith.addf %231, %232 : vector<2x96xf32>
    %234 = vector.extract_strided_slice %230 {offsets = [0, 0], sizes = [2, 32], strides = [1, 1]} : vector<2x96xf32> to vector<2x32xf32>
    %235 = vector.extract_strided_slice %233 {offsets = [0, 0], sizes = [2, 32], strides = [1, 1]} : vector<2x96xf32> to vector<2x32xf32>
    %236 = arith.addf %234, %235 : vector<2x32xf32>
    %237 = arith.negf %236 : vector<2x32xf32>
    %238 = math.exp %237 : vector<2x32xf32>
    %cst_73 = arith.constant 1.000000e+00 : f32
    %239 = vector.broadcast %cst_73 : f32 to vector<2x32xf32>
    %240 = arith.addf %239, %238 : vector<2x32xf32>
    %241 = arith.divf %239, %240 : vector<2x32xf32>
    %242 = vector.extract_strided_slice %230 {offsets = [0, 32], sizes = [2, 32], strides = [1, 1]} : vector<2x96xf32> to vector<2x32xf32>
    %243 = vector.extract_strided_slice %233 {offsets = [0, 32], sizes = [2, 32], strides = [1, 1]} : vector<2x96xf32> to vector<2x32xf32>
    %244 = arith.addf %242, %243 : vector<2x32xf32>
    %245 = arith.negf %244 : vector<2x32xf32>
    %246 = math.exp %245 : vector<2x32xf32>
    %cst_74 = arith.constant 1.000000e+00 : f32
    %247 = vector.broadcast %cst_74 : f32 to vector<2x32xf32>
    %248 = arith.addf %247, %246 : vector<2x32xf32>
    %249 = arith.divf %247, %248 : vector<2x32xf32>
    %250 = vector.extract_strided_slice %230 {offsets = [0, 64], sizes = [2, 32], strides = [1, 1]} : vector<2x96xf32> to vector<2x32xf32>
    %251 = vector.extract_strided_slice %233 {offsets = [0, 64], sizes = [2, 32], strides = [1, 1]} : vector<2x96xf32> to vector<2x32xf32>
    %252 = arith.mulf %241, %251 : vector<2x32xf32>
    %253 = arith.addf %250, %252 : vector<2x32xf32>
    %254 = math.tanh %253 : vector<2x32xf32>
    %cst_75 = arith.constant 1.000000e+00 : f32
    %255 = vector.broadcast %cst_75 : f32 to vector<2x32xf32>
    %256 = arith.subf %255, %249 : vector<2x32xf32>
    %257 = arith.mulf %256, %254 : vector<2x32xf32>
    %258 = arith.mulf %249, %159 : vector<2x32xf32>
    %259 = arith.addf %257, %258 : vector<2x32xf32>
    %cst_76 = arith.constant dense<0.000000e+00> : vector<2x96xf32>
    %260 = tpu.matmul %259, %9, %cst_76 {dimension_numbers = #tpu.dot_dimension_numbers<[1], [0], [0], [1], [0, 0, 1, 1], [], []>} : vector<2x32xf32>, vector<32x96xf32>, vector<2x96xf32> -> vector<2x96xf32>
    %261 = vector.broadcast %14 : vector<1x96xf32> to vector<2x96xf32>
    %262 = arith.addf %260, %261 : vector<2x96xf32>
    %cst_77 = arith.constant dense<0.000000e+00> : vector<2x96xf32>
    %263 = tpu.matmul %191, %10, %cst_77 {dimension_numbers = #tpu.dot_dimension_numbers<[1], [0], [0], [1], [0, 0, 1, 1], [], []>} : vector<2x32xf32>, vector<32x96xf32>, vector<2x96xf32> -> vector<2x96xf32>
    %264 = vector.broadcast %15 : vector<1x96xf32> to vector<2x96xf32>
    %265 = arith.addf %263, %264 : vector<2x96xf32>
    %266 = vector.extract_strided_slice %262 {offsets = [0, 0], sizes = [2, 32], strides = [1, 1]} : vector<2x96xf32> to vector<2x32xf32>
    %267 = vector.extract_strided_slice %265 {offsets = [0, 0], sizes = [2, 32], strides = [1, 1]} : vector<2x96xf32> to vector<2x32xf32>
    %268 = arith.addf %266, %267 : vector<2x32xf32>
    %269 = arith.negf %268 : vector<2x32xf32>
    %270 = math.exp %269 : vector<2x32xf32>
    %cst_78 = arith.constant 1.000000e+00 : f32
    %271 = vector.broadcast %cst_78 : f32 to vector<2x32xf32>
    %272 = arith.addf %271, %270 : vector<2x32xf32>
    %273 = arith.divf %271, %272 : vector<2x32xf32>
    %274 = vector.extract_strided_slice %262 {offsets = [0, 32], sizes = [2, 32], strides = [1, 1]} : vector<2x96xf32> to vector<2x32xf32>
    %275 = vector.extract_strided_slice %265 {offsets = [0, 32], sizes = [2, 32], strides = [1, 1]} : vector<2x96xf32> to vector<2x32xf32>
    %276 = arith.addf %274, %275 : vector<2x32xf32>
    %277 = arith.negf %276 : vector<2x32xf32>
    %278 = math.exp %277 : vector<2x32xf32>
    %cst_79 = arith.constant 1.000000e+00 : f32
    %279 = vector.broadcast %cst_79 : f32 to vector<2x32xf32>
    %280 = arith.addf %279, %278 : vector<2x32xf32>
    %281 = arith.divf %279, %280 : vector<2x32xf32>
    %282 = vector.extract_strided_slice %262 {offsets = [0, 64], sizes = [2, 32], strides = [1, 1]} : vector<2x96xf32> to vector<2x32xf32>
    %283 = vector.extract_strided_slice %265 {offsets = [0, 64], sizes = [2, 32], strides = [1, 1]} : vector<2x96xf32> to vector<2x32xf32>
    %284 = arith.mulf %273, %283 : vector<2x32xf32>
    %285 = arith.addf %282, %284 : vector<2x32xf32>
    %286 = math.tanh %285 : vector<2x32xf32>
    %cst_80 = arith.constant 1.000000e+00 : f32
    %287 = vector.broadcast %cst_80 : f32 to vector<2x32xf32>
    %288 = arith.subf %287, %281 : vector<2x32xf32>
    %289 = arith.mulf %288, %286 : vector<2x32xf32>
    %290 = arith.mulf %281, %191 : vector<2x32xf32>
    %291 = arith.addf %289, %290 : vector<2x32xf32>
    %cst_81 = arith.constant dense<0.000000e+00> : vector<2x64xf32>
    %292 = tpu.matmul %291, %11, %cst_81 {dimension_numbers = #tpu.dot_dimension_numbers<[1], [0], [0], [1], [0, 0, 1, 1], [], []>} : vector<2x32xf32>, vector<32x64xf32>, vector<2x64xf32> -> vector<2x64xf32>
    %293 = vector.extract_strided_slice %292 {offsets = [0, 0], sizes = [2, 32], strides = [1, 1]} : vector<2x64xf32> to vector<2x32xf32>
    %294 = vector.extract_strided_slice %292 {offsets = [0, 32], sizes = [2, 32], strides = [1, 1]} : vector<2x64xf32> to vector<2x32xf32>
    %295 = vector.shape_cast %293 : vector<2x32xf32> to vector<2x1x32xf32>
    %296 = vector.broadcast %295 : vector<2x1x32xf32> to vector<2x8x32xf32>
    %297 = arith.addf %1, %296 : vector<2x8x32xf32>
    %298 = math.tanh %297 : vector<2x8x32xf32>
    %299 = arith.mulf %298, %19 : vector<2x8x32xf32>
    %cst_82 = arith.constant dense<0.000000e+00> : vector<2x8xf32>
    %300 = vector.multi_reduction <add>, %299, %cst_82 [2] : vector<2x8x32xf32> to vector<2x8xf32>
    %301 = arith.mulf %300, %4 : vector<2x8xf32>
    %302 = arith.addf %301, %6 : vector<2x8xf32>
    %303 = math.exp %302 : vector<2x8xf32>
    %cst_83 = arith.constant dense<0.000000e+00> : vector<2xf32>
    %304 = vector.multi_reduction <add>, %303, %cst_83 [1] : vector<2x8xf32> to vector<2xf32>
    %305 = vector.shape_cast %304 : vector<2xf32> to vector<2x1xf32>
    %306 = tpu.reciprocal %305 : vector<2x1xf32> -> vector<2x1xf32>
    %307 = vector.broadcast %306 : vector<2x1xf32> to vector<2x8xf32>
    %308 = arith.mulf %303, %307 : vector<2x8xf32>
    %309 = vector.shape_cast %308 : vector<2x8xf32> to vector<2x8x1xf32>
    %310 = vector.broadcast %309 : vector<2x8x1xf32> to vector<2x8x32xf32>
    %311 = arith.mulf %310, %0 : vector<2x8x32xf32>
    %cst_84 = arith.constant dense<0.000000e+00> : vector<2x32xf32>
    %312 = vector.multi_reduction <add>, %311, %cst_84 [1] : vector<2x8x32xf32> to vector<2x32xf32>
    %313 = arith.index_cast %c2_i32 : i32 to index
    %c0_85 = arith.constant 0 : index
    %c0_86 = arith.constant 0 : index
    %314 = vector.load %arg2[%313, %c0_85, %c0_86] : memref<5x2x32xf32, #tpu.memory_space<vmem>>, vector<1x2x32xf32>
    %315 = vector.shape_cast %314 : vector<1x2x32xf32> to vector<2x32xf32>
    %316 = arith.addf %315, %294 : vector<2x32xf32>
    %cst_87 = arith.constant dense<0.000000e+00> : vector<2x32xf32>
    %317 = tpu.matmul %312, %12, %cst_87 {dimension_numbers = #tpu.dot_dimension_numbers<[1], [0], [0], [1], [0, 0, 1, 1], [], []>} : vector<2x32xf32>, vector<32x32xf32>, vector<2x32xf32> -> vector<2x32xf32>
    %318 = arith.addf %316, %317 : vector<2x32xf32>
    %319 = vector.extract_strided_slice %318 {offsets = [0, 0], sizes = [2, 16], strides = [1, 1]} : vector<2x32xf32> to vector<2x16xf32>
    %320 = vector.extract_strided_slice %318 {offsets = [0, 16], sizes = [2, 16], strides = [1, 1]} : vector<2x32xf32> to vector<2x16xf32>
    %321 = arith.maximumf %319, %320 : vector<2x16xf32>
    %322 = arith.index_cast %c2_i32 : i32 to index
    %c0_88 = arith.constant 0 : index
    %c0_89 = arith.constant 0 : index
    %323 = vector.load %arg9[%322, %c0_88, %c0_89] : memref<5x2x16xf32, #tpu.memory_space<vmem>>, vector<1x2x16xf32>
    %324 = vector.shape_cast %323 : vector<1x2x16xf32> to vector<2x16xf32>
    %325 = vector.shape_cast %321 : vector<2x16xf32> to vector<1x2x16xf32>
    tpu.vector_store %arg9[%322, %c0_88, %c0_89], %325 {strides = array<i32>} : memref<5x2x16xf32, #tpu.memory_space<vmem>>, vector<1x2x16xf32>,
    %c3_i32 = arith.constant 3 : i32
    %326 = arith.index_cast %c3_i32 : i32 to index
    %c0_90 = arith.constant 0 : index
    %c0_91 = arith.constant 0 : index
    %327 = vector.load %arg1[%326, %c0_90, %c0_91] : memref<5x2x96xf32, #tpu.memory_space<vmem>>, vector<1x2x96xf32>
    %328 = vector.shape_cast %327 : vector<1x2x96xf32> to vector<2x96xf32>
    %cst_92 = arith.constant dense<0.000000e+00> : vector<2x96xf32>
    %329 = tpu.matmul %312, %7, %cst_92 {dimension_numbers = #tpu.dot_dimension_numbers<[1], [0], [0], [1], [0, 0, 1, 1], [], []>} : vector<2x32xf32>, vector<32x96xf32>, vector<2x96xf32> -> vector<2x96xf32>
    %330 = arith.addf %328, %329 : vector<2x96xf32>
    %cst_93 = arith.constant dense<0.000000e+00> : vector<2x96xf32>
    %331 = tpu.matmul %259, %8, %cst_93 {dimension_numbers = #tpu.dot_dimension_numbers<[1], [0], [0], [1], [0, 0, 1, 1], [], []>} : vector<2x32xf32>, vector<32x96xf32>, vector<2x96xf32> -> vector<2x96xf32>
    %332 = vector.broadcast %13 : vector<1x96xf32> to vector<2x96xf32>
    %333 = arith.addf %331, %332 : vector<2x96xf32>
    %334 = vector.extract_strided_slice %330 {offsets = [0, 0], sizes = [2, 32], strides = [1, 1]} : vector<2x96xf32> to vector<2x32xf32>
    %335 = vector.extract_strided_slice %333 {offsets = [0, 0], sizes = [2, 32], strides = [1, 1]} : vector<2x96xf32> to vector<2x32xf32>
    %336 = arith.addf %334, %335 : vector<2x32xf32>
    %337 = arith.negf %336 : vector<2x32xf32>
    %338 = math.exp %337 : vector<2x32xf32>
    %cst_94 = arith.constant 1.000000e+00 : f32
    %339 = vector.broadcast %cst_94 : f32 to vector<2x32xf32>
    %340 = arith.addf %339, %338 : vector<2x32xf32>
    %341 = arith.divf %339, %340 : vector<2x32xf32>
    %342 = vector.extract_strided_slice %330 {offsets = [0, 32], sizes = [2, 32], strides = [1, 1]} : vector<2x96xf32> to vector<2x32xf32>
    %343 = vector.extract_strided_slice %333 {offsets = [0, 32], sizes = [2, 32], strides = [1, 1]} : vector<2x96xf32> to vector<2x32xf32>
    %344 = arith.addf %342, %343 : vector<2x32xf32>
    %345 = arith.negf %344 : vector<2x32xf32>
    %346 = math.exp %345 : vector<2x32xf32>
    %cst_95 = arith.constant 1.000000e+00 : f32
    %347 = vector.broadcast %cst_95 : f32 to vector<2x32xf32>
    %348 = arith.addf %347, %346 : vector<2x32xf32>
    %349 = arith.divf %347, %348 : vector<2x32xf32>
    %350 = vector.extract_strided_slice %330 {offsets = [0, 64], sizes = [2, 32], strides = [1, 1]} : vector<2x96xf32> to vector<2x32xf32>
    %351 = vector.extract_strided_slice %333 {offsets = [0, 64], sizes = [2, 32], strides = [1, 1]} : vector<2x96xf32> to vector<2x32xf32>
    %352 = arith.mulf %341, %351 : vector<2x32xf32>
    %353 = arith.addf %350, %352 : vector<2x32xf32>
    %354 = math.tanh %353 : vector<2x32xf32>
    %cst_96 = arith.constant 1.000000e+00 : f32
    %355 = vector.broadcast %cst_96 : f32 to vector<2x32xf32>
    %356 = arith.subf %355, %349 : vector<2x32xf32>
    %357 = arith.mulf %356, %354 : vector<2x32xf32>
    %358 = arith.mulf %349, %259 : vector<2x32xf32>
    %359 = arith.addf %357, %358 : vector<2x32xf32>
    %cst_97 = arith.constant dense<0.000000e+00> : vector<2x96xf32>
    %360 = tpu.matmul %359, %9, %cst_97 {dimension_numbers = #tpu.dot_dimension_numbers<[1], [0], [0], [1], [0, 0, 1, 1], [], []>} : vector<2x32xf32>, vector<32x96xf32>, vector<2x96xf32> -> vector<2x96xf32>
    %361 = vector.broadcast %14 : vector<1x96xf32> to vector<2x96xf32>
    %362 = arith.addf %360, %361 : vector<2x96xf32>
    %cst_98 = arith.constant dense<0.000000e+00> : vector<2x96xf32>
    %363 = tpu.matmul %291, %10, %cst_98 {dimension_numbers = #tpu.dot_dimension_numbers<[1], [0], [0], [1], [0, 0, 1, 1], [], []>} : vector<2x32xf32>, vector<32x96xf32>, vector<2x96xf32> -> vector<2x96xf32>
    %364 = vector.broadcast %15 : vector<1x96xf32> to vector<2x96xf32>
    %365 = arith.addf %363, %364 : vector<2x96xf32>
    %366 = vector.extract_strided_slice %362 {offsets = [0, 0], sizes = [2, 32], strides = [1, 1]} : vector<2x96xf32> to vector<2x32xf32>
    %367 = vector.extract_strided_slice %365 {offsets = [0, 0], sizes = [2, 32], strides = [1, 1]} : vector<2x96xf32> to vector<2x32xf32>
    %368 = arith.addf %366, %367 : vector<2x32xf32>
    %369 = arith.negf %368 : vector<2x32xf32>
    %370 = math.exp %369 : vector<2x32xf32>
    %cst_99 = arith.constant 1.000000e+00 : f32
    %371 = vector.broadcast %cst_99 : f32 to vector<2x32xf32>
    %372 = arith.addf %371, %370 : vector<2x32xf32>
    %373 = arith.divf %371, %372 : vector<2x32xf32>
    %374 = vector.extract_strided_slice %362 {offsets = [0, 32], sizes = [2, 32], strides = [1, 1]} : vector<2x96xf32> to vector<2x32xf32>
    %375 = vector.extract_strided_slice %365 {offsets = [0, 32], sizes = [2, 32], strides = [1, 1]} : vector<2x96xf32> to vector<2x32xf32>
    %376 = arith.addf %374, %375 : vector<2x32xf32>
    %377 = arith.negf %376 : vector<2x32xf32>
    %378 = math.exp %377 : vector<2x32xf32>
    %cst_100 = arith.constant 1.000000e+00 : f32
    %379 = vector.broadcast %cst_100 : f32 to vector<2x32xf32>
    %380 = arith.addf %379, %378 : vector<2x32xf32>
    %381 = arith.divf %379, %380 : vector<2x32xf32>
    %382 = vector.extract_strided_slice %362 {offsets = [0, 64], sizes = [2, 32], strides = [1, 1]} : vector<2x96xf32> to vector<2x32xf32>
    %383 = vector.extract_strided_slice %365 {offsets = [0, 64], sizes = [2, 32], strides = [1, 1]} : vector<2x96xf32> to vector<2x32xf32>
    %384 = arith.mulf %373, %383 : vector<2x32xf32>
    %385 = arith.addf %382, %384 : vector<2x32xf32>
    %386 = math.tanh %385 : vector<2x32xf32>
    %cst_101 = arith.constant 1.000000e+00 : f32
    %387 = vector.broadcast %cst_101 : f32 to vector<2x32xf32>
    %388 = arith.subf %387, %381 : vector<2x32xf32>
    %389 = arith.mulf %388, %386 : vector<2x32xf32>
    %390 = arith.mulf %381, %291 : vector<2x32xf32>
    %391 = arith.addf %389, %390 : vector<2x32xf32>
    %cst_102 = arith.constant dense<0.000000e+00> : vector<2x64xf32>
    %392 = tpu.matmul %391, %11, %cst_102 {dimension_numbers = #tpu.dot_dimension_numbers<[1], [0], [0], [1], [0, 0, 1, 1], [], []>} : vector<2x32xf32>, vector<32x64xf32>, vector<2x64xf32> -> vector<2x64xf32>
    %393 = vector.extract_strided_slice %392 {offsets = [0, 0], sizes = [2, 32], strides = [1, 1]} : vector<2x64xf32> to vector<2x32xf32>
    %394 = vector.extract_strided_slice %392 {offsets = [0, 32], sizes = [2, 32], strides = [1, 1]} : vector<2x64xf32> to vector<2x32xf32>
    %395 = vector.shape_cast %393 : vector<2x32xf32> to vector<2x1x32xf32>
    %396 = vector.broadcast %395 : vector<2x1x32xf32> to vector<2x8x32xf32>
    %397 = arith.addf %1, %396 : vector<2x8x32xf32>
    %398 = math.tanh %397 : vector<2x8x32xf32>
    %399 = arith.mulf %398, %19 : vector<2x8x32xf32>
    %cst_103 = arith.constant dense<0.000000e+00> : vector<2x8xf32>
    %400 = vector.multi_reduction <add>, %399, %cst_103 [2] : vector<2x8x32xf32> to vector<2x8xf32>
    %401 = arith.mulf %400, %4 : vector<2x8xf32>
    %402 = arith.addf %401, %6 : vector<2x8xf32>
    %403 = math.exp %402 : vector<2x8xf32>
    %cst_104 = arith.constant dense<0.000000e+00> : vector<2xf32>
    %404 = vector.multi_reduction <add>, %403, %cst_104 [1] : vector<2x8xf32> to vector<2xf32>
    %405 = vector.shape_cast %404 : vector<2xf32> to vector<2x1xf32>
    %406 = tpu.reciprocal %405 : vector<2x1xf32> -> vector<2x1xf32>
    %407 = vector.broadcast %406 : vector<2x1xf32> to vector<2x8xf32>
    %408 = arith.mulf %403, %407 : vector<2x8xf32>
    %409 = vector.shape_cast %408 : vector<2x8xf32> to vector<2x8x1xf32>
    %410 = vector.broadcast %409 : vector<2x8x1xf32> to vector<2x8x32xf32>
    %411 = arith.mulf %410, %0 : vector<2x8x32xf32>
    %cst_105 = arith.constant dense<0.000000e+00> : vector<2x32xf32>
    %412 = vector.multi_reduction <add>, %411, %cst_105 [1] : vector<2x8x32xf32> to vector<2x32xf32>
    %413 = arith.index_cast %c3_i32 : i32 to index
    %c0_106 = arith.constant 0 : index
    %c0_107 = arith.constant 0 : index
    %414 = vector.load %arg2[%413, %c0_106, %c0_107] : memref<5x2x32xf32, #tpu.memory_space<vmem>>, vector<1x2x32xf32>
    %415 = vector.shape_cast %414 : vector<1x2x32xf32> to vector<2x32xf32>
    %416 = arith.addf %415, %394 : vector<2x32xf32>
    %cst_108 = arith.constant dense<0.000000e+00> : vector<2x32xf32>
    %417 = tpu.matmul %412, %12, %cst_108 {dimension_numbers = #tpu.dot_dimension_numbers<[1], [0], [0], [1], [0, 0, 1, 1], [], []>} : vector<2x32xf32>, vector<32x32xf32>, vector<2x32xf32> -> vector<2x32xf32>
    %418 = arith.addf %416, %417 : vector<2x32xf32>
    %419 = vector.extract_strided_slice %418 {offsets = [0, 0], sizes = [2, 16], strides = [1, 1]} : vector<2x32xf32> to vector<2x16xf32>
    %420 = vector.extract_strided_slice %418 {offsets = [0, 16], sizes = [2, 16], strides = [1, 1]} : vector<2x32xf32> to vector<2x16xf32>
    %421 = arith.maximumf %419, %420 : vector<2x16xf32>
    %422 = arith.index_cast %c3_i32 : i32 to index
    %c0_109 = arith.constant 0 : index
    %c0_110 = arith.constant 0 : index
    %423 = vector.load %arg9[%422, %c0_109, %c0_110] : memref<5x2x16xf32, #tpu.memory_space<vmem>>, vector<1x2x16xf32>
    %424 = vector.shape_cast %423 : vector<1x2x16xf32> to vector<2x16xf32>
    %425 = vector.shape_cast %421 : vector<2x16xf32> to vector<1x2x16xf32>
    tpu.vector_store %arg9[%422, %c0_109, %c0_110], %425 {strides = array<i32>} : memref<5x2x16xf32, #tpu.memory_space<vmem>>, vector<1x2x16xf32>,
    %c4_i32 = arith.constant 4 : i32
    %426 = arith.index_cast %c4_i32 : i32 to index
    %c0_111 = arith.constant 0 : index
    %c0_112 = arith.constant 0 : index
    %427 = vector.load %arg1[%426, %c0_111, %c0_112] : memref<5x2x96xf32, #tpu.memory_space<vmem>>, vector<1x2x96xf32>
    %428 = vector.shape_cast %427 : vector<1x2x96xf32> to vector<2x96xf32>
    %cst_113 = arith.constant dense<0.000000e+00> : vector<2x96xf32>
    %429 = tpu.matmul %412, %7, %cst_113 {dimension_numbers = #tpu.dot_dimension_numbers<[1], [0], [0], [1], [0, 0, 1, 1], [], []>} : vector<2x32xf32>, vector<32x96xf32>, vector<2x96xf32> -> vector<2x96xf32>
    %430 = arith.addf %428, %429 : vector<2x96xf32>
    %cst_114 = arith.constant dense<0.000000e+00> : vector<2x96xf32>
    %431 = tpu.matmul %359, %8, %cst_114 {dimension_numbers = #tpu.dot_dimension_numbers<[1], [0], [0], [1], [0, 0, 1, 1], [], []>} : vector<2x32xf32>, vector<32x96xf32>, vector<2x96xf32> -> vector<2x96xf32>
    %432 = vector.broadcast %13 : vector<1x96xf32> to vector<2x96xf32>
    %433 = arith.addf %431, %432 : vector<2x96xf32>
    %434 = vector.extract_strided_slice %430 {offsets = [0, 0], sizes = [2, 32], strides = [1, 1]} : vector<2x96xf32> to vector<2x32xf32>
    %435 = vector.extract_strided_slice %433 {offsets = [0, 0], sizes = [2, 32], strides = [1, 1]} : vector<2x96xf32> to vector<2x32xf32>
    %436 = arith.addf %434, %435 : vector<2x32xf32>
    %437 = arith.negf %436 : vector<2x32xf32>
    %438 = math.exp %437 : vector<2x32xf32>
    %cst_115 = arith.constant 1.000000e+00 : f32
    %439 = vector.broadcast %cst_115 : f32 to vector<2x32xf32>
    %440 = arith.addf %439, %438 : vector<2x32xf32>
    %441 = arith.divf %439, %440 : vector<2x32xf32>
    %442 = vector.extract_strided_slice %430 {offsets = [0, 32], sizes = [2, 32], strides = [1, 1]} : vector<2x96xf32> to vector<2x32xf32>
    %443 = vector.extract_strided_slice %433 {offsets = [0, 32], sizes = [2, 32], strides = [1, 1]} : vector<2x96xf32> to vector<2x32xf32>
    %444 = arith.addf %442, %443 : vector<2x32xf32>
    %445 = arith.negf %444 : vector<2x32xf32>
    %446 = math.exp %445 : vector<2x32xf32>
    %cst_116 = arith.constant 1.000000e+00 : f32
    %447 = vector.broadcast %cst_116 : f32 to vector<2x32xf32>
    %448 = arith.addf %447, %446 : vector<2x32xf32>
    %449 = arith.divf %447, %448 : vector<2x32xf32>
    %450 = vector.extract_strided_slice %430 {offsets = [0, 64], sizes = [2, 32], strides = [1, 1]} : vector<2x96xf32> to vector<2x32xf32>
    %451 = vector.extract_strided_slice %433 {offsets = [0, 64], sizes = [2, 32], strides = [1, 1]} : vector<2x96xf32> to vector<2x32xf32>
    %452 = arith.mulf %441, %451 : vector<2x32xf32>
    %453 = arith.addf %450, %452 : vector<2x32xf32>
    %454 = math.tanh %453 : vector<2x32xf32>
    %cst_117 = arith.constant 1.000000e+00 : f32
    %455 = vector.broadcast %cst_117 : f32 to vector<2x32xf32>
    %456 = arith.subf %455, %449 : vector<2x32xf32>
    %457 = arith.mulf %456, %454 : vector<2x32xf32>
    %458 = arith.mulf %449, %359 : vector<2x32xf32>
    %459 = arith.addf %457, %458 : vector<2x32xf32>
    %cst_118 = arith.constant dense<0.000000e+00> : vector<2x96xf32>
    %460 = tpu.matmul %459, %9, %cst_118 {dimension_numbers = #tpu.dot_dimension_numbers<[1], [0], [0], [1], [0, 0, 1, 1], [], []>} : vector<2x32xf32>, vector<32x96xf32>, vector<2x96xf32> -> vector<2x96xf32>
    %461 = vector.broadcast %14 : vector<1x96xf32> to vector<2x96xf32>
    %462 = arith.addf %460, %461 : vector<2x96xf32>
    %cst_119 = arith.constant dense<0.000000e+00> : vector<2x96xf32>
    %463 = tpu.matmul %391, %10, %cst_119 {dimension_numbers = #tpu.dot_dimension_numbers<[1], [0], [0], [1], [0, 0, 1, 1], [], []>} : vector<2x32xf32>, vector<32x96xf32>, vector<2x96xf32> -> vector<2x96xf32>
    %464 = vector.broadcast %15 : vector<1x96xf32> to vector<2x96xf32>
    %465 = arith.addf %463, %464 : vector<2x96xf32>
    %466 = vector.extract_strided_slice %462 {offsets = [0, 0], sizes = [2, 32], strides = [1, 1]} : vector<2x96xf32> to vector<2x32xf32>
    %467 = vector.extract_strided_slice %465 {offsets = [0, 0], sizes = [2, 32], strides = [1, 1]} : vector<2x96xf32> to vector<2x32xf32>
    %468 = arith.addf %466, %467 : vector<2x32xf32>
    %469 = arith.negf %468 : vector<2x32xf32>
    %470 = math.exp %469 : vector<2x32xf32>
    %cst_120 = arith.constant 1.000000e+00 : f32
    %471 = vector.broadcast %cst_120 : f32 to vector<2x32xf32>
    %472 = arith.addf %471, %470 : vector<2x32xf32>
    %473 = arith.divf %471, %472 : vector<2x32xf32>
    %474 = vector.extract_strided_slice %462 {offsets = [0, 32], sizes = [2, 32], strides = [1, 1]} : vector<2x96xf32> to vector<2x32xf32>
    %475 = vector.extract_strided_slice %465 {offsets = [0, 32], sizes = [2, 32], strides = [1, 1]} : vector<2x96xf32> to vector<2x32xf32>
    %476 = arith.addf %474, %475 : vector<2x32xf32>
    %477 = arith.negf %476 : vector<2x32xf32>
    %478 = math.exp %477 : vector<2x32xf32>
    %cst_121 = arith.constant 1.000000e+00 : f32
    %479 = vector.broadcast %cst_121 : f32 to vector<2x32xf32>
    %480 = arith.addf %479, %478 : vector<2x32xf32>
    %481 = arith.divf %479, %480 : vector<2x32xf32>
    %482 = vector.extract_strided_slice %462 {offsets = [0, 64], sizes = [2, 32], strides = [1, 1]} : vector<2x96xf32> to vector<2x32xf32>
    %483 = vector.extract_strided_slice %465 {offsets = [0, 64], sizes = [2, 32], strides = [1, 1]} : vector<2x96xf32> to vector<2x32xf32>
    %484 = arith.mulf %473, %483 : vector<2x32xf32>
    %485 = arith.addf %482, %484 : vector<2x32xf32>
    %486 = math.tanh %485 : vector<2x32xf32>
    %cst_122 = arith.constant 1.000000e+00 : f32
    %487 = vector.broadcast %cst_122 : f32 to vector<2x32xf32>
    %488 = arith.subf %487, %481 : vector<2x32xf32>
    %489 = arith.mulf %488, %486 : vector<2x32xf32>
    %490 = arith.mulf %481, %391 : vector<2x32xf32>
    %491 = arith.addf %489, %490 : vector<2x32xf32>
    %cst_123 = arith.constant dense<0.000000e+00> : vector<2x64xf32>
    %492 = tpu.matmul %491, %11, %cst_123 {dimension_numbers = #tpu.dot_dimension_numbers<[1], [0], [0], [1], [0, 0, 1, 1], [], []>} : vector<2x32xf32>, vector<32x64xf32>, vector<2x64xf32> -> vector<2x64xf32>
    %493 = vector.extract_strided_slice %492 {offsets = [0, 0], sizes = [2, 32], strides = [1, 1]} : vector<2x64xf32> to vector<2x32xf32>
    %494 = vector.extract_strided_slice %492 {offsets = [0, 32], sizes = [2, 32], strides = [1, 1]} : vector<2x64xf32> to vector<2x32xf32>
    %495 = vector.shape_cast %493 : vector<2x32xf32> to vector<2x1x32xf32>
    %496 = vector.broadcast %495 : vector<2x1x32xf32> to vector<2x8x32xf32>
    %497 = arith.addf %1, %496 : vector<2x8x32xf32>
    %498 = math.tanh %497 : vector<2x8x32xf32>
    %499 = arith.mulf %498, %19 : vector<2x8x32xf32>
    %cst_124 = arith.constant dense<0.000000e+00> : vector<2x8xf32>
    %500 = vector.multi_reduction <add>, %499, %cst_124 [2] : vector<2x8x32xf32> to vector<2x8xf32>
    %501 = arith.mulf %500, %4 : vector<2x8xf32>
    %502 = arith.addf %501, %6 : vector<2x8xf32>
    %503 = math.exp %502 : vector<2x8xf32>
    %cst_125 = arith.constant dense<0.000000e+00> : vector<2xf32>
    %504 = vector.multi_reduction <add>, %503, %cst_125 [1] : vector<2x8xf32> to vector<2xf32>
    %505 = vector.shape_cast %504 : vector<2xf32> to vector<2x1xf32>
    %506 = tpu.reciprocal %505 : vector<2x1xf32> -> vector<2x1xf32>
    %507 = vector.broadcast %506 : vector<2x1xf32> to vector<2x8xf32>
    %508 = arith.mulf %503, %507 : vector<2x8xf32>
    %509 = vector.shape_cast %508 : vector<2x8xf32> to vector<2x8x1xf32>
    %510 = vector.broadcast %509 : vector<2x8x1xf32> to vector<2x8x32xf32>
    %511 = arith.mulf %510, %0 : vector<2x8x32xf32>
    %cst_126 = arith.constant dense<0.000000e+00> : vector<2x32xf32>
    %512 = vector.multi_reduction <add>, %511, %cst_126 [1] : vector<2x8x32xf32> to vector<2x32xf32>
    %513 = arith.index_cast %c4_i32 : i32 to index
    %c0_127 = arith.constant 0 : index
    %c0_128 = arith.constant 0 : index
    %514 = vector.load %arg2[%513, %c0_127, %c0_128] : memref<5x2x32xf32, #tpu.memory_space<vmem>>, vector<1x2x32xf32>
    %515 = vector.shape_cast %514 : vector<1x2x32xf32> to vector<2x32xf32>
    %516 = arith.addf %515, %494 : vector<2x32xf32>
    %cst_129 = arith.constant dense<0.000000e+00> : vector<2x32xf32>
    %517 = tpu.matmul %512, %12, %cst_129 {dimension_numbers = #tpu.dot_dimension_numbers<[1], [0], [0], [1], [0, 0, 1, 1], [], []>} : vector<2x32xf32>, vector<32x32xf32>, vector<2x32xf32> -> vector<2x32xf32>
    %518 = arith.addf %516, %517 : vector<2x32xf32>
    %519 = vector.extract_strided_slice %518 {offsets = [0, 0], sizes = [2, 16], strides = [1, 1]} : vector<2x32xf32> to vector<2x16xf32>
    %520 = vector.extract_strided_slice %518 {offsets = [0, 16], sizes = [2, 16], strides = [1, 1]} : vector<2x32xf32> to vector<2x16xf32>
    %521 = arith.maximumf %519, %520 : vector<2x16xf32>
    %522 = arith.index_cast %c4_i32 : i32 to index
    %c0_130 = arith.constant 0 : index
    %c0_131 = arith.constant 0 : index
    %523 = vector.load %arg9[%522, %c0_130, %c0_131] : memref<5x2x16xf32, #tpu.memory_space<vmem>>, vector<1x2x16xf32>
    %524 = vector.shape_cast %523 : vector<1x2x16xf32> to vector<2x16xf32>
    %525 = vector.shape_cast %521 : vector<2x16xf32> to vector<1x2x16xf32>
    tpu.vector_store %arg9[%522, %c0_130, %c0_131], %525 {strides = array<i32>} : memref<5x2x16xf32, #tpu.memory_space<vmem>>, vector<1x2x16xf32>,
    %c5_i32 = arith.constant 5 : i32
    %c0_132 = arith.constant 0 : index
    %c0_133 = arith.constant 0 : index
    %c0_134 = arith.constant 0 : index
    %526 = vector.load %arg10[%c0_132, %c0_133, %c0_134] : memref<2x2x32xf32, #tpu.memory_space<vmem>>, vector<1x2x32xf32>
    %527 = vector.shape_cast %526 : vector<1x2x32xf32> to vector<2x32xf32>
    %528 = vector.shape_cast %459 : vector<2x32xf32> to vector<1x2x32xf32>
    tpu.vector_store %arg10[%c0_132, %c0_133, %c0_134], %528 {strides = array<i32>} : memref<2x2x32xf32, #tpu.memory_space<vmem>>, vector<1x2x32xf32>,
    %c1_135 = arith.constant 1 : index
    %c0_136 = arith.constant 0 : index
    %c0_137 = arith.constant 0 : index
    %529 = vector.load %arg10[%c1_135, %c0_136, %c0_137] : memref<2x2x32xf32, #tpu.memory_space<vmem>>, vector<1x2x32xf32>
    %530 = vector.shape_cast %529 : vector<1x2x32xf32> to vector<2x32xf32>
    %531 = vector.shape_cast %491 : vector<2x32xf32> to vector<1x2x32xf32>
    tpu.vector_store %arg10[%c1_135, %c0_136, %c0_137], %531 {strides = array<i32>} : memref<2x2x32xf32, #tpu.memory_space<vmem>>, vector<1x2x32xf32>,
    %c0_138 = arith.constant 0 : index
    %c0_139 = arith.constant 0 : index
    %532 = vector.load %arg11[%c0_138, %c0_139] : memref<2x8xf32, #tpu.memory_space<vmem>>, vector<2x8xf32>
    tpu.vector_store %arg11[%c0_138, %c0_139], %508 {strides = array<i32>} : memref<2x8xf32, #tpu.memory_space<vmem>>, vector<2x8xf32>,
    %c0_140 = arith.constant 0 : index
    %c0_141 = arith.constant 0 : index
    %533 = vector.load %arg12[%c0_140, %c0_141] : memref<2x32xf32, #tpu.memory_space<vmem>>, vector<2x32xf32>
    tpu.vector_store %arg12[%c0_140, %c0_141], %512 {strides = array<i32>} : memref<2x32xf32, #tpu.memory_space<vmem>>, vector<2x32xf32>,
    return
  }
  func.func @transform_0(%arg0: i32) -> (i32, i32, i32) {
    %c0_i32 = arith.constant 0 : i32
    %c0_i32_0 = arith.constant 0 : i32
    %c0_i32_1 = arith.constant 0 : i32
    %c0_i32_2 = arith.constant 0 : i32
    return %c0_i32, %c0_i32_0, %c0_i32_1 : i32, i32, i32
  }
  func.func @transform_1(%arg0: i32) -> (i32, i32, i32) {
    %c0_i32 = arith.constant 0 : i32
    %c0_i32_0 = arith.constant 0 : i32
    %c0_i32_1 = arith.constant 0 : i32
    %c0_i32_2 = arith.constant 0 : i32
    return %c0_i32, %c0_i32_0, %c0_i32_1 : i32, i32, i32
  }
  func.func @transform_2(%arg0: i32) -> (i32, i32, i32) {
    %c0_i32 = arith.constant 0 : i32
    %c0_i32_0 = arith.constant 0 : i32
    %c0_i32_1 = arith.constant 0 : i32
    %c0_i32_2 = arith.constant 0 : i32
    return %c0_i32, %c0_i32_0, %c0_i32_1 : i32, i32, i32
  }
  func.func @transform_3(%arg0: i32) -> (i32, i32, i32) {
    %c0_i32 = arith.constant 0 : i32
    %c0_i32_0 = arith.constant 0 : i32
    %c0_i32_1 = arith.constant 0 : i32
    %c0_i32_2 = arith.constant 0 : i32
    return %c0_i32, %c0_i32_0, %c0_i32_1 : i32, i32, i32
  }
  func.func @transform_4(%arg0: i32) -> (i32, i32) {
    %c0_i32 = arith.constant 0 : i32
    %c0_i32_0 = arith.constant 0 : i32
    %c0_i32_1 = arith.constant 0 : i32
    return %c0_i32, %c0_i32_0 : i32, i32
  }
  func.func @transform_5(%arg0: i32) -> (i32, i32, i32) {
    %c0_i32 = arith.constant 0 : i32
    %c0_i32_0 = arith.constant 0 : i32
    %c0_i32_1 = arith.constant 0 : i32
    %c0_i32_2 = arith.constant 0 : i32
    return %c0_i32, %c0_i32_0, %c0_i32_1 : i32, i32, i32
  }
  func.func @transform_6(%arg0: i32) -> (i32, i32) {
    %c0_i32 = arith.constant 0 : i32
    %c0_i32_0 = arith.constant 0 : i32
    %c0_i32_1 = arith.constant 0 : i32
    return %c0_i32, %c0_i32_0 : i32, i32
  }
  func.func @transform_7(%arg0: i32) -> (i32, i32) {
    %c0_i32 = arith.constant 0 : i32
    %c0_i32_0 = arith.constant 0 : i32
    %c0_i32_1 = arith.constant 0 : i32
    return %c0_i32, %c0_i32_0 : i32, i32
  }
  func.func @transform_8(%arg0: i32) -> (i32, i32, i32) {
    %c0_i32 = arith.constant 0 : i32
    %c0_i32_0 = arith.constant 0 : i32
    %c0_i32_1 = arith.constant 0 : i32
    %c0_i32_2 = arith.constant 0 : i32
    return %c0_i32, %c0_i32_0, %c0_i32_1 : i32, i32, i32
  }
  func.func @transform_9(%arg0: i32) -> (i32, i32, i32) {
    %c0_i32 = arith.constant 0 : i32
    %c0_i32_0 = arith.constant 0 : i32
    %c0_i32_1 = arith.constant 0 : i32
    %c0_i32_2 = arith.constant 0 : i32
    return %c0_i32, %c0_i32_0, %c0_i32_1 : i32, i32, i32
  }
  func.func @transform_10(%arg0: i32) -> (i32, i32) {
    %c0_i32 = arith.constant 0 : i32
    %c0_i32_0 = arith.constant 0 : i32
    %c0_i32_1 = arith.constant 0 : i32
    return %c0_i32, %c0_i32_0 : i32, i32
  }
  func.func @transform_11(%arg0: i32) -> (i32, i32) {
    %c0_i32 = arith.constant 0 : i32
    %c0_i32_0 = arith.constant 0 : i32
    %c0_i32_1 = arith.constant 0 : i32
    return %c0_i32, %c0_i32_0 : i32, i32
  }
}

</mosaic_0001>

<llo_original>
// kernel: tpu_custom_call.1
$region0: #{tpu_custom_call.1}
  #allocation0 [shape = 'u32[]', space=smem, size = 0x4, offset = 0x4, fixed_abs, tag = 'smem constant byte address 0x4 - core index']
  #allocation1 [shape = 'u32[144,128]{1,0:T(1,128)}', space=vmem, size = 0x12000, scoped, tag = 'internal scratch']
  %s0 = inlined_call_operand.vmem [shape: f32[5,2,96], index: 0, kind: input, shape index: {}]
  %s1 = inlined_call_operand.vmem [shape: f32[5,2,32], index: 1, kind: input, shape index: {}]
  %s2 = inlined_call_operand.vmem [shape: f32[2,8,32], index: 2, kind: input, shape index: {}]
  %s3 = inlined_call_operand.vmem [shape: f32[2,8,32], index: 3, kind: input, shape index: {}]
  %s4 = inlined_call_operand.vmem [shape: f32[2,8], index: 4, kind: input, shape index: {}]
  %s5 = inlined_call_operand.vmem [shape: f32[2,2,32], index: 5, kind: input, shape index: {}]
  %s6 = inlined_call_operand.vmem [shape: f32[2,32], index: 6, kind: input, shape index: {}]
  %s7 = inlined_call_operand.vmem [shape: f32[196,96], index: 7, kind: input, shape index: {}]
  %s8 = inlined_call_operand.hbm [shape: f32[5,2,16], index: 8, kind: output, shape index: {0}]
  %s9 = inlined_call_operand.hbm [shape: f32[2,2,32], index: 9, kind: output, shape index: {1}]
  %s10 = inlined_call_operand.hbm [shape: f32[2,8], index: 10, kind: output, shape index: {2}]
  %s11 = inlined_call_operand.hbm [shape: f32[2,32], index: 11, kind: output, shape index: {3}]
  %12 = xla_tuple %s8, %s9, %s10, %s11
  %s13 = sld [smem:[#allocation0]]
  $region66: #{tpu_custom_call.1} parent=0
    _
  %s15 = ssub.s32 1, %s13
  %s16 = scalar_select 0, %s15, %s13
  $region1: #{tpu_custom_call.1} parent=0
    #allocation2 [shape = 'u8[5120]{0}', space=vmem, size = 0x1400, scoped, tag = 'output window, operand 0, single buffered']
    #allocation3 [shape = 's32[1]{0}', space=sflag, size = 0x4, scoped, tag = 'scoped memory for tpu_custom_call.1']
    #allocation4 [shape = 'u8[2048]{0}', space=vmem, size = 0x800, scoped, tag = 'output window, operand 1, single buffered']
    #allocation5 [shape = 's32[1]{0}', space=sflag, size = 0x4, scoped, tag = 'scoped memory for tpu_custom_call.1']
    #allocation6 [shape = 'u8[1024]{0}', space=vmem, size = 0x400, scoped, tag = 'output window, operand 2, single buffered']
    #allocation7 [shape = 'u8[1024]{0}', space=vmem, size = 0x400, scoped, tag = 'output window, operand 3, single buffered']
    #allocation8 [shape = 's32[1]{0}', space=sflag, size = 0x4, scoped, tag = 'scoped memory for tpu_custom_call.1']
    %17 = vsyncpa [#allocation3], 0
    %18 = vsyncpa [#allocation5], 0
    %19 = vsyncpa [#allocation8], 0
    // Predicated region
    $region2: #{tpu_custom_call.1} parent=1 // pred_check
      _
    $region3: #{tpu_custom_call.1} parent=1 // pred_check_branch
      %21 = sbr.rel (0) target = $region5
    $region4: #{tpu_custom_call.1} parent=1 // pred_region
      _
    $region5: #{tpu_custom_call.1} parent=1 // pred_fallthru
      _
    // Predicated region
    $region6: #{tpu_custom_call.1} parent=1 // pred_check
      _
    $region7: #{tpu_custom_call.1} parent=1 // pred_check_branch
      %23 = sbr.rel (0) target = $region9
    $region8: #{tpu_custom_call.1} parent=1 // pred_region
      _
    $region9: #{tpu_custom_call.1} parent=1 // pred_fallthru
      _
    // Predicated region
    $region10: #{tpu_custom_call.1} parent=1 // pred_check
      _
    $region11: #{tpu_custom_call.1} parent=1 // pred_check_branch
      %25 = sbr.rel (0) target = $region13
    $region12: #{tpu_custom_call.1} parent=1 // pred_region
      _
    $region13: #{tpu_custom_call.1} parent=1 // pred_fallthru
      _
    // Predicated region
    $region14: #{tpu_custom_call.1} parent=1 // pred_check
      _
    $region15: #{tpu_custom_call.1} parent=1 // pred_check_branch
      %27 = sbr.rel (0) target = $region17
    $region16: #{tpu_custom_call.1} parent=1 // pred_region
      _
    $region17: #{tpu_custom_call.1} parent=1 // pred_fallthru
      _
    // Predicated region
    $region18: #{tpu_custom_call.1} parent=1 // pred_check
      _
    $region19: #{tpu_custom_call.1} parent=1 // pred_check_branch
      %29 = sbr.rel (0) target = $region21
    $region20: #{tpu_custom_call.1} parent=1 // pred_region
      _
    $region21: #{tpu_custom_call.1} parent=1 // pred_fallthru
      _
    // Predicated region
    $region22: #{tpu_custom_call.1} parent=1 // pred_check
      _
    $region23: #{tpu_custom_call.1} parent=1 // pred_check_branch
      %31 = sbr.rel (0) target = $region25
    $region24: #{tpu_custom_call.1} parent=1 // pred_region
      _
    $region25: #{tpu_custom_call.1} parent=1 // pred_fallthru
      _
    // Predicated region
    $region26: #{tpu_custom_call.1} parent=1 // pred_check
      _
    $region27: #{tpu_custom_call.1} parent=1 // pred_check_branch
      %33 = sbr.rel (0) target = $region29
    $region28: #{tpu_custom_call.1} parent=1 // pred_region
      _
    $region29: #{tpu_custom_call.1} parent=1 // pred_fallthru
      _
    // Predicated region
    $region30: #{tpu_custom_call.1} parent=1 // pred_check
      _
    $region31: #{tpu_custom_call.1} parent=1 // pred_check_branch
      %35 = sbr.rel (0) target = $region33
    $region32: #{tpu_custom_call.1} parent=1 // pred_region
      _
    $region33: #{tpu_custom_call.1} parent=1 // pred_fallthru
      _
    %v36 = vld [vmem:[%s2] sm:$0xff]
    %v37 = vld [vmem:[%s2 + $0x8] sm:$0xff]
    %v38 = vld [vmem:[%s3] sm:$0xff]
    %v39 = vld [vmem:[%s3 + $0x8] sm:$0xff]
    %v40 = vld [vmem:[%s4] sm:$0x3]
    %v41 = vsub.f32 1.0, %v40
    %v42 = vmul.f32 %v40, -1000000.0
    %v43 = vld [vmem:[%s7] sm:$0xff]
    %v44 = vld [vmem:[%s7 + $0x8] sm:$0xff]
    %v45 = vld [vmem:[%s7 + $0x10] sm:$0xff]
    %v46 = vld [vmem:[%s7 + $0x18] sm:$0xff]
    %v47 = vld [vmem:[%s7 + $0x20] sm:$0xff]
    %v48 = vld [vmem:[%s7 + $0x28] sm:$0xff]
    %v49 = vld [vmem:[%s7 + $0x30] sm:$0xff]
    %v50 = vld [vmem:[%s7 + $0x38] sm:$0xff]
    %v51 = vld [vmem:[%s7 + $0x40] sm:$0xff]
    %v52 = vld [vmem:[%s7 + $0x48] sm:$0xff]
    %v53 = vld [vmem:[%s7 + $0x50] sm:$0xff]
    %v54 = vld [vmem:[%s7 + $0x58] sm:$0xff]
    %v55 = vld [vmem:[%s7 + $0x60] sm:$0xff]
    %v56 = vld [vmem:[%s7 + $0x68] sm:$0xff]
    %v57 = vld [vmem:[%s7 + $0x70] sm:$0xff]
    %v58 = vld [vmem:[%s7 + $0x78] sm:$0xff]
    %v59 = vld [vmem:[%s7 + $0x80] sm:$0xff]
    %v60 = vld [vmem:[%s7 + $0x88] sm:$0xff]
    %v61 = vld [vmem:[%s7 + $0x90] sm:$0xff]
    %v62 = vld [vmem:[%s7 + $0x98] sm:$0xff]
    %v63 = vld [vmem:[%s7 + $0xa0] sm:$0xff]
    %v64 = vld [vmem:[%s7 + $0xa8] sm:$0xff]
    %v65 = vld [vmem:[%s7 + $0xb0] sm:$0xff]
    %v66 = vld [vmem:[%s7 + $0xb8] sm:$0xff]
    %v67 = vld [vmem:[%s7 + $0xc0] sm:$0x1]
    %v68 = vld [vmem:[%s7 + $0xc1] sm:$0x1]
    %v69 = vld [vmem:[%s7 + $0xc2] sm:$0x1]
    %v70 = vld [vmem:[%s7 + $0xc3] sm:$0x1]
    %v71 = vlaneseq
    %v72 = vshrl.u32 %v71, 7
    %v73 = vsub.s32 0, %v72
    %v74 = vrot.slane %v70, %v73
    %v75 = vld [vmem:[%s5] sm:$0x3]
    %s76 = scalar_lea.vmem %s5, 2
    %v77 = vld [vmem:[%s76] sm:$0x3]
    %v78 = vld [vmem:[%s6] sm:$0x3]
    %v79 = vld [vmem:[%s0] sm:$0x3]
    %vm80 = vcmask 261120
    %v82 = vsel %vm80, %v78, 0
    %84 = vmatprep.subr.mxu0 0.0
    %85 = vmatpush1.msra.mxu0 %v43
    %86 = vmatprep.subr.mxu0 0.0
    %87 = vmatpush1.msra.mxu0 %v44
    %88 = vmatprep.subr.mxu0 0.0
    %89 = vmatpush1.msra.mxu0 %v45
    %90 = vmatprep.subr.mxu0 0.0
    %91 = vmatpush1.msra.mxu0 %v46
    %92 = vmatprep.subr.mxu0 0.0
    %93 = vmatpush1.msra.mxu0 0.0
    %94 = vmatprep.subr.mxu0 0.0
    %95 = vmatpush1.msra.mxu0 0.0
    %96 = vmatprep.subr.mxu0 0.0
    %97 = vmatpush1.msra.mxu0 0.0
    %98 = vmatprep.subr.mxu0 0.0
    %99 = vmatpush1.msra.mxu0 0.0
    %100 = vmatprep.subr.mxu0 0.0
    %101 = vmatpush1.msra.mxu0 0.0
    %102 = vmatprep.subr.mxu0 0.0
    %103 = vmatpush1.msra.mxu0 0.0
    %104 = vmatprep.subr.mxu0 0.0
    %105 = vmatpush1.msra.mxu0 0.0
    %106 = vmatprep.subr.mxu0 0.0
    %107 = vmatpush1.msra.mxu0 0.0
    %108 = vmatprep.subr.mxu0 0.0
    %109 = vmatpush1.msra.mxu0 0.0
    %110 = vmatprep.subr.mxu0 0.0
    %111 = vmatpush1.msra.mxu0 0.0
    %112 = vmatprep.subr.mxu0 0.0
    %113 = vmatpush1.msra.mxu0 0.0
    %114 = vmatprep.subr.mxu0 0.0
    %115 = vmatpush1.msra.mxu0 0.0
    %116 = vmatprep.subr.mxu0 0.0
    %117 = vmatpush1.msra.mxu0 0.0
    %118 = vmatprep.subr.mxu0 0.0
    %119 = vmatpush1.msra.mxu0 0.0
    %120 = vmatprep.subr.mxu0 0.0
    %121 = vmatpush1.msra.mxu0 0.0
    %122 = vmatprep.subr.mxu0 0.0
    %123 = vmatpush1.msra.mxu0 0.0
    %124 = vmatprep.subr.mxu0 0.0
    %125 = vmatpush1.msra.mxu0 0.0
    %126 = vmatprep.subr.mxu0 0.0
    %127 = vmatpush1.msra.mxu0 0.0
    %128 = vmatprep.subr.mxu0 0.0
    %129 = vmatpush1.msra.mxu0 0.0
    %130 = vmatprep.subr.mxu0 0.0
    %131 = vmatpush1.msra.mxu0 0.0
    %132 = vmatprep.subr.mxu0 0.0
    %133 = vmatpush1.msra.mxu0 0.0
    %134 = vmatprep.subr.mxu0 0.0
    %135 = vmatpush1.msra.mxu0 0.0
    %136 = vmatprep.subr.mxu0 0.0
    %137 = vmatpush1.msra.mxu0 0.0
    %138 = vmatprep.subr.mxu0 0.0
    %139 = vmatpush1.msra.mxu0 0.0
    %140 = vmatprep.subr.mxu0 0.0
    %141 = vmatpush1.msra.mxu0 0.0
    %142 = vmatprep.subr.mxu0 0.0
    %143 = vmatpush1.msra.mxu0 0.0
    %144 = vmatprep.subr.mxu0 0.0
    %145 = vmatpush1.msra.mxu0 0.0
    %146 = vmatprep.subr.mxu0 0.0
    %147 = vmatpush1.msra.mxu0 0.0
    %148 = vmatprep.mubr.f32.mxu0 0.0
    %149 = vmatmul.mubr.f32.gmra.mrb[0].mxu0 %v82
    %v150 = vpop.f32.mrb[0].mxu0
    %v151 = vadd.f32 0.0, %v150
    %v152 = vpop.f32.mrb[0].mxu0
    %153 = vdwg.mxu0
    %v154 = vadd.f32 %v79, %v151
    %v155 = vlaneseq
    %v156 = vshrl.u32 %v155, 7
    %v157 = vsub.s32 0, %v156
    %v158 = vrot.slane %v67, %v157
    %v160 = vsel %vm80, %v75, 0
    %162 = vmatprep.subr.mxu0 0.0
    %163 = vmatpush1.msra.mxu0 %v47
    %164 = vmatprep.subr.mxu0 0.0
    %165 = vmatpush1.msra.mxu0 %v48
    %166 = vmatprep.subr.mxu0 0.0
    %167 = vmatpush1.msra.mxu0 %v49
    %168 = vmatprep.subr.mxu0 0.0
    %169 = vmatpush1.msra.mxu0 %v50
    %170 = vmatprep.subr.mxu0 0.0
    %171 = vmatpush1.msra.mxu0 0.0
    %172 = vmatprep.subr.mxu0 0.0
    %173 = vmatpush1.msra.mxu0 0.0
    %174 = vmatprep.subr.mxu0 0.0
    %175 = vmatpush1.msra.mxu0 0.0
    %176 = vmatprep.subr.mxu0 0.0
    %177 = vmatpush1.msra.mxu0 0.0
    %178 = vmatprep.subr.mxu0 0.0
    %179 = vmatpush1.msra.mxu0 0.0
    %180 = vmatprep.subr.mxu0 0.0
    %181 = vmatpush1.msra.mxu0 0.0
    %182 = vmatprep.subr.mxu0 0.0
    %183 = vmatpush1.msra.mxu0 0.0
    %184 = vmatprep.subr.mxu0 0.0
    %185 = vmatpush1.msra.mxu0 0.0
    %186 = vmatprep.subr.mxu0 0.0
    %187 = vmatpush1.msra.mxu0 0.0
    %188 = vmatprep.subr.mxu0 0.0
    %189 = vmatpush1.msra.mxu0 0.0
    %190 = vmatprep.subr.mxu0 0.0
    %191 = vmatpush1.msra.mxu0 0.0
    %192 = vmatprep.subr.mxu0 0.0
    %193 = vmatpush1.msra.mxu0 0.0
    %194 = vmatprep.subr.mxu0 0.0
    %195 = vmatpush1.msra.mxu0 0.0
    %196 = vmatprep.subr.mxu0 0.0
    %197 = vmatpush1.msra.mxu0 0.0
    %198 = vmatprep.subr.mxu0 0.0
    %199 = vmatpush1.msra.mxu0 0.0
    %200 = vmatprep.subr.mxu0 0.0
    %201 = vmatpush1.msra.mxu0 0.0
    %202 = vmatprep.subr.mxu0 0.0
    %203 = vmatpush1.msra.mxu0 0.0
    %204 = vmatprep.subr.mxu0 0.0
    %205 = vmatpush1.msra.mxu0 0.0
    %206 = vmatprep.subr.mxu0 0.0
    %207 = vmatpush1.msra.mxu0 0.0
    %208 = vmatprep.subr.mxu0 0.0
    %209 = vmatpush1.msra.mxu0 0.0
    %210 = vmatprep.subr.mxu0 0.0
    %211 = vmatpush1.msra.mxu0 0.0
    %212 = vmatprep.subr.mxu0 0.0
    %213 = vmatpush1.msra.mxu0 0.0
    %214 = vmatprep.subr.mxu0 0.0
    %215 = vmatpush1.msra.mxu0 0.0
    %216 = vmatprep.subr.mxu0 0.0
    %217 = vmatpush1.msra.mxu0 0.0
    %218 = vmatprep.subr.mxu0 0.0
    %219 = vmatpush1.msra.mxu0 0.0
    %220 = vmatprep.subr.mxu0 0.0
    %221 = vmatpush1.msra.mxu0 0.0
    %222 = vmatprep.subr.mxu0 0.0
    %223 = vmatpush1.msra.mxu0 0.0
    %224 = vmatprep.subr.mxu0 0.0
    %225 = vmatpush1.msra.mxu0 0.0
    %226 = vmatprep.mubr.f32.mxu0 0.0
    %227 = vmatmul.mubr.f32.gmra.mrb[0].mxu0 %v160
    %v228 = vpop.f32.mrb[0].mxu0
    %v229 = vadd.f32 %v158, %v228
    %v230 = vpop.f32.mrb[0].mxu0
    %231 = vdwg.mxu0
    %v232 = vadd.f32 %v154, %v229
    %v233 = vxor.u32 %v232, 2147483648
    %v234 = vmul.f32 %v233, 1.442695
    %v235 = vpow.pop %v234
    %v236 = vadd.f32 %v235, 1.0
    %v237 = vrcp.pop %v236
    %v238 = vmul.f32 1.0, %v237
    %240 = vrot.lane.b32.xlu0 %v229, 64
    %v241 = vpop.permute.xlu0 %240
    %v243 = vmul.f32 %v238, %v241
    %245 = vrot.lane.b32.xlu0 %v243, 64
    %v246 = vpop.permute.xlu0 %245
    %v248 = vadd.f32 %v154, %v246
    %v249 = vtanh.pop %v248
    %v250 = vsub.f32 1.0, %v238
    %252 = vrot.lane.b32.xlu0 %v249, 96
    %v253 = vpop.permute.xlu0 %252
    %v255 = vmul.f32 %v250, %v253
    %256 = vrot.lane.b32.xlu0 %v75, 32
    %v257 = vpop.permute.xlu0 %256
    %v259 = vmul.f32 %v238, %v257
    %v260 = vadd.f32 %v255, %v259
    %v261 = vlaneseq
    %v262 = vshrl.u32 %v261, 7
    %v263 = vsub.s32 0, %v262
    %v264 = vrot.slane %v68, %v263
    %266 = vrot.lane.b32.xlu0 %v260, 96
    %v267 = vpop.permute.xlu0 %266
    %v268 = vsel %vm80, %v267, 0
    %270 = vmatprep.subr.mxu0 0.0
    %271 = vmatpush1.msra.mxu0 %v51
    %272 = vmatprep.subr.mxu0 0.0
    %273 = vmatpush1.msra.mxu0 %v52
    %274 = vmatprep.subr.mxu0 0.0
    %275 = vmatpush1.msra.mxu0 %v53
    %276 = vmatprep.subr.mxu0 0.0
    %277 = vmatpush1.msra.mxu0 %v54
    %278 = vmatprep.subr.mxu0 0.0
    %279 = vmatpush1.msra.mxu0 0.0
    %280 = vmatprep.subr.mxu0 0.0
    %281 = vmatpush1.msra.mxu0 0.0
    %282 = vmatprep.subr.mxu0 0.0
    %283 = vmatpush1.msra.mxu0 0.0
    %284 = vmatprep.subr.mxu0 0.0
    %285 = vmatpush1.msra.mxu0 0.0
    %286 = vmatprep.subr.mxu0 0.0
    %287 = vmatpush1.msra.mxu0 0.0
    %288 = vmatprep.subr.mxu0 0.0
    %289 = vmatpush1.msra.mxu0 0.0
    %290 = vmatprep.subr.mxu0 0.0
    %291 = vmatpush1.msra.mxu0 0.0
    %292 = vmatprep.subr.mxu0 0.0
    %293 = vmatpush1.msra.mxu0 0.0
    %294 = vmatprep.subr.mxu0 0.0
    %295 = vmatpush1.msra.mxu0 0.0
    %296 = vmatprep.subr.mxu0 0.0
    %297 = vmatpush1.msra.mxu0 0.0
    %298 = vmatprep.subr.mxu0 0.0
    %299 = vmatpush1.msra.mxu0 0.0
    %300 = vmatprep.subr.mxu0 0.0
    %301 = vmatpush1.msra.mxu0 0.0
    %302 = vmatprep.subr.mxu0 0.0
    %303 = vmatpush1.msra.mxu0 0.0
    %304 = vmatprep.subr.mxu0 0.0
    %305 = vmatpush1.msra.mxu0 0.0
    %306 = vmatprep.subr.mxu0 0.0
    %307 = vmatpush1.msra.mxu0 0.0
    %308 = vmatprep.subr.mxu0 0.0
    %309 = vmatpush1.msra.mxu0 0.0
    %310 = vmatprep.subr.mxu0 0.0
    %311 = vmatpush1.msra.mxu0 0.0
    %312 = vmatprep.subr.mxu0 0.0
    %313 = vmatpush1.msra.mxu0 0.0
    %314 = vmatprep.subr.mxu0 0.0
    %315 = vmatpush1.msra.mxu0 0.0
    %316 = vmatprep.subr.mxu0 0.0
    %317 = vmatpush1.msra.mxu0 0.0
    %318 = vmatprep.subr.mxu0 0.0
    %319 = vmatpush1.msra.mxu0 0.0
    %320 = vmatprep.subr.mxu0 0.0
    %321 = vmatpush1.msra.mxu0 0.0
    %322 = vmatprep.subr.mxu0 0.0
    %323 = vmatpush1.msra.mxu0 0.0
    %324 = vmatprep.subr.mxu0 0.0
    %325 = vmatpush1.msra.mxu0 0.0
    %326 = vmatprep.subr.mxu0 0.0
    %327 = vmatpush1.msra.mxu0 0.0
    %328 = vmatprep.subr.mxu0 0.0
    %329 = vmatpush1.msra.mxu0 0.0
    %330 = vmatprep.subr.mxu0 0.0
    %331 = vmatpush1.msra.mxu0 0.0
    %332 = vmatprep.subr.mxu0 0.0
    %333 = vmatpush1.msra.mxu0 0.0
    %334 = vmatprep.mubr.f32.mxu0 0.0
    %335 = vmatmul.mubr.f32.gmra.mrb[0].mxu0 %v268
    %v336 = vpop.f32.mrb[0].mxu0
    %v337 = vadd.f32 %v264, %v336
    %v338 = vpop.f32.mrb[0].mxu0
    %339 = vdwg.mxu0
    %v340 = vlaneseq
    %v341 = vshrl.u32 %v340, 7
    %v342 = vsub.s32 0, %v341
    %v343 = vrot.slane %v69, %v342
    %v345 = vsel %vm80, %v77, 0
    %347 = vmatprep.subr.mxu0 0.0
    %348 = vmatpush1.msra.mxu0 %v55
    %349 = vmatprep.subr.mxu0 0.0
    %350 = vmatpush1.msra.mxu0 %v56
    %351 = vmatprep.subr.mxu0 0.0
    %352 = vmatpush1.msra.mxu0 %v57
    %353 = vmatprep.subr.mxu0 0.0
    %354 = vmatpush1.msra.mxu0 %v58
    %355 = vmatprep.subr.mxu0 0.0
    %356 = vmatpush1.msra.mxu0 0.0
    %357 = vmatprep.subr.mxu0 0.0
    %358 = vmatpush1.msra.mxu0 0.0
    %359 = vmatprep.subr.mxu0 0.0
    %360 = vmatpush1.msra.mxu0 0.0
    %361 = vmatprep.subr.mxu0 0.0
    %362 = vmatpush1.msra.mxu0 0.0
    %363 = vmatprep.subr.mxu0 0.0
    %364 = vmatpush1.msra.mxu0 0.0
    %365 = vmatprep.subr.mxu0 0.0
    %366 = vmatpush1.msra.mxu0 0.0
    %367 = vmatprep.subr.mxu0 0.0
    %368 = vmatpush1.msra.mxu0 0.0
    %369 = vmatprep.subr.mxu0 0.0
    %370 = vmatpush1.msra.mxu0 0.0
    %371 = vmatprep.subr.mxu0 0.0
    %372 = vmatpush1.msra.mxu0 0.0
    %373 = vmatprep.subr.mxu0 0.0
    %374 = vmatpush1.msra.mxu0 0.0
    %375 = vmatprep.subr.mxu0 0.0
    %376 = vmatpush1.msra.mxu0 0.0
    %377 = vmatprep.subr.mxu0 0.0
    %378 = vmatpush1.msra.mxu0 0.0
    %379 = vmatprep.subr.mxu0 0.0
    %380 = vmatpush1.msra.mxu0 0.0
    %381 = vmatprep.subr.mxu0 0.0
    %382 = vmatpush1.msra.mxu0 0.0
    %383 = vmatprep.subr.mxu0 0.0
    %384 = vmatpush1.msra.mxu0 0.0
    %385 = vmatprep.subr.mxu0 0.0
    %386 = vmatpush1.msra.mxu0 0.0
    %387 = vmatprep.subr.mxu0 0.0
    %388 = vmatpush1.msra.mxu0 0.0
    %389 = vmatprep.subr.mxu0 0.0
    %390 = vmatpush1.msra.mxu0 0.0
    %391 = vmatprep.subr.mxu0 0.0
    %392 = vmatpush1.msra.mxu0 0.0
    %393 = vmatprep.subr.mxu0 0.0
    %394 = vmatpush1.msra.mxu0 0.0
    %395 = vmatprep.subr.mxu0 0.0
    %396 = vmatpush1.msra.mxu0 0.0
    %397 = vmatprep.subr.mxu0 0.0
    %398 = vmatpush1.msra.mxu0 0.0
    %399 = vmatprep.subr.mxu0 0.0
    %400 = vmatpush1.msra.mxu0 0.0
    %401 = vmatprep.subr.mxu0 0.0
    %402 = vmatpush1.msra.mxu0 0.0
    %403 = vmatprep.subr.mxu0 0.0
    %404 = vmatpush1.msra.mxu0 0.0
    %405 = vmatprep.subr.mxu0 0.0
    %406 = vmatpush1.msra.mxu0 0.0
    %407 = vmatprep.subr.mxu0 0.0
    %408 = vmatpush1.msra.mxu0 0.0
    %409 = vmatprep.subr.mxu0 0.0
    %410 = vmatpush1.msra.mxu0 0.0
    %411 = vmatprep.mubr.f32.mxu0 0.0
    %412 = vmatmul.mubr.f32.gmra.mrb[0].mxu0 %v345
    %v413 = vpop.f32.mrb[0].mxu0
    %v414 = vadd.f32 %v343, %v413
    %v415 = vpop.f32.mrb[0].mxu0
    %416 = vdwg.mxu0
    %v417 = vadd.f32 %v337, %v414
    %v418 = vxor.u32 %v417, 2147483648
    %v419 = vmul.f32 %v418, 1.442695
    %v420 = vpow.pop %v419
    %v421 = vadd.f32 %v420, 1.0
    %v422 = vrcp.pop %v421
    %v423 = vmul.f32 1.0, %v422
    %425 = vrot.lane.b32.xlu0 %v414, 64
    %v426 = vpop.permute.xlu0 %425
    %v428 = vmul.f32 %v423, %v426
    %430 = vrot.lane.b32.xlu0 %v428, 64
    %v431 = vpop.permute.xlu0 %430
    %v433 = vadd.f32 %v337, %v431
    %v434 = vtanh.pop %v433
    %v435 = vsub.f32 1.0, %v423
    %437 = vrot.lane.b32.xlu0 %v434, 96
    %v438 = vpop.permute.xlu0 %437
    %v440 = vmul.f32 %v435, %v438
    %441 = vrot.lane.b32.xlu0 %v77, 32
    %v442 = vpop.permute.xlu0 %441
    %v444 = vmul.f32 %v423, %v442
    %v445 = vadd.f32 %v440, %v444
    %447 = vrot.lane.b32.xlu0 %v445, 96
    %v448 = vpop.permute.xlu0 %447
    %v449 = vsel %vm80, %v448, 0
    %451 = vmatprep.subr.mxu0 0.0
    %452 = vmatpush1.msra.mxu0 %v59
    %453 = vmatprep.subr.mxu0 0.0
    %454 = vmatpush1.msra.mxu0 %v60
    %455 = vmatprep.subr.mxu0 0.0
    %456 = vmatpush1.msra.mxu0 %v61
    %457 = vmatprep.subr.mxu0 0.0
    %458 = vmatpush1.msra.mxu0 %v62
    %459 = vmatprep.subr.mxu0 0.0
    %460 = vmatpush1.msra.mxu0 0.0
    %461 = vmatprep.subr.mxu0 0.0
    %462 = vmatpush1.msra.mxu0 0.0
    %463 = vmatprep.subr.mxu0 0.0
    %464 = vmatpush1.msra.mxu0 0.0
    %465 = vmatprep.subr.mxu0 0.0
    %466 = vmatpush1.msra.mxu0 0.0
    %467 = vmatprep.subr.mxu0 0.0
    %468 = vmatpush1.msra.mxu0 0.0
    %469 = vmatprep.subr.mxu0 0.0
    %470 = vmatpush1.msra.mxu0 0.0
    %471 = vmatprep.subr.mxu0 0.0
    %472 = vmatpush1.msra.mxu0 0.0
    %473 = vmatprep.subr.mxu0 0.0
    %474 = vmatpush1.msra.mxu0 0.0
    %475 = vmatprep.subr.mxu0 0.0
    %476 = vmatpush1.msra.mxu0 0.0
    %477 = vmatprep.subr.mxu0 0.0
    %478 = vmatpush1.msra.mxu0 0.0
    %479 = vmatprep.subr.mxu0 0.0
    %480 = vmatpush1.msra.mxu0 0.0
    %481 = vmatprep.subr.mxu0 0.0
    %482 = vmatpush1.msra.mxu0 0.0
    %483 = vmatprep.subr.mxu0 0.0
    %484 = vmatpush1.msra.mxu0 0.0
    %485 = vmatprep.subr.mxu0 0.0
    %486 = vmatpush1.msra.mxu0 0.0
    %487 = vmatprep.subr.mxu0 0.0
    %488 = vmatpush1.msra.mxu0 0.0
    %489 = vmatprep.subr.mxu0 0.0
    %490 = vmatpush1.msra.mxu0 0.0
    %491 = vmatprep.subr.mxu0 0.0
    %492 = vmatpush1.msra.mxu0 0.0
    %493 = vmatprep.subr.mxu0 0.0
    %494 = vmatpush1.msra.mxu0 0.0
    %495 = vmatprep.subr.mxu0 0.0
    %496 = vmatpush1.msra.mxu0 0.0
    %497 = vmatprep.subr.mxu0 0.0
    %498 = vmatpush1.msra.mxu0 0.0
    %499 = vmatprep.subr.mxu0 0.0
    %500 = vmatpush1.msra.mxu0 0.0
    %501 = vmatprep.subr.mxu0 0.0
    %502 = vmatpush1.msra.mxu0 0.0
    %503 = vmatprep.subr.mxu0 0.0
    %504 = vmatpush1.msra.mxu0 0.0
    %505 = vmatprep.subr.mxu0 0.0
    %506 = vmatpush1.msra.mxu0 0.0
    %507 = vmatprep.subr.mxu0 0.0
    %508 = vmatpush1.msra.mxu0 0.0
    %509 = vmatprep.subr.mxu0 0.0
    %510 = vmatpush1.msra.mxu0 0.0
    %511 = vmatprep.subr.mxu0 0.0
    %512 = vmatpush1.msra.mxu0 0.0
    %513 = vmatprep.subr.mxu0 0.0
    %514 = vmatpush1.msra.mxu0 0.0
    %515 = vmatprep.mubr.f32.mxu0 0.0
    %516 = vmatmul.mubr.f32.gmra.mrb[0].mxu0 %v449
    %v517 = vpop.f32.mrb[0].mxu0
    %v518 = vadd.f32 0.0, %v517
    %v519 = vpop.f32.mrb[0].mxu0
    %520 = vdwg.mxu0
    %v523 = vunpack.c.l.s4 1966171168
    %v524 = vunpack.c.0.s8 %v523
    %v525 = vlaneseq
    %v526 = vshrl.u32 %v525, 7
    %v527 = vsub.s32 %v524, %v526
    %v528 = vrot.slane %v518, %v527
    %v529 = vcombine.high %v528, %v528
    %v531 = vunpack.c.l.s4 1966171168
    %v532 = vunpack.c.0.s8 %v531
    %v533 = vlaneseq
    %v534 = vshrl.u32 %v533, 7
    %v535 = vsub.s32 %v532, %v534
    %v536 = vrot.slane %v528, %v535
    %v538 = vunpack.c.l.s4 1966171168
    %v539 = vunpack.c.0.s8 %v538
    %v540 = vlaneseq
    %v541 = vshrl.u32 %v540, 7
    %v542 = vsub.s32 %v539, %v541
    %v543 = vrot.slane %v529, %v542
    %v544 = vlaneseq
    %v545 = vshrl.u32 %v544, 7
    %v546 = vsub.s32 0, %v545
    %v547 = vrot.slane %v536, %v546
    %v548 = vlaneseq
    %v549 = vshrl.u32 %v548, 7
    %v550 = vsub.s32 0, %v549
    %v551 = vrot.slane %v543, %v550
    %v554 = vadd.f32 %v38, %v547
    %v555 = vadd.f32 %v39, %v551
    %v556 = vtanh.pop %v554
    %v557 = vtanh.pop %v555
    %v558 = vmul.f32 %v556, %v74
    %v559 = vmul.f32 %v557, %v74
    %v560 = vsel %vm80, %v558, 0.0
    %561 = vadd.xlane.f32.xlu0 %v560
    %v562 = vpop.xlane.xlu0 %561
    %v563 = vsel %vm80, %v559, 0.0
    %564 = vadd.xlane.f32.xlu0 %v563
    %v565 = vpop.xlane.xlu0 %564
    %v567 = vlaneseq
    %v568 = vshrl.u32 %v567, 7
    %v569 = vsub.s32 0, %v568
    %v570 = vrot.slane %v41, %v569
    %572 = vbcast.lane.b32.xlu0 %v570, 256
    %v573 = vpop.permute.xlu0 %572
    %v574 = vlaneseq
    %v575 = vshrl.u32 %v574, 7
    %v576 = vsub.s32 1, %v575
    %v577 = vrot.slane %v41, %v576
    %579 = vbcast.lane.b32.xlu0 %v577, 256
    %v580 = vpop.permute.xlu0 %579
    %v583 = vmul.f32 %v562, %v573
    %v584 = vmul.f32 %v565, %v580
    %v586 = vlaneseq
    %v587 = vshrl.u32 %v586, 7
    %v588 = vsub.s32 0, %v587
    %v589 = vrot.slane %v42, %v588
    %591 = vbcast.lane.b32.xlu0 %v589, 256
    %v592 = vpop.permute.xlu0 %591
    %v593 = vlaneseq
    %v594 = vshrl.u32 %v593, 7
    %v595 = vsub.s32 1, %v594
    %v596 = vrot.slane %v42, %v595
    %598 = vbcast.lane.b32.xlu0 %v596, 256
    %v599 = vpop.permute.xlu0 %598
    %v602 = vadd.f32 %v583, %v592
    %v603 = vadd.f32 %v584, %v599
    %v604 = vmul.f32 %v602, 1.442695
    %v605 = vpow.pop %v604
    %v606 = vmul.f32 %v603, 1.442695
    %v607 = vpow.pop %v606
    %610 = vset.pattern.permute.xlu0 0
    %611 = vperm.xlu0 %610, %v605
    %v612 = vpop.permute.xlu0 %611
    %613 = vset.pattern.permute.xlu0 0
    %614 = vperm.xlu0 %613, %v607
    %v615 = vpop.permute.xlu0 %614
    %v616 = vlaneseq
    %v617 = vand.u32 %v616, 127
    %v618 = vlaneseq
    %v619 = vshrl.u32 %v618, 7
    %v620 = vsub.s32 %v617, %v619
    %v621 = vrot.slane %v612, %v620
    %v622 = vlaneseq
    %v623 = vshrl.u32 %v622, 7
    %v624 = vsub.s32 %v617, %v623
    %v625 = vrot.slane %v615, %v624
    %vm626 = vcmask 1041409
    %v627 = vsel %vm626, %v625, %v621
    %vm629 = vcmask 58368
    %v630 = vsel %vm629, %v627, 0.0
    %631 = vadd.xlane.f32.xlu0 %v630
    %v632 = vpop.xlane.xlu0 %631
    %v633 = vrcp.pop %v632
    %v635 = vlaneseq
    %v636 = vshrl.u32 %v635, 7
    %v637 = vsub.s32 0, %v636
    %v638 = vrot.slane %v633, %v637
    %v639 = vlaneseq
    %v640 = vshrl.u32 %v639, 7
    %v641 = vsub.s32 1, %v640
    %v642 = vrot.slane %v633, %v641
    %v645 = vmul.f32 %v605, %v638
    %v646 = vmul.f32 %v607, %v642
    %648 = vset.pattern.permute.xlu0 0
    %649 = vperm.xlu0 %648, %v645
    %v650 = vpop.permute.xlu0 %649
    %653 = vset.pattern.permute.xlu0 0
    %654 = vperm.xlu0 %653, %v646
    %v655 = vpop.permute.xlu0 %654
    %v657 = vmul.f32 %v650, %v36
    %v658 = vmul.f32 %v655, %v37
    %v659 = vsel %vm80, %v657, 0.0
    %v660 = vrot.slane %v659, 4
    %v661 = vadd.f32 %v659, %v660
    %v662 = vrot.slane %v661, 2
    %v663 = vadd.f32 %v661, %v662
    %v664 = vrot.slane %v663, 1
    %v665 = vadd.f32 %v663, %v664
    %v666 = vsel %vm80, %v658, 0.0
    %v667 = vrot.slane %v666, 4
    %v668 = vadd.f32 %v666, %v667
    %v669 = vrot.slane %v668, 2
    %v670 = vadd.f32 %v668, %v669
    %v671 = vrot.slane %v670, 1
    %v672 = vadd.f32 %v670, %v671
    %v673 = vld [vmem:[%s1] sm:$0x3]
    %674 = vrot.lane.b32.xlu0 %v518, 96
    %v675 = vpop.permute.xlu0 %674
    %v677 = vadd.f32 %v673, %v675
    %v680 = vsel %vm626, %v672, %v665
    %v681 = vsel %vm80, %v680, 0
    %683 = vmatprep.subr.mxu0 0.0
    %684 = vmatpush1.msra.mxu0 %v63
    %685 = vmatprep.subr.mxu0 0.0
    %686 = vmatpush1.msra.mxu0 %v64
    %687 = vmatprep.subr.mxu0 0.0
    %688 = vmatpush1.msra.mxu0 %v65
    %689 = vmatprep.subr.mxu0 0.0
    %690 = vmatpush1.msra.mxu0 %v66
    %691 = vmatprep.subr.mxu0 0.0
    %692 = vmatpush1.msra.mxu0 0.0
    %693 = vmatprep.subr.mxu0 0.0
    %694 = vmatpush1.msra.mxu0 0.0
    %695 = vmatprep.subr.mxu0 0.0
    %696 = vmatpush1.msra.mxu0 0.0
    %697 = vmatprep.subr.mxu0 0.0
    %698 = vmatpush1.msra.mxu0 0.0
    %699 = vmatprep.subr.mxu0 0.0
    %700 = vmatpush1.msra.mxu0 0.0
    %701 = vmatprep.subr.mxu0 0.0
    %702 = vmatpush1.msra.mxu0 0.0
    %703 = vmatprep.subr.mxu0 0.0
    %704 = vmatpush1.msra.mxu0 0.0
    %705 = vmatprep.subr.mxu0 0.0
    %706 = vmatpush1.msra.mxu0 0.0
    %707 = vmatprep.subr.mxu0 0.0
    %708 = vmatpush1.msra.mxu0 0.0
    %709 = vmatprep.subr.mxu0 0.0
    %710 = vmatpush1.msra.mxu0 0.0
    %711 = vmatprep.subr.mxu0 0.0
    %712 = vmatpush1.msra.mxu0 0.0
    %713 = vmatprep.subr.mxu0 0.0
    %714 = vmatpush1.msra.mxu0 0.0
    %715 = vmatprep.subr.mxu0 0.0
    %716 = vmatpush1.msra.mxu0 0.0
    %717 = vmatprep.subr.mxu0 0.0
    %718 = vmatpush1.msra.mxu0 0.0
    %719 = vmatprep.subr.mxu0 0.0
    %720 = vmatpush1.msra.mxu0 0.0
    %721 = vmatprep.subr.mxu0 0.0
    %722 = vmatpush1.msra.mxu0 0.0
    %723 = vmatprep.subr.mxu0 0.0
    %724 = vmatpush1.msra.mxu0 0.0
    %725 = vmatprep.subr.mxu0 0.0
    %726 = vmatpush1.msra.mxu0 0.0
    %727 = vmatprep.subr.mxu0 0.0
    %728 = vmatpush1.msra.mxu0 0.0
    %729 = vmatprep.subr.mxu0 0.0
    %730 = vmatpush1.msra.mxu0 0.0
    %731 = vmatprep.subr.mxu0 0.0
    %732 = vmatpush1.msra.mxu0 0.0
    %733 = vmatprep.subr.mxu0 0.0
    %734 = vmatpush1.msra.mxu0 0.0
    %735 = vmatprep.subr.mxu0 0.0
    %736 = vmatpush1.msra.mxu0 0.0
    %737 = vmatprep.subr.mxu0 0.0
    %738 = vmatpush1.msra.mxu0 0.0
    %739 = vmatprep.subr.mxu0 0.0
    %740 = vmatpush1.msra.mxu0 0.0
    %741 = vmatprep.subr.mxu0 0.0
    %742 = vmatpush1.msra.mxu0 0.0
    %743 = vmatprep.subr.mxu0 0.0
    %744 = vmatpush1.msra.mxu0 0.0
    %745 = vmatprep.subr.mxu0 0.0
    %746 = vmatpush1.msra.mxu0 0.0
    %747 = vmatprep.mubr.f32.mxu0 0.0
    %748 = vmatmul.mubr.f32.gmra.mrb[0].mxu0 %v681
    %v749 = vpop.f32.mrb[0].mxu0
    %v750 = vadd.f32 0.0, %v749
    %v751 = vpop.f32.mrb[0].mxu0
    %752 = vdwg.mxu0
    %v753 = vadd.f32 %v677, %v750
    %755 = vrot.lane.b32.xlu0 %v753, 112
    %v756 = vpop.permute.xlu0 %755
    %v758 = vmax.f32 %v753, %v756
    %vm759 = vcmask 123904
    %760 = vst.msk [vmem:[#allocation2] sm:$0x3] %vm759, %v758
    %s761 = scalar_lea.vmem %s0, 2
    %v762 = vld [vmem:[%s761] sm:$0x3]
    %763 = vmatprep.subr.mxu0 0.0
    %764 = vmatpush1.msra.mxu0 %v43
    %765 = vmatprep.subr.mxu0 0.0
    %766 = vmatpush1.msra.mxu0 %v44
    %767 = vmatprep.subr.mxu0 0.0
    %768 = vmatpush1.msra.mxu0 %v45
    %769 = vmatprep.subr.mxu0 0.0
    %770 = vmatpush1.msra.mxu0 %v46
    %771 = vmatprep.subr.mxu0 0.0
    %772 = vmatpush1.msra.mxu0 0.0
    %773 = vmatprep.subr.mxu0 0.0
    %774 = vmatpush1.msra.mxu0 0.0
    %775 = vmatprep.subr.mxu0 0.0
    %776 = vmatpush1.msra.mxu0 0.0
    %777 = vmatprep.subr.mxu0 0.0
    %778 = vmatpush1.msra.mxu0 0.0
    %779 = vmatprep.subr.mxu0 0.0
    %780 = vmatpush1.msra.mxu0 0.0
    %781 = vmatprep.subr.mxu0 0.0
    %782 = vmatpush1.msra.mxu0 0.0
    %783 = vmatprep.subr.mxu0 0.0
    %784 = vmatpush1.msra.mxu0 0.0
    %785 = vmatprep.subr.mxu0 0.0
    %786 = vmatpush1.msra.mxu0 0.0
    %787 = vmatprep.subr.mxu0 0.0
    %788 = vmatpush1.msra.mxu0 0.0
    %789 = vmatprep.subr.mxu0 0.0
    %790 = vmatpush1.msra.mxu0 0.0
    %791 = vmatprep.subr.mxu0 0.0
    %792 = vmatpush1.msra.mxu0 0.0
    %793 = vmatprep.subr.mxu0 0.0
    %794 = vmatpush1.msra.mxu0 0.0
    %795 = vmatprep.subr.mxu0 0.0
    %796 = vmatpush1.msra.mxu0 0.0
    %797 = vmatprep.subr.mxu0 0.0
    %798 = vmatpush1.msra.mxu0 0.0
    %799 = vmatprep.subr.mxu0 0.0
    %800 = vmatpush1.msra.mxu0 0.0
    %801 = vmatprep.subr.mxu0 0.0
    %802 = vmatpush1.msra.mxu0 0.0
    %803 = vmatprep.subr.mxu0 0.0
    %804 = vmatpush1.msra.mxu0 0.0
    %805 = vmatprep.subr.mxu0 0.0
    %806 = vmatpush1.msra.mxu0 0.0
    %807 = vmatprep.subr.mxu0 0.0
    %808 = vmatpush1.msra.mxu0 0.0
    %809 = vmatprep.subr.mxu0 0.0
    %810 = vmatpush1.msra.mxu0 0.0
    %811 = vmatprep.subr.mxu0 0.0
    %812 = vmatpush1.msra.mxu0 0.0
    %813 = vmatprep.subr.mxu0 0.0
    %814 = vmatpush1.msra.mxu0 0.0
    %815 = vmatprep.subr.mxu0 0.0
    %816 = vmatpush1.msra.mxu0 0.0
    %817 = vmatprep.subr.mxu0 0.0
    %818 = vmatpush1.msra.mxu0 0.0
    %819 = vmatprep.subr.mxu0 0.0
    %820 = vmatpush1.msra.mxu0 0.0
    %821 = vmatprep.subr.mxu0 0.0
    %822 = vmatpush1.msra.mxu0 0.0
    %823 = vmatprep.subr.mxu0 0.0
    %824 = vmatpush1.msra.mxu0 0.0
    %825 = vmatprep.subr.mxu0 0.0
    %826 = vmatpush1.msra.mxu0 0.0
    %827 = vmatprep.mubr.f32.mxu0 0.0
    %828 = vmatmul.mubr.f32.gmra.mrb[0].mxu0 %v681
    %v829 = vpop.f32.mrb[0].mxu0
    %v830 = vadd.f32 0.0, %v829
    %v831 = vpop.f32.mrb[0].mxu0
    %832 = vdwg.mxu0
    %v833 = vadd.f32 %v762, %v830
    %834 = vmatprep.subr.mxu0 0.0
    %835 = vmatpush1.msra.mxu0 %v47
    %836 = vmatprep.subr.mxu0 0.0
    %837 = vmatpush1.msra.mxu0 %v48
    %838 = vmatprep.subr.mxu0 0.0
    %839 = vmatpush1.msra.mxu0 %v49
    %840 = vmatprep.subr.mxu0 0.0
    %841 = vmatpush1.msra.mxu0 %v50
    %842 = vmatprep.subr.mxu0 0.0
    %843 = vmatpush1.msra.mxu0 0.0
    %844 = vmatprep.subr.mxu0 0.0
    %845 = vmatpush1.msra.mxu0 0.0
    %846 = vmatprep.subr.mxu0 0.0
    %847 = vmatpush1.msra.mxu0 0.0
    %848 = vmatprep.subr.mxu0 0.0
    %849 = vmatpush1.msra.mxu0 0.0
    %850 = vmatprep.subr.mxu0 0.0
    %851 = vmatpush1.msra.mxu0 0.0
    %852 = vmatprep.subr.mxu0 0.0
    %853 = vmatpush1.msra.mxu0 0.0
    %854 = vmatprep.subr.mxu0 0.0
    %855 = vmatpush1.msra.mxu0 0.0
    %856 = vmatprep.subr.mxu0 0.0
    %857 = vmatpush1.msra.mxu0 0.0
    %858 = vmatprep.subr.mxu0 0.0
    %859 = vmatpush1.msra.mxu0 0.0
    %860 = vmatprep.subr.mxu0 0.0
    %861 = vmatpush1.msra.mxu0 0.0
    %862 = vmatprep.subr.mxu0 0.0
    %863 = vmatpush1.msra.mxu0 0.0
    %864 = vmatprep.subr.mxu0 0.0
    %865 = vmatpush1.msra.mxu0 0.0
    %866 = vmatprep.subr.mxu0 0.0
    %867 = vmatpush1.msra.mxu0 0.0
    %868 = vmatprep.subr.mxu0 0.0
    %869 = vmatpush1.msra.mxu0 0.0
    %870 = vmatprep.subr.mxu0 0.0
    %871 = vmatpush1.msra.mxu0 0.0
    %872 = vmatprep.subr.mxu0 0.0
    %873 = vmatpush1.msra.mxu0 0.0
    %874 = vmatprep.subr.mxu0 0.0
    %875 = vmatpush1.msra.mxu0 0.0
    %876 = vmatprep.subr.mxu0 0.0
    %877 = vmatpush1.msra.mxu0 0.0
    %878 = vmatprep.subr.mxu0 0.0
    %879 = vmatpush1.msra.mxu0 0.0
    %880 = vmatprep.subr.mxu0 0.0
    %881 = vmatpush1.msra.mxu0 0.0
    %882 = vmatprep.subr.mxu0 0.0
    %883 = vmatpush1.msra.mxu0 0.0
    %884 = vmatprep.subr.mxu0 0.0
    %885 = vmatpush1.msra.mxu0 0.0
    %886 = vmatprep.subr.mxu0 0.0
    %887 = vmatpush1.msra.mxu0 0.0
    %888 = vmatprep.subr.mxu0 0.0
    %889 = vmatpush1.msra.mxu0 0.0
    %890 = vmatprep.subr.mxu0 0.0
    %891 = vmatpush1.msra.mxu0 0.0
    %892 = vmatprep.subr.mxu0 0.0
    %893 = vmatpush1.msra.mxu0 0.0
    %894 = vmatprep.subr.mxu0 0.0
    %895 = vmatpush1.msra.mxu0 0.0
    %896 = vmatprep.subr.mxu0 0.0
    %897 = vmatpush1.msra.mxu0 0.0
    %898 = vmatprep.mubr.f32.mxu0 0.0
    %899 = vmatmul.mubr.f32.gmra.mrb[0].mxu0 %v268
    %v900 = vpop.f32.mrb[0].mxu0
    %v901 = vadd.f32 %v158, %v900
    %v902 = vpop.f32.mrb[0].mxu0
    %903 = vdwg.mxu0
    %v904 = vadd.f32 %v833, %v901
    %v905 = vxor.u32 %v904, 2147483648
    %v906 = vmul.f32 %v905, 1.442695
    %v907 = vpow.pop %v906
    %v908 = vadd.f32 %v907, 1.0
    %v909 = vrcp.pop %v908
    %v910 = vmul.f32 1.0, %v909
    %912 = vrot.lane.b32.xlu0 %v901, 64
    %v913 = vpop.permute.xlu0 %912
    %v915 = vmul.f32 %v910, %v913
    %917 = vrot.lane.b32.xlu0 %v915, 64
    %v918 = vpop.permute.xlu0 %917
    %v920 = vadd.f32 %v833, %v918
    %v921 = vtanh.pop %v920
    %v922 = vsub.f32 1.0, %v910
    %924 = vrot.lane.b32.xlu0 %v921, 96
    %v925 = vpop.permute.xlu0 %924
    %v927 = vmul.f32 %v922, %v925
    %v928 = vmul.f32 %v910, %v260
    %v929 = vadd.f32 %v927, %v928
    %931 = vrot.lane.b32.xlu0 %v929, 96
    %v932 = vpop.permute.xlu0 %931
    %v933 = vsel %vm80, %v932, 0
    %935 = vmatprep.subr.mxu0 0.0
    %936 = vmatpush1.msra.mxu0 %v51
    %937 = vmatprep.subr.mxu0 0.0
    %938 = vmatpush1.msra.mxu0 %v52
    %939 = vmatprep.subr.mxu0 0.0
    %940 = vmatpush1.msra.mxu0 %v53
    %941 = vmatprep.subr.mxu0 0.0
    %942 = vmatpush1.msra.mxu0 %v54
    %943 = vmatprep.subr.mxu0 0.0
    %944 = vmatpush1.msra.mxu0 0.0
    %945 = vmatprep.subr.mxu0 0.0
    %946 = vmatpush1.msra.mxu0 0.0
    %947 = vmatprep.subr.mxu0 0.0
    %948 = vmatpush1.msra.mxu0 0.0
    %949 = vmatprep.subr.mxu0 0.0
    %950 = vmatpush1.msra.mxu0 0.0
    %951 = vmatprep.subr.mxu0 0.0
    %952 = vmatpush1.msra.mxu0 0.0
    %953 = vmatprep.subr.mxu0 0.0
    %954 = vmatpush1.msra.mxu0 0.0
    %955 = vmatprep.subr.mxu0 0.0
    %956 = vmatpush1.msra.mxu0 0.0
    %957 = vmatprep.subr.mxu0 0.0
    %958 = vmatpush1.msra.mxu0 0.0
    %959 = vmatprep.subr.mxu0 0.0
    %960 = vmatpush1.msra.mxu0 0.0
    %961 = vmatprep.subr.mxu0 0.0
    %962 = vmatpush1.msra.mxu0 0.0
    %963 = vmatprep.subr.mxu0 0.0
    %964 = vmatpush1.msra.mxu0 0.0
    %965 = vmatprep.subr.mxu0 0.0
    %966 = vmatpush1.msra.mxu0 0.0
    %967 = vmatprep.subr.mxu0 0.0
    %968 = vmatpush1.msra.mxu0 0.0
    %969 = vmatprep.subr.mxu0 0.0
    %970 = vmatpush1.msra.mxu0 0.0
    %971 = vmatprep.subr.mxu0 0.0
    %972 = vmatpush1.msra.mxu0 0.0
    %973 = vmatprep.subr.mxu0 0.0
    %974 = vmatpush1.msra.mxu0 0.0
    %975 = vmatprep.subr.mxu0 0.0
    %976 = vmatpush1.msra.mxu0 0.0
    %977 = vmatprep.subr.mxu0 0.0
    %978 = vmatpush1.msra.mxu0 0.0
    %979 = vmatprep.subr.mxu0 0.0
    %980 = vmatpush1.msra.mxu0 0.0
    %981 = vmatprep.subr.mxu0 0.0
    %982 = vmatpush1.msra.mxu0 0.0
    %983 = vmatprep.subr.mxu0 0.0
    %984 = vmatpush1.msra.mxu0 0.0
    %985 = vmatprep.subr.mxu0 0.0
    %986 = vmatpush1.msra.mxu0 0.0
    %987 = vmatprep.subr.mxu0 0.0
    %988 = vmatpush1.msra.mxu0 0.0
    %989 = vmatprep.subr.mxu0 0.0
    %990 = vmatpush1.msra.mxu0 0.0
    %991 = vmatprep.subr.mxu0 0.0
    %992 = vmatpush1.msra.mxu0 0.0
    %993 = vmatprep.subr.mxu0 0.0
    %994 = vmatpush1.msra.mxu0 0.0
    %995 = vmatprep.subr.mxu0 0.0
    %996 = vmatpush1.msra.mxu0 0.0
    %997 = vmatprep.subr.mxu0 0.0
    %998 = vmatpush1.msra.mxu0 0.0
    %999 = vmatprep.mubr.f32.mxu0 0.0
    %1000 = vmatmul.mubr.f32.gmra.mrb[0].mxu0 %v933
    %v1001 = vpop.f32.mrb[0].mxu0
    %v1002 = vadd.f32 %v264, %v1001
    %v1003 = vpop.f32.mrb[0].mxu0
    %1004 = vdwg.mxu0
    %1005 = vmatprep.subr.mxu0 0.0
    %1006 = vmatpush1.msra.mxu0 %v55
    %1007 = vmatprep.subr.mxu0 0.0
    %1008 = vmatpush1.msra.mxu0 %v56
    %1009 = vmatprep.subr.mxu0 0.0
    %1010 = vmatpush1.msra.mxu0 %v57
    %1011 = vmatprep.subr.mxu0 0.0
    %1012 = vmatpush1.msra.mxu0 %v58
    %1013 = vmatprep.subr.mxu0 0.0
    %1014 = vmatpush1.msra.mxu0 0.0
    %1015 = vmatprep.subr.mxu0 0.0
    %1016 = vmatpush1.msra.mxu0 0.0
    %1017 = vmatprep.subr.mxu0 0.0
    %1018 = vmatpush1.msra.mxu0 0.0
    %1019 = vmatprep.subr.mxu0 0.0
    %1020 = vmatpush1.msra.mxu0 0.0
    %1021 = vmatprep.subr.mxu0 0.0
    %1022 = vmatpush1.msra.mxu0 0.0
    %1023 = vmatprep.subr.mxu0 0.0
    %1024 = vmatpush1.msra.mxu0 0.0
    %1025 = vmatprep.subr.mxu0 0.0
    %1026 = vmatpush1.msra.mxu0 0.0
    %1027 = vmatprep.subr.mxu0 0.0
    %1028 = vmatpush1.msra.mxu0 0.0
    %1029 = vmatprep.subr.mxu0 0.0
    %1030 = vmatpush1.msra.mxu0 0.0
    %1031 = vmatprep.subr.mxu0 0.0
    %1032 = vmatpush1.msra.mxu0 0.0
    %1033 = vmatprep.subr.mxu0 0.0
    %1034 = vmatpush1.msra.mxu0 0.0
    %1035 = vmatprep.subr.mxu0 0.0
    %1036 = vmatpush1.msra.mxu0 0.0
    %1037 = vmatprep.subr.mxu0 0.0
    %1038 = vmatpush1.msra.mxu0 0.0
    %1039 = vmatprep.subr.mxu0 0.0
    %1040 = vmatpush1.msra.mxu0 0.0
    %1041 = vmatprep.subr.mxu0 0.0
    %1042 = vmatpush1.msra.mxu0 0.0
    %1043 = vmatprep.subr.mxu0 0.0
    %1044 = vmatpush1.msra.mxu0 0.0
    %1045 = vmatprep.subr.mxu0 0.0
    %1046 = vmatpush1.msra.mxu0 0.0
    %1047 = vmatprep.subr.mxu0 0.0
    %1048 = vmatpush1.msra.mxu0 0.0
    %1049 = vmatprep.subr.mxu0 0.0
    %1050 = vmatpush1.msra.mxu0 0.0
    %1051 = vmatprep.subr.mxu0 0.0
    %1052 = vmatpush1.msra.mxu0 0.0
    %1053 = vmatprep.subr.mxu0 0.0
    %1054 = vmatpush1.msra.mxu0 0.0
    %1055 = vmatprep.subr.mxu0 0.0
    %1056 = vmatpush1.msra.mxu0 0.0
    %1057 = vmatprep.subr.mxu0 0.0
    %1058 = vmatpush1.msra.mxu0 0.0
    %1059 = vmatprep.subr.mxu0 0.0
    %1060 = vmatpush1.msra.mxu0 0.0
    %1061 = vmatprep.subr.mxu0 0.0
    %1062 = vmatpush1.msra.mxu0 0.0
    %1063 = vmatprep.subr.mxu0 0.0
    %1064 = vmatpush1.msra.mxu0 0.0
    %1065 = vmatprep.subr.mxu0 0.0
    %1066 = vmatpush1.msra.mxu0 0.0
    %1067 = vmatprep.subr.mxu0 0.0
    %1068 = vmatpush1.msra.mxu0 0.0
    %1069 = vmatprep.mubr.f32.mxu0 0.0
    %1070 = vmatmul.mubr.f32.gmra.mrb[0].mxu0 %v449
    %v1071 = vpop.f32.mrb[0].mxu0
    %v1072 = vadd.f32 %v343, %v1071
    %v1073 = vpop.f32.mrb[0].mxu0
    %1074 = vdwg.mxu0
    %v1075 = vadd.f32 %v1002, %v1072
    %v1076 = vxor.u32 %v1075, 2147483648
    %v1077 = vmul.f32 %v1076, 1.442695
    %v1078 = vpow.pop %v1077
    %v1079 = vadd.f32 %v1078, 1.0
    %v1080 = vrcp.pop %v1079
    %v1081 = vmul.f32 1.0, %v1080
    %1083 = vrot.lane.b32.xlu0 %v1072, 64
    %v1084 = vpop.permute.xlu0 %1083
    %v1086 = vmul.f32 %v1081, %v1084
    %1088 = vrot.lane.b32.xlu0 %v1086, 64
    %v1089 = vpop.permute.xlu0 %1088
    %v1091 = vadd.f32 %v1002, %v1089
    %v1092 = vtanh.pop %v1091
    %v1093 = vsub.f32 1.0, %v1081
    %1095 = vrot.lane.b32.xlu0 %v1092, 96
    %v1096 = vpop.permute.xlu0 %1095
    %v1098 = vmul.f32 %v1093, %v1096
    %v1099 = vmul.f32 %v1081, %v445
    %v1100 = vadd.f32 %v1098, %v1099
    %1102 = vrot.lane.b32.xlu0 %v1100, 96
    %v1103 = vpop.permute.xlu0 %1102
    %v1104 = vsel %vm80, %v1103, 0
    %1106 = vmatprep.subr.mxu0 0.0
    %1107 = vmatpush1.msra.mxu0 %v59
    %1108 = vmatprep.subr.mxu0 0.0
    %1109 = vmatpush1.msra.mxu0 %v60
    %1110 = vmatprep.subr.mxu0 0.0
    %1111 = vmatpush1.msra.mxu0 %v61
    %1112 = vmatprep.subr.mxu0 0.0
    %1113 = vmatpush1.msra.mxu0 %v62
    %1114 = vmatprep.subr.mxu0 0.0
    %1115 = vmatpush1.msra.mxu0 0.0
    %1116 = vmatprep.subr.mxu0 0.0
    %1117 = vmatpush1.msra.mxu0 0.0
    %1118 = vmatprep.subr.mxu0 0.0
    %1119 = vmatpush1.msra.mxu0 0.0
    %1120 = vmatprep.subr.mxu0 0.0
    %1121 = vmatpush1.msra.mxu0 0.0
    %1122 = vmatprep.subr.mxu0 0.0
    %1123 = vmatpush1.msra.mxu0 0.0
    %1124 = vmatprep.subr.mxu0 0.0
    %1125 = vmatpush1.msra.mxu0 0.0
    %1126 = vmatprep.subr.mxu0 0.0
    %1127 = vmatpush1.msra.mxu0 0.0
    %1128 = vmatprep.subr.mxu0 0.0
    %1129 = vmatpush1.msra.mxu0 0.0
    %1130 = vmatprep.subr.mxu0 0.0
    %1131 = vmatpush1.msra.mxu0 0.0
    %1132 = vmatprep.subr.mxu0 0.0
    %1133 = vmatpush1.msra.mxu0 0.0
    %1134 = vmatprep.subr.mxu0 0.0
    %1135 = vmatpush1.msra.mxu0 0.0
    %1136 = vmatprep.subr.mxu0 0.0
    %1137 = vmatpush1.msra.mxu0 0.0
    %1138 = vmatprep.subr.mxu0 0.0
    %1139 = vmatpush1.msra.mxu0 0.0
    %1140 = vmatprep.subr.mxu0 0.0
    %1141 = vmatpush1.msra.mxu0 0.0
    %1142 = vmatprep.subr.mxu0 0.0
    %1143 = vmatpush1.msra.mxu0 0.0
    %1144 = vmatprep.subr.mxu0 0.0
    %1145 = vmatpush1.msra.mxu0 0.0
    %1146 = vmatprep.subr.mxu0 0.0
    %1147 = vmatpush1.msra.mxu0 0.0
    %1148 = vmatprep.subr.mxu0 0.0
    %1149 = vmatpush1.msra.mxu0 0.0
    %1150 = vmatprep.subr.mxu0 0.0
    %1151 = vmatpush1.msra.mxu0 0.0
    %1152 = vmatprep.subr.mxu0 0.0
    %1153 = vmatpush1.msra.mxu0 0.0
    %1154 = vmatprep.subr.mxu0 0.0
    %1155 = vmatpush1.msra.mxu0 0.0
    %1156 = vmatprep.subr.mxu0 0.0
    %1157 = vmatpush1.msra.mxu0 0.0
    %1158 = vmatprep.subr.mxu0 0.0
    %1159 = vmatpush1.msra.mxu0 0.0
    %1160 = vmatprep.subr.mxu0 0.0
    %1161 = vmatpush1.msra.mxu0 0.0
    %1162 = vmatprep.subr.mxu0 0.0
    %1163 = vmatpush1.msra.mxu0 0.0
    %1164 = vmatprep.subr.mxu0 0.0
    %1165 = vmatpush1.msra.mxu0 0.0
    %1166 = vmatprep.subr.mxu0 0.0
    %1167 = vmatpush1.msra.mxu0 0.0
    %1168 = vmatprep.subr.mxu0 0.0
    %1169 = vmatpush1.msra.mxu0 0.0
    %1170 = vmatprep.mubr.f32.mxu0 0.0
    %1171 = vmatmul.mubr.f32.gmra.mrb[0].mxu0 %v1104
    %v1172 = vpop.f32.mrb[0].mxu0
    %v1173 = vadd.f32 0.0, %v1172
    %v1174 = vpop.f32.mrb[0].mxu0
    %1175 = vdwg.mxu0
    %v1178 = vunpack.c.l.s4 1966171168
    %v1179 = vunpack.c.0.s8 %v1178
    %v1180 = vlaneseq
    %v1181 = vshrl.u32 %v1180, 7
    %v1182 = vsub.s32 %v1179, %v1181
    %v1183 = vrot.slane %v1173, %v1182
    %v1184 = vcombine.high %v1183, %v1183
    %v1186 = vunpack.c.l.s4 1966171168
    %v1187 = vunpack.c.0.s8 %v1186
    %v1188 = vlaneseq
    %v1189 = vshrl.u32 %v1188, 7
    %v1190 = vsub.s32 %v1187, %v1189
    %v1191 = vrot.slane %v1183, %v1190
    %v1193 = vunpack.c.l.s4 1966171168
    %v1194 = vunpack.c.0.s8 %v1193
    %v1195 = vlaneseq
    %v1196 = vshrl.u32 %v1195, 7
    %v1197 = vsub.s32 %v1194, %v1196
    %v1198 = vrot.slane %v1184, %v1197
    %v1199 = vlaneseq
    %v1200 = vshrl.u32 %v1199, 7
    %v1201 = vsub.s32 0, %v1200
    %v1202 = vrot.slane %v1191, %v1201
    %v1203 = vlaneseq
    %v1204 = vshrl.u32 %v1203, 7
    %v1205 = vsub.s32 0, %v1204
    %v1206 = vrot.slane %v1198, %v1205
    %v1209 = vadd.f32 %v38, %v1202
    %v1210 = vadd.f32 %v39, %v1206
    %v1211 = vtanh.pop %v1209
    %v1212 = vtanh.pop %v1210
    %v1213 = vmul.f32 %v1211, %v74
    %v1214 = vmul.f32 %v1212, %v74
    %v1215 = vsel %vm80, %v1213, 0.0
    %1216 = vadd.xlane.f32.xlu0 %v1215
    %v1217 = vpop.xlane.xlu0 %1216
    %v1218 = vsel %vm80, %v1214, 0.0
    %1219 = vadd.xlane.f32.xlu0 %v1218
    %v1220 = vpop.xlane.xlu0 %1219
    %v1221 = vmul.f32 %v1217, %v573
    %v1222 = vmul.f32 %v1220, %v580
    %v1223 = vadd.f32 %v1221, %v592
    %v1224 = vadd.f32 %v1222, %v599
    %v1225 = vmul.f32 %v1223, 1.442695
    %v1226 = vpow.pop %v1225
    %v1227 = vmul.f32 %v1224, 1.442695
    %v1228 = vpow.pop %v1227
    %1231 = vset.pattern.permute.xlu0 0
    %1232 = vperm.xlu0 %1231, %v1226
    %v1233 = vpop.permute.xlu0 %1232
    %1234 = vset.pattern.permute.xlu0 0
    %1235 = vperm.xlu0 %1234, %v1228
    %v1236 = vpop.permute.xlu0 %1235
    %v1237 = vlaneseq
    %v1238 = vshrl.u32 %v1237, 7
    %v1239 = vsub.s32 %v617, %v1238
    %v1240 = vrot.slane %v1233, %v1239
    %v1241 = vlaneseq
    %v1242 = vshrl.u32 %v1241, 7
    %v1243 = vsub.s32 %v617, %v1242
    %v1244 = vrot.slane %v1236, %v1243
    %v1245 = vsel %vm626, %v1244, %v1240
    %v1247 = vsel %vm629, %v1245, 0.0
    %1248 = vadd.xlane.f32.xlu0 %v1247
    %v1249 = vpop.xlane.xlu0 %1248
    %v1250 = vrcp.pop %v1249
    %v1252 = vlaneseq
    %v1253 = vshrl.u32 %v1252, 7
    %v1254 = vsub.s32 0, %v1253
    %v1255 = vrot.slane %v1250, %v1254
    %v1256 = vlaneseq
    %v1257 = vshrl.u32 %v1256, 7
    %v1258 = vsub.s32 1, %v1257
    %v1259 = vrot.slane %v1250, %v1258
    %v1262 = vmul.f32 %v1226, %v1255
    %v1263 = vmul.f32 %v1228, %v1259
    %1265 = vset.pattern.permute.xlu0 0
    %1266 = vperm.xlu0 %1265, %v1262
    %v1267 = vpop.permute.xlu0 %1266
    %1270 = vset.pattern.permute.xlu0 0
    %1271 = vperm.xlu0 %1270, %v1263
    %v1272 = vpop.permute.xlu0 %1271
    %v1274 = vmul.f32 %v1267, %v36
    %v1275 = vmul.f32 %v1272, %v37
    %v1276 = vsel %vm80, %v1274, 0.0
    %v1277 = vrot.slane %v1276, 4
    %v1278 = vadd.f32 %v1276, %v1277
    %v1279 = vrot.slane %v1278, 2
    %v1280 = vadd.f32 %v1278, %v1279
    %v1281 = vrot.slane %v1280, 1
    %v1282 = vadd.f32 %v1280, %v1281
    %v1283 = vsel %vm80, %v1275, 0.0
    %v1284 = vrot.slane %v1283, 4
    %v1285 = vadd.f32 %v1283, %v1284
    %v1286 = vrot.slane %v1285, 2
    %v1287 = vadd.f32 %v1285, %v1286
    %v1288 = vrot.slane %v1287, 1
    %v1289 = vadd.f32 %v1287, %v1288
    %s1290 = scalar_lea.vmem %s1, 2
    %v1291 = vld [vmem:[%s1290] sm:$0x3]
    %1292 = vrot.lane.b32.xlu0 %v1173, 96
    %v1293 = vpop.permute.xlu0 %1292
    %v1295 = vadd.f32 %v1291, %v1293
    %v1298 = vsel %vm626, %v1289, %v1282
    %v1299 = vsel %vm80, %v1298, 0
    %1301 = vmatprep.subr.mxu0 0.0
    %1302 = vmatpush1.msra.mxu0 %v63
    %1303 = vmatprep.subr.mxu0 0.0
    %1304 = vmatpush1.msra.mxu0 %v64
    %1305 = vmatprep.subr.mxu0 0.0
    %1306 = vmatpush1.msra.mxu0 %v65
    %1307 = vmatprep.subr.mxu0 0.0
    %1308 = vmatpush1.msra.mxu0 %v66
    %1309 = vmatprep.subr.mxu0 0.0
    %1310 = vmatpush1.msra.mxu0 0.0
    %1311 = vmatprep.subr.mxu0 0.0
    %1312 = vmatpush1.msra.mxu0 0.0
    %1313 = vmatprep.subr.mxu0 0.0
    %1314 = vmatpush1.msra.mxu0 0.0
    %1315 = vmatprep.subr.mxu0 0.0
    %1316 = vmatpush1.msra.mxu0 0.0
    %1317 = vmatprep.subr.mxu0 0.0
    %1318 = vmatpush1.msra.mxu0 0.0
    %1319 = vmatprep.subr.mxu0 0.0
    %1320 = vmatpush1.msra.mxu0 0.0
    %1321 = vmatprep.subr.mxu0 0.0
    %1322 = vmatpush1.msra.mxu0 0.0
    %1323 = vmatprep.subr.mxu0 0.0
    %1324 = vmatpush1.msra.mxu0 0.0
    %1325 = vmatprep.subr.mxu0 0.0
    %1326 = vmatpush1.msra.mxu0 0.0
    %1327 = vmatprep.subr.mxu0 0.0
    %1328 = vmatpush1.msra.mxu0 0.0
    %1329 = vmatprep.subr.mxu0 0.0
    %1330 = vmatpush1.msra.mxu0 0.0
    %1331 = vmatprep.subr.mxu0 0.0
    %1332 = vmatpush1.msra.mxu0 0.0
    %1333 = vmatprep.subr.mxu0 0.0
    %1334 = vmatpush1.msra.mxu0 0.0
    %1335 = vmatprep.subr.mxu0 0.0
    %1336 = vmatpush1.msra.mxu0 0.0
    %1337 = vmatprep.subr.mxu0 0.0
    %1338 = vmatpush1.msra.mxu0 0.0
    %1339 = vmatprep.subr.mxu0 0.0
    %1340 = vmatpush1.msra.mxu0 0.0
    %1341 = vmatprep.subr.mxu0 0.0
    %1342 = vmatpush1.msra.mxu0 0.0
    %1343 = vmatprep.subr.mxu0 0.0
    %1344 = vmatpush1.msra.mxu0 0.0
    %1345 = vmatprep.subr.mxu0 0.0
    %1346 = vmatpush1.msra.mxu0 0.0
    %1347 = vmatprep.subr.mxu0 0.0
    %1348 = vmatpush1.msra.mxu0 0.0
    %1349 = vmatprep.subr.mxu0 0.0
    %1350 = vmatpush1.msra.mxu0 0.0
    %1351 = vmatprep.subr.mxu0 0.0
    %1352 = vmatpush1.msra.mxu0 0.0
    %1353 = vmatprep.subr.mxu0 0.0
    %1354 = vmatpush1.msra.mxu0 0.0
    %1355 = vmatprep.subr.mxu0 0.0
    %1356 = vmatpush1.msra.mxu0 0.0
    %1357 = vmatprep.subr.mxu0 0.0
    %1358 = vmatpush1.msra.mxu0 0.0
    %1359 = vmatprep.subr.mxu0 0.0
    %1360 = vmatpush1.msra.mxu0 0.0
    %1361 = vmatprep.subr.mxu0 0.0
    %1362 = vmatpush1.msra.mxu0 0.0
    %1363 = vmatprep.subr.mxu0 0.0
    %1364 = vmatpush1.msra.mxu0 0.0
    %1365 = vmatprep.mubr.f32.mxu0 0.0
    %1366 = vmatmul.mubr.f32.gmra.mrb[0].mxu0 %v1299
    %v1367 = vpop.f32.mrb[0].mxu0
    %v1368 = vadd.f32 0.0, %v1367
    %v1369 = vpop.f32.mrb[0].mxu0
    %1370 = vdwg.mxu0
    %v1371 = vadd.f32 %v1295, %v1368
    %1373 = vrot.lane.b32.xlu0 %v1371, 112
    %v1374 = vpop.permute.xlu0 %1373
    %v1376 = vmax.f32 %v1371, %v1374
    %s1377 = scalar_lea.vmem [#allocation2], 2
    %1378 = vst.msk [vmem:[%s1377] sm:$0x3] %vm759, %v1376
    %s1379 = scalar_lea.vmem %s0, 4
    %v1380 = vld [vmem:[%s1379] sm:$0x3]
    %1381 = vmatprep.subr.mxu0 0.0
    %1382 = vmatpush1.msra.mxu0 %v43
    %1383 = vmatprep.subr.mxu0 0.0
    %1384 = vmatpush1.msra.mxu0 %v44
    %1385 = vmatprep.subr.mxu0 0.0
    %1386 = vmatpush1.msra.mxu0 %v45
    %1387 = vmatprep.subr.mxu0 0.0
    %1388 = vmatpush1.msra.mxu0 %v46
    %1389 = vmatprep.subr.mxu0 0.0
    %1390 = vmatpush1.msra.mxu0 0.0
    %1391 = vmatprep.subr.mxu0 0.0
    %1392 = vmatpush1.msra.mxu0 0.0
    %1393 = vmatprep.subr.mxu0 0.0
    %1394 = vmatpush1.msra.mxu0 0.0
    %1395 = vmatprep.subr.mxu0 0.0
    %1396 = vmatpush1.msra.mxu0 0.0
    %1397 = vmatprep.subr.mxu0 0.0
    %1398 = vmatpush1.msra.mxu0 0.0
    %1399 = vmatprep.subr.mxu0 0.0
    %1400 = vmatpush1.msra.mxu0 0.0
    %1401 = vmatprep.subr.mxu0 0.0
    %1402 = vmatpush1.msra.mxu0 0.0
    %1403 = vmatprep.subr.mxu0 0.0
    %1404 = vmatpush1.msra.mxu0 0.0
    %1405 = vmatprep.subr.mxu0 0.0
    %1406 = vmatpush1.msra.mxu0 0.0
    %1407 = vmatprep.subr.mxu0 0.0
    %1408 = vmatpush1.msra.mxu0 0.0
    %1409 = vmatprep.subr.mxu0 0.0
    %1410 = vmatpush1.msra.mxu0 0.0
    %1411 = vmatprep.subr.mxu0 0.0
    %1412 = vmatpush1.msra.mxu0 0.0
    %1413 = vmatprep.subr.mxu0 0.0
    %1414 = vmatpush1.msra.mxu0 0.0
    %1415 = vmatprep.subr.mxu0 0.0
    %1416 = vmatpush1.msra.mxu0 0.0
    %1417 = vmatprep.subr.mxu0 0.0
    %1418 = vmatpush1.msra.mxu0 0.0
    %1419 = vmatprep.subr.mxu0 0.0
    %1420 = vmatpush1.msra.mxu0 0.0
    %1421 = vmatprep.subr.mxu0 0.0
    %1422 = vmatpush1.msra.mxu0 0.0
    %1423 = vmatprep.subr.mxu0 0.0
    %1424 = vmatpush1.msra.mxu0 0.0
    %1425 = vmatprep.subr.mxu0 0.0
    %1426 = vmatpush1.msra.mxu0 0.0
    %1427 = vmatprep.subr.mxu0 0.0
    %1428 = vmatpush1.msra.mxu0 0.0
    %1429 = vmatprep.subr.mxu0 0.0
    %1430 = vmatpush1.msra.mxu0 0.0
    %1431 = vmatprep.subr.mxu0 0.0
    %1432 = vmatpush1.msra.mxu0 0.0
    %1433 = vmatprep.subr.mxu0 0.0
    %1434 = vmatpush1.msra.mxu0 0.0
    %1435 = vmatprep.subr.mxu0 0.0
    %1436 = vmatpush1.msra.mxu0 0.0
    %1437 = vmatprep.subr.mxu0 0.0
    %1438 = vmatpush1.msra.mxu0 0.0
    %1439 = vmatprep.subr.mxu0 0.0
    %1440 = vmatpush1.msra.mxu0 0.0
    %1441 = vmatprep.subr.mxu0 0.0
    %1442 = vmatpush1.msra.mxu0 0.0
    %1443 = vmatprep.subr.mxu0 0.0
    %1444 = vmatpush1.msra.mxu0 0.0
    %1445 = vmatprep.mubr.f32.mxu0 0.0
    %1446 = vmatmul.mubr.f32.gmra.mrb[0].mxu0 %v1299
    %v1447 = vpop.f32.mrb[0].mxu0
    %v1448 = vadd.f32 0.0, %v1447
    %v1449 = vpop.f32.mrb[0].mxu0
    %1450 = vdwg.mxu0
    %v1451 = vadd.f32 %v1380, %v1448
    %1452 = vmatprep.subr.mxu0 0.0
    %1453 = vmatpush1.msra.mxu0 %v47
    %1454 = vmatprep.subr.mxu0 0.0
    %1455 = vmatpush1.msra.mxu0 %v48
    %1456 = vmatprep.subr.mxu0 0.0
    %1457 = vmatpush1.msra.mxu0 %v49
    %1458 = vmatprep.subr.mxu0 0.0
    %1459 = vmatpush1.msra.mxu0 %v50
    %1460 = vmatprep.subr.mxu0 0.0
    %1461 = vmatpush1.msra.mxu0 0.0
    %1462 = vmatprep.subr.mxu0 0.0
    %1463 = vmatpush1.msra.mxu0 0.0
    %1464 = vmatprep.subr.mxu0 0.0
    %1465 = vmatpush1.msra.mxu0 0.0
    %1466 = vmatprep.subr.mxu0 0.0
    %1467 = vmatpush1.msra.mxu0 0.0
    %1468 = vmatprep.subr.mxu0 0.0
    %1469 = vmatpush1.msra.mxu0 0.0
    %1470 = vmatprep.subr.mxu0 0.0
    %1471 = vmatpush1.msra.mxu0 0.0
    %1472 = vmatprep.subr.mxu0 0.0
    %1473 = vmatpush1.msra.mxu0 0.0
    %1474 = vmatprep.subr.mxu0 0.0
    %1475 = vmatpush1.msra.mxu0 0.0
    %1476 = vmatprep.subr.mxu0 0.0
    %1477 = vmatpush1.msra.mxu0 0.0
    %1478 = vmatprep.subr.mxu0 0.0
    %1479 = vmatpush1.msra.mxu0 0.0
    %1480 = vmatprep.subr.mxu0 0.0
    %1481 = vmatpush1.msra.mxu0 0.0
    %1482 = vmatprep.subr.mxu0 0.0
    %1483 = vmatpush1.msra.mxu0 0.0
    %1484 = vmatprep.subr.mxu0 0.0
    %1485 = vmatpush1.msra.mxu0 0.0
    %1486 = vmatprep.subr.mxu0 0.0
    %1487 = vmatpush1.msra.mxu0 0.0
    %1488 = vmatprep.subr.mxu0 0.0
    %1489 = vmatpush1.msra.mxu0 0.0
    %1490 = vmatprep.subr.mxu0 0.0
    %1491 = vmatpush1.msra.mxu0 0.0
    %1492 = vmatprep.subr.mxu0 0.0
    %1493 = vmatpush1.msra.mxu0 0.0
    %1494 = vmatprep.subr.mxu0 0.0
    %1495 = vmatpush1.msra.mxu0 0.0
    %1496 = vmatprep.subr.mxu0 0.0
    %1497 = vmatpush1.msra.mxu0 0.0
    %1498 = vmatprep.subr.mxu0 0.0
    %1499 = vmatpush1.msra.mxu0 0.0
    %1500 = vmatprep.subr.mxu0 0.0
    %1501 = vmatpush1.msra.mxu0 0.0
    %1502 = vmatprep.subr.mxu0 0.0
    %1503 = vmatpush1.msra.mxu0 0.0
    %1504 = vmatprep.subr.mxu0 0.0
    %1505 = vmatpush1.msra.mxu0 0.0
    %1506 = vmatprep.subr.mxu0 0.0
    %1507 = vmatpush1.msra.mxu0 0.0
    %1508 = vmatprep.subr.mxu0 0.0
    %1509 = vmatpush1.msra.mxu0 0.0
    %1510 = vmatprep.subr.mxu0 0.0
    %1511 = vmatpush1.msra.mxu0 0.0
    %1512 = vmatprep.subr.mxu0 0.0
    %1513 = vmatpush1.msra.mxu0 0.0
    %1514 = vmatprep.subr.mxu0 0.0
    %1515 = vmatpush1.msra.mxu0 0.0
    %1516 = vmatprep.mubr.f32.mxu0 0.0
    %1517 = vmatmul.mubr.f32.gmra.mrb[0].mxu0 %v933
    %v1518 = vpop.f32.mrb[0].mxu0
    %v1519 = vadd.f32 %v158, %v1518
    %v1520 = vpop.f32.mrb[0].mxu0
    %1521 = vdwg.mxu0
    %v1522 = vadd.f32 %v1451, %v1519
    %v1523 = vxor.u32 %v1522, 2147483648
    %v1524 = vmul.f32 %v1523, 1.442695
    %v1525 = vpow.pop %v1524
    %v1526 = vadd.f32 %v1525, 1.0
    %v1527 = vrcp.pop %v1526
    %v1528 = vmul.f32 1.0, %v1527
    %1530 = vrot.lane.b32.xlu0 %v1519, 64
    %v1531 = vpop.permute.xlu0 %1530
    %v1533 = vmul.f32 %v1528, %v1531
    %1535 = vrot.lane.b32.xlu0 %v1533, 64
    %v1536 = vpop.permute.xlu0 %1535
    %v1538 = vadd.f32 %v1451, %v1536
    %v1539 = vtanh.pop %v1538
    %v1540 = vsub.f32 1.0, %v1528
    %1542 = vrot.lane.b32.xlu0 %v1539, 96
    %v1543 = vpop.permute.xlu0 %1542
    %v1545 = vmul.f32 %v1540, %v1543
    %v1546 = vmul.f32 %v1528, %v929
    %v1547 = vadd.f32 %v1545, %v1546
    %1549 = vrot.lane.b32.xlu0 %v1547, 96
    %v1550 = vpop.permute.xlu0 %1549
    %v1551 = vsel %vm80, %v1550, 0
    %1553 = vmatprep.subr.mxu0 0.0
    %1554 = vmatpush1.msra.mxu0 %v51
    %1555 = vmatprep.subr.mxu0 0.0
    %1556 = vmatpush1.msra.mxu0 %v52
    %1557 = vmatprep.subr.mxu0 0.0
    %1558 = vmatpush1.msra.mxu0 %v53
    %1559 = vmatprep.subr.mxu0 0.0
    %1560 = vmatpush1.msra.mxu0 %v54
    %1561 = vmatprep.subr.mxu0 0.0
    %1562 = vmatpush1.msra.mxu0 0.0
    %1563 = vmatprep.subr.mxu0 0.0
    %1564 = vmatpush1.msra.mxu0 0.0
    %1565 = vmatprep.subr.mxu0 0.0
    %1566 = vmatpush1.msra.mxu0 0.0
    %1567 = vmatprep.subr.mxu0 0.0
    %1568 = vmatpush1.msra.mxu0 0.0
    %1569 = vmatprep.subr.mxu0 0.0
    %1570 = vmatpush1.msra.mxu0 0.0
    %1571 = vmatprep.subr.mxu0 0.0
    %1572 = vmatpush1.msra.mxu0 0.0
    %1573 = vmatprep.subr.mxu0 0.0
    %1574 = vmatpush1.msra.mxu0 0.0
    %1575 = vmatprep.subr.mxu0 0.0
    %1576 = vmatpush1.msra.mxu0 0.0
    %1577 = vmatprep.subr.mxu0 0.0
    %1578 = vmatpush1.msra.mxu0 0.0
    %1579 = vmatprep.subr.mxu0 0.0
    %1580 = vmatpush1.msra.mxu0 0.0
    %1581 = vmatprep.subr.mxu0 0.0
    %1582 = vmatpush1.msra.mxu0 0.0
    %1583 = vmatprep.subr.mxu0 0.0
    %1584 = vmatpush1.msra.mxu0 0.0
    %1585 = vmatprep.subr.mxu0 0.0
    %1586 = vmatpush1.msra.mxu0 0.0
    %1587 = vmatprep.subr.mxu0 0.0
    %1588 = vmatpush1.msra.mxu0 0.0
    %1589 = vmatprep.subr.mxu0 0.0
    %1590 = vmatpush1.msra.mxu0 0.0
    %1591 = vmatprep.subr.mxu0 0.0
    %1592 = vmatpush1.msra.mxu0 0.0
    %1593 = vmatprep.subr.mxu0 0.0
    %1594 = vmatpush1.msra.mxu0 0.0
    %1595 = vmatprep.subr.mxu0 0.0
    %1596 = vmatpush1.msra.mxu0 0.0
    %1597 = vmatprep.subr.mxu0 0.0
    %1598 = vmatpush1.msra.mxu0 0.0
    %1599 = vmatprep.subr.mxu0 0.0
    %1600 = vmatpush1.msra.mxu0 0.0
    %1601 = vmatprep.subr.mxu0 0.0
    %1602 = vmatpush1.msra.mxu0 0.0
    %1603 = vmatprep.subr.mxu0 0.0
    %1604 = vmatpush1.msra.mxu0 0.0
    %1605 = vmatprep.subr.mxu0 0.0
    %1606 = vmatpush1.msra.mxu0 0.0
    %1607 = vmatprep.subr.mxu0 0.0
    %1608 = vmatpush1.msra.mxu0 0.0
    %1609 = vmatprep.subr.mxu0 0.0
    %1610 = vmatpush1.msra.mxu0 0.0
    %1611 = vmatprep.subr.mxu0 0.0
    %1612 = vmatpush1.msra.mxu0 0.0
    %1613 = vmatprep.subr.mxu0 0.0
    %1614 = vmatpush1.msra.mxu0 0.0
    %1615 = vmatprep.subr.mxu0 0.0
    %1616 = vmatpush1.msra.mxu0 0.0
    %1617 = vmatprep.mubr.f32.mxu0 0.0
    %1618 = vmatmul.mubr.f32.gmra.mrb[0].mxu0 %v1551
    %v1619 = vpop.f32.mrb[0].mxu0
    %v1620 = vadd.f32 %v264, %v1619
    %v1621 = vpop.f32.mrb[0].mxu0
    %1622 = vdwg.mxu0
    %1623 = vmatprep.subr.mxu0 0.0
    %1624 = vmatpush1.msra.mxu0 %v55
    %1625 = vmatprep.subr.mxu0 0.0
    %1626 = vmatpush1.msra.mxu0 %v56
    %1627 = vmatprep.subr.mxu0 0.0
    %1628 = vmatpush1.msra.mxu0 %v57
    %1629 = vmatprep.subr.mxu0 0.0
    %1630 = vmatpush1.msra.mxu0 %v58
    %1631 = vmatprep.subr.mxu0 0.0
    %1632 = vmatpush1.msra.mxu0 0.0
    %1633 = vmatprep.subr.mxu0 0.0
    %1634 = vmatpush1.msra.mxu0 0.0
    %1635 = vmatprep.subr.mxu0 0.0
    %1636 = vmatpush1.msra.mxu0 0.0
    %1637 = vmatprep.subr.mxu0 0.0
    %1638 = vmatpush1.msra.mxu0 0.0
    %1639 = vmatprep.subr.mxu0 0.0
    %1640 = vmatpush1.msra.mxu0 0.0
    %1641 = vmatprep.subr.mxu0 0.0
    %1642 = vmatpush1.msra.mxu0 0.0
    %1643 = vmatprep.subr.mxu0 0.0
    %1644 = vmatpush1.msra.mxu0 0.0
    %1645 = vmatprep.subr.mxu0 0.0
    %1646 = vmatpush1.msra.mxu0 0.0
    %1647 = vmatprep.subr.mxu0 0.0
    %1648 = vmatpush1.msra.mxu0 0.0
    %1649 = vmatprep.subr.mxu0 0.0
    %1650 = vmatpush1.msra.mxu0 0.0
    %1651 = vmatprep.subr.mxu0 0.0
    %1652 = vmatpush1.msra.mxu0 0.0
    %1653 = vmatprep.subr.mxu0 0.0
    %1654 = vmatpush1.msra.mxu0 0.0
    %1655 = vmatprep.subr.mxu0 0.0
    %1656 = vmatpush1.msra.mxu0 0.0
    %1657 = vmatprep.subr.mxu0 0.0
    %1658 = vmatpush1.msra.mxu0 0.0
    %1659 = vmatprep.subr.mxu0 0.0
    %1660 = vmatpush1.msra.mxu0 0.0
    %1661 = vmatprep.subr.mxu0 0.0
    %1662 = vmatpush1.msra.mxu0 0.0
    %1663 = vmatprep.subr.mxu0 0.0
    %1664 = vmatpush1.msra.mxu0 0.0
    %1665 = vmatprep.subr.mxu0 0.0
    %1666 = vmatpush1.msra.mxu0 0.0
    %1667 = vmatprep.subr.mxu0 0.0
    %1668 = vmatpush1.msra.mxu0 0.0
    %1669 = vmatprep.subr.mxu0 0.0
    %1670 = vmatpush1.msra.mxu0 0.0
    %1671 = vmatprep.subr.mxu0 0.0
    %1672 = vmatpush1.msra.mxu0 0.0
    %1673 = vmatprep.subr.mxu0 0.0
    %1674 = vmatpush1.msra.mxu0 0.0
    %1675 = vmatprep.subr.mxu0 0.0
    %1676 = vmatpush1.msra.mxu0 0.0
    %1677 = vmatprep.subr.mxu0 0.0
    %1678 = vmatpush1.msra.mxu0 0.0
    %1679 = vmatprep.subr.mxu0 0.0
    %1680 = vmatpush1.msra.mxu0 0.0
    %1681 = vmatprep.subr.mxu0 0.0
    %1682 = vmatpush1.msra.mxu0 0.0
    %1683 = vmatprep.subr.mxu0 0.0
    %1684 = vmatpush1.msra.mxu0 0.0
    %1685 = vmatprep.subr.mxu0 0.0
    %1686 = vmatpush1.msra.mxu0 0.0
    %1687 = vmatprep.mubr.f32.mxu0 0.0
    %1688 = vmatmul.mubr.f32.gmra.mrb[0].mxu0 %v1104
    %v1689 = vpop.f32.mrb[0].mxu0
    %v1690 = vadd.f32 %v343, %v1689
    %v1691 = vpop.f32.mrb[0].mxu0
    %1692 = vdwg.mxu0
    %v1693 = vadd.f32 %v1620, %v1690
    %v1694 = vxor.u32 %v1693, 2147483648
    %v1695 = vmul.f32 %v1694, 1.442695
    %v1696 = vpow.pop %v1695
    %v1697 = vadd.f32 %v1696, 1.0
    %v1698 = vrcp.pop %v1697
    %v1699 = vmul.f32 1.0, %v1698
    %1701 = vrot.lane.b32.xlu0 %v1690, 64
    %v1702 = vpop.permute.xlu0 %1701
    %v1704 = vmul.f32 %v1699, %v1702
    %1706 = vrot.lane.b32.xlu0 %v1704, 64
    %v1707 = vpop.permute.xlu0 %1706
    %v1709 = vadd.f32 %v1620, %v1707
    %v1710 = vtanh.pop %v1709
    %v1711 = vsub.f32 1.0, %v1699
    %1713 = vrot.lane.b32.xlu0 %v1710, 96
    %v1714 = vpop.permute.xlu0 %1713
    %v1716 = vmul.f32 %v1711, %v1714
    %v1717 = vmul.f32 %v1699, %v1100
    %v1718 = vadd.f32 %v1716, %v1717
    %1720 = vrot.lane.b32.xlu0 %v1718, 96
    %v1721 = vpop.permute.xlu0 %1720
    %v1722 = vsel %vm80, %v1721, 0
    %1724 = vmatprep.subr.mxu0 0.0
    %1725 = vmatpush1.msra.mxu0 %v59
    %1726 = vmatprep.subr.mxu0 0.0
    %1727 = vmatpush1.msra.mxu0 %v60
    %1728 = vmatprep.subr.mxu0 0.0
    %1729 = vmatpush1.msra.mxu0 %v61
    %1730 = vmatprep.subr.mxu0 0.0
    %1731 = vmatpush1.msra.mxu0 %v62
    %1732 = vmatprep.subr.mxu0 0.0
    %1733 = vmatpush1.msra.mxu0 0.0
    %1734 = vmatprep.subr.mxu0 0.0
    %1735 = vmatpush1.msra.mxu0 0.0
    %1736 = vmatprep.subr.mxu0 0.0
    %1737 = vmatpush1.msra.mxu0 0.0
    %1738 = vmatprep.subr.mxu0 0.0
    %1739 = vmatpush1.msra.mxu0 0.0
    %1740 = vmatprep.subr.mxu0 0.0
    %1741 = vmatpush1.msra.mxu0 0.0
    %1742 = vmatprep.subr.mxu0 0.0
    %1743 = vmatpush1.msra.mxu0 0.0
    %1744 = vmatprep.subr.mxu0 0.0
    %1745 = vmatpush1.msra.mxu0 0.0
    %1746 = vmatprep.subr.mxu0 0.0
    %1747 = vmatpush1.msra.mxu0 0.0
    %1748 = vmatprep.subr.mxu0 0.0
    %1749 = vmatpush1.msra.mxu0 0.0
    %1750 = vmatprep.subr.mxu0 0.0
    %1751 = vmatpush1.msra.mxu0 0.0
    %1752 = vmatprep.subr.mxu0 0.0
    %1753 = vmatpush1.msra.mxu0 0.0
    %1754 = vmatprep.subr.mxu0 0.0
    %1755 = vmatpush1.msra.mxu0 0.0
    %1756 = vmatprep.subr.mxu0 0.0
    %1757 = vmatpush1.msra.mxu0 0.0
    %1758 = vmatprep.subr.mxu0 0.0
    %1759 = vmatpush1.msra.mxu0 0.0
    %1760 = vmatprep.subr.mxu0 0.0
    %1761 = vmatpush1.msra.mxu0 0.0
    %1762 = vmatprep.subr.mxu0 0.0
    %1763 = vmatpush1.msra.mxu0 0.0
    %1764 = vmatprep.subr.mxu0 0.0
    %1765 = vmatpush1.msra.mxu0 0.0
    %1766 = vmatprep.subr.mxu0 0.0
    %1767 = vmatpush1.msra.mxu0 0.0
    %1768 = vmatprep.subr.mxu0 0.0
    %1769 = vmatpush1.msra.mxu0 0.0
    %1770 = vmatprep.subr.mxu0 0.0
    %1771 = vmatpush1.msra.mxu0 0.0
    %1772 = vmatprep.subr.mxu0 0.0
    %1773 = vmatpush1.msra.mxu0 0.0
    %1774 = vmatprep.subr.mxu0 0.0
    %1775 = vmatpush1.msra.mxu0 0.0
    %1776 = vmatprep.subr.mxu0 0.0
    %1777 = vmatpush1.msra.mxu0 0.0
    %1778 = vmatprep.subr.mxu0 0.0
    %1779 = vmatpush1.msra.mxu0 0.0
    %1780 = vmatprep.subr.mxu0 0.0
    %1781 = vmatpush1.msra.mxu0 0.0
    %1782 = vmatprep.subr.mxu0 0.0
    %1783 = vmatpush1.msra.mxu0 0.0
    %1784 = vmatprep.subr.mxu0 0.0
    %1785 = vmatpush1.msra.mxu0 0.0
    %1786 = vmatprep.subr.mxu0 0.0
    %1787 = vmatpush1.msra.mxu0 0.0
    %1788 = vmatprep.mubr.f32.mxu0 0.0
    %1789 = vmatmul.mubr.f32.gmra.mrb[0].mxu0 %v1722
    %v1790 = vpop.f32.mrb[0].mxu0
    %v1791 = vadd.f32 0.0, %v1790
    %v1792 = vpop.f32.mrb[0].mxu0
    %1793 = vdwg.mxu0
    %v1796 = vunpack.c.l.s4 1966171168
    %v1797 = vunpack.c.0.s8 %v1796
    %v1798 = vlaneseq
    %v1799 = vshrl.u32 %v1798, 7
    %v1800 = vsub.s32 %v1797, %v1799
    %v1801 = vrot.slane %v1791, %v1800
    %v1802 = vcombine.high %v1801, %v1801
    %v1804 = vunpack.c.l.s4 1966171168
    %v1805 = vunpack.c.0.s8 %v1804
    %v1806 = vlaneseq
    %v1807 = vshrl.u32 %v1806, 7
    %v1808 = vsub.s32 %v1805, %v1807
    %v1809 = vrot.slane %v1801, %v1808
    %v1811 = vunpack.c.l.s4 1966171168
    %v1812 = vunpack.c.0.s8 %v1811
    %v1813 = vlaneseq
    %v1814 = vshrl.u32 %v1813, 7
    %v1815 = vsub.s32 %v1812, %v1814
    %v1816 = vrot.slane %v1802, %v1815
    %v1817 = vlaneseq
    %v1818 = vshrl.u32 %v1817, 7
    %v1819 = vsub.s32 0, %v1818
    %v1820 = vrot.slane %v1809, %v1819
    %v1821 = vlaneseq
    %v1822 = vshrl.u32 %v1821, 7
    %v1823 = vsub.s32 0, %v1822
    %v1824 = vrot.slane %v1816, %v1823
    %v1827 = vadd.f32 %v38, %v1820
    %v1828 = vadd.f32 %v39, %v1824
    %v1829 = vtanh.pop %v1827
    %v1830 = vtanh.pop %v1828
    %v1831 = vmul.f32 %v1829, %v74
    %v1832 = vmul.f32 %v1830, %v74
    %v1833 = vsel %vm80, %v1831, 0.0
    %1834 = vadd.xlane.f32.xlu0 %v1833
    %v1835 = vpop.xlane.xlu0 %1834
    %v1836 = vsel %vm80, %v1832, 0.0
    %1837 = vadd.xlane.f32.xlu0 %v1836
    %v1838 = vpop.xlane.xlu0 %1837
    %v1839 = vmul.f32 %v1835, %v573
    %v1840 = vmul.f32 %v1838, %v580
    %v1841 = vadd.f32 %v1839, %v592
    %v1842 = vadd.f32 %v1840, %v599
    %v1843 = vmul.f32 %v1841, 1.442695
    %v1844 = vpow.pop %v1843
    %v1845 = vmul.f32 %v1842, 1.442695
    %v1846 = vpow.pop %v1845
    %1849 = vset.pattern.permute.xlu0 0
    %1850 = vperm.xlu0 %1849, %v1844
    %v1851 = vpop.permute.xlu0 %1850
    %1852 = vset.pattern.permute.xlu0 0
    %1853 = vperm.xlu0 %1852, %v1846
    %v1854 = vpop.permute.xlu0 %1853
    %v1855 = vlaneseq
    %v1856 = vshrl.u32 %v1855, 7
    %v1857 = vsub.s32 %v617, %v1856
    %v1858 = vrot.slane %v1851, %v1857
    %v1859 = vlaneseq
    %v1860 = vshrl.u32 %v1859, 7
    %v1861 = vsub.s32 %v617, %v1860
    %v1862 = vrot.slane %v1854, %v1861
    %v1863 = vsel %vm626, %v1862, %v1858
    %v1865 = vsel %vm629, %v1863, 0.0
    %1866 = vadd.xlane.f32.xlu0 %v1865
    %v1867 = vpop.xlane.xlu0 %1866
    %v1868 = vrcp.pop %v1867
    %v1870 = vlaneseq
    %v1871 = vshrl.u32 %v1870, 7
    %v1872 = vsub.s32 0, %v1871
    %v1873 = vrot.slane %v1868, %v1872
    %v1874 = vlaneseq
    %v1875 = vshrl.u32 %v1874, 7
    %v1876 = vsub.s32 1, %v1875
    %v1877 = vrot.slane %v1868, %v1876
    %v1880 = vmul.f32 %v1844, %v1873
    %v1881 = vmul.f32 %v1846, %v1877
    %1883 = vset.pattern.permute.xlu0 0
    %1884 = vperm.xlu0 %1883, %v1880
    %v1885 = vpop.permute.xlu0 %1884
    %1888 = vset.pattern.permute.xlu0 0
    %1889 = vperm.xlu0 %1888, %v1881
    %v1890 = vpop.permute.xlu0 %1889
    %v1892 = vmul.f32 %v1885, %v36
    %v1893 = vmul.f32 %v1890, %v37
    %v1894 = vsel %vm80, %v1892, 0.0
    %v1895 = vrot.slane %v1894, 4
    %v1896 = vadd.f32 %v1894, %v1895
    %v1897 = vrot.slane %v1896, 2
    %v1898 = vadd.f32 %v1896, %v1897
    %v1899 = vrot.slane %v1898, 1
    %v1900 = vadd.f32 %v1898, %v1899
    %v1901 = vsel %vm80, %v1893, 0.0
    %v1902 = vrot.slane %v1901, 4
    %v1903 = vadd.f32 %v1901, %v1902
    %v1904 = vrot.slane %v1903, 2
    %v1905 = vadd.f32 %v1903, %v1904
    %v1906 = vrot.slane %v1905, 1
    %v1907 = vadd.f32 %v1905, %v1906
    %s1908 = scalar_lea.vmem %s1, 4
    %v1909 = vld [vmem:[%s1908] sm:$0x3]
    %1910 = vrot.lane.b32.xlu0 %v1791, 96
    %v1911 = vpop.permute.xlu0 %1910
    %v1913 = vadd.f32 %v1909, %v1911
    %v1916 = vsel %vm626, %v1907, %v1900
    %v1917 = vsel %vm80, %v1916, 0
    %1919 = vmatprep.subr.mxu0 0.0
    %1920 = vmatpush1.msra.mxu0 %v63
    %1921 = vmatprep.subr.mxu0 0.0
    %1922 = vmatpush1.msra.mxu0 %v64
    %1923 = vmatprep.subr.mxu0 0.0
    %1924 = vmatpush1.msra.mxu0 %v65
    %1925 = vmatprep.subr.mxu0 0.0
    %1926 = vmatpush1.msra.mxu0 %v66
    %1927 = vmatprep.subr.mxu0 0.0
    %1928 = vmatpush1.msra.mxu0 0.0
    %1929 = vmatprep.subr.mxu0 0.0
    %1930 = vmatpush1.msra.mxu0 0.0
    %1931 = vmatprep.subr.mxu0 0.0
    %1932 = vmatpush1.msra.mxu0 0.0
    %1933 = vmatprep.subr.mxu0 0.0
    %1934 = vmatpush1.msra.mxu0 0.0
    %1935 = vmatprep.subr.mxu0 0.0
    %1936 = vmatpush1.msra.mxu0 0.0
    %1937 = vmatprep.subr.mxu0 0.0
    %1938 = vmatpush1.msra.mxu0 0.0
    %1939 = vmatprep.subr.mxu0 0.0
    %1940 = vmatpush1.msra.mxu0 0.0
    %1941 = vmatprep.subr.mxu0 0.0
    %1942 = vmatpush1.msra.mxu0 0.0
    %1943 = vmatprep.subr.mxu0 0.0
    %1944 = vmatpush1.msra.mxu0 0.0
    %1945 = vmatprep.subr.mxu0 0.0
    %1946 = vmatpush1.msra.mxu0 0.0
    %1947 = vmatprep.subr.mxu0 0.0
    %1948 = vmatpush1.msra.mxu0 0.0
    %1949 = vmatprep.subr.mxu0 0.0
    %1950 = vmatpush1.msra.mxu0 0.0
    %1951 = vmatprep.subr.mxu0 0.0
    %1952 = vmatpush1.msra.mxu0 0.0
    %1953 = vmatprep.subr.mxu0 0.0
    %1954 = vmatpush1.msra.mxu0 0.0
    %1955 = vmatprep.subr.mxu0 0.0
    %1956 = vmatpush1.msra.mxu0 0.0
    %1957 = vmatprep.subr.mxu0 0.0
    %1958 = vmatpush1.msra.mxu0 0.0
    %1959 = vmatprep.subr.mxu0 0.0
    %1960 = vmatpush1.msra.mxu0 0.0
    %1961 = vmatprep.subr.mxu0 0.0
    %1962 = vmatpush1.msra.mxu0 0.0
    %1963 = vmatprep.subr.mxu0 0.0
    %1964 = vmatpush1.msra.mxu0 0.0
    %1965 = vmatprep.subr.mxu0 0.0
    %1966 = vmatpush1.msra.mxu0 0.0
    %1967 = vmatprep.subr.mxu0 0.0
    %1968 = vmatpush1.msra.mxu0 0.0
    %1969 = vmatprep.subr.mxu0 0.0
    %1970 = vmatpush1.msra.mxu0 0.0
    %1971 = vmatprep.subr.mxu0 0.0
    %1972 = vmatpush1.msra.mxu0 0.0
    %1973 = vmatprep.subr.mxu0 0.0
    %1974 = vmatpush1.msra.mxu0 0.0
    %1975 = vmatprep.subr.mxu0 0.0
    %1976 = vmatpush1.msra.mxu0 0.0
    %1977 = vmatprep.subr.mxu0 0.0
    %1978 = vmatpush1.msra.mxu0 0.0
    %1979 = vmatprep.subr.mxu0 0.0
    %1980 = vmatpush1.msra.mxu0 0.0
    %1981 = vmatprep.subr.mxu0 0.0
    %1982 = vmatpush1.msra.mxu0 0.0
    %1983 = vmatprep.mubr.f32.mxu0 0.0
    %1984 = vmatmul.mubr.f32.gmra.mrb[0].mxu0 %v1917
    %v1985 = vpop.f32.mrb[0].mxu0
    %v1986 = vadd.f32 0.0, %v1985
    %v1987 = vpop.f32.mrb[0].mxu0
    %1988 = vdwg.mxu0
    %v1989 = vadd.f32 %v1913, %v1986
    %1991 = vrot.lane.b32.xlu0 %v1989, 112
    %v1992 = vpop.permute.xlu0 %1991
    %v1994 = vmax.f32 %v1989, %v1992
    %s1995 = scalar_lea.vmem [#allocation2], 4
    %1996 = vst.msk [vmem:[%s1995] sm:$0x3] %vm759, %v1994
    %s1997 = scalar_lea.vmem %s0, 6
    %v1998 = vld [vmem:[%s1997] sm:$0x3]
    %1999 = vmatprep.subr.mxu0 0.0
    %2000 = vmatpush1.msra.mxu0 %v43
    %2001 = vmatprep.subr.mxu0 0.0
    %2002 = vmatpush1.msra.mxu0 %v44
    %2003 = vmatprep.subr.mxu0 0.0
    %2004 = vmatpush1.msra.mxu0 %v45
    %2005 = vmatprep.subr.mxu0 0.0
    %2006 = vmatpush1.msra.mxu0 %v46
    %2007 = vmatprep.subr.mxu0 0.0
    %2008 = vmatpush1.msra.mxu0 0.0
    %2009 = vmatprep.subr.mxu0 0.0
    %2010 = vmatpush1.msra.mxu0 0.0
    %2011 = vmatprep.subr.mxu0 0.0
    %2012 = vmatpush1.msra.mxu0 0.0
    %2013 = vmatprep.subr.mxu0 0.0
    %2014 = vmatpush1.msra.mxu0 0.0
    %2015 = vmatprep.subr.mxu0 0.0
    %2016 = vmatpush1.msra.mxu0 0.0
    %2017 = vmatprep.subr.mxu0 0.0
    %2018 = vmatpush1.msra.mxu0 0.0
    %2019 = vmatprep.subr.mxu0 0.0
    %2020 = vmatpush1.msra.mxu0 0.0
    %2021 = vmatprep.subr.mxu0 0.0
    %2022 = vmatpush1.msra.mxu0 0.0
    %2023 = vmatprep.subr.mxu0 0.0
    %2024 = vmatpush1.msra.mxu0 0.0
    %2025 = vmatprep.subr.mxu0 0.0
    %2026 = vmatpush1.msra.mxu0 0.0
    %2027 = vmatprep.subr.mxu0 0.0
    %2028 = vmatpush1.msra.mxu0 0.0
    %2029 = vmatprep.subr.mxu0 0.0
    %2030 = vmatpush1.msra.mxu0 0.0
    %2031 = vmatprep.subr.mxu0 0.0
    %2032 = vmatpush1.msra.mxu0 0.0
    %2033 = vmatprep.subr.mxu0 0.0
    %2034 = vmatpush1.msra.mxu0 0.0
    %2035 = vmatprep.subr.mxu0 0.0
    %2036 = vmatpush1.msra.mxu0 0.0
    %2037 = vmatprep.subr.mxu0 0.0
    %2038 = vmatpush1.msra.mxu0 0.0
    %2039 = vmatprep.subr.mxu0 0.0
    %2040 = vmatpush1.msra.mxu0 0.0
    %2041 = vmatprep.subr.mxu0 0.0
    %2042 = vmatpush1.msra.mxu0 0.0
    %2043 = vmatprep.subr.mxu0 0.0
    %2044 = vmatpush1.msra.mxu0 0.0
    %2045 = vmatprep.subr.mxu0 0.0
    %2046 = vmatpush1.msra.mxu0 0.0
    %2047 = vmatprep.subr.mxu0 0.0
    %2048 = vmatpush1.msra.mxu0 0.0
    %2049 = vmatprep.subr.mxu0 0.0
    %2050 = vmatpush1.msra.mxu0 0.0
    %2051 = vmatprep.subr.mxu0 0.0
    %2052 = vmatpush1.msra.mxu0 0.0
    %2053 = vmatprep.subr.mxu0 0.0
    %2054 = vmatpush1.msra.mxu0 0.0
    %2055 = vmatprep.subr.mxu0 0.0
    %2056 = vmatpush1.msra.mxu0 0.0
    %2057 = vmatprep.subr.mxu0 0.0
    %2058 = vmatpush1.msra.mxu0 0.0
    %2059 = vmatprep.subr.mxu0 0.0
    %2060 = vmatpush1.msra.mxu0 0.0
    %2061 = vmatprep.subr.mxu0 0.0
    %2062 = vmatpush1.msra.mxu0 0.0
    %2063 = vmatprep.mubr.f32.mxu0 0.0
    %2064 = vmatmul.mubr.f32.gmra.mrb[0].mxu0 %v1917
    %v2065 = vpop.f32.mrb[0].mxu0
    %v2066 = vadd.f32 0.0, %v2065
    %v2067 = vpop.f32.mrb[0].mxu0
    %2068 = vdwg.mxu0
    %v2069 = vadd.f32 %v1998, %v2066
    %2070 = vmatprep.subr.mxu0 0.0
    %2071 = vmatpush1.msra.mxu0 %v47
    %2072 = vmatprep.subr.mxu0 0.0
    %2073 = vmatpush1.msra.mxu0 %v48
    %2074 = vmatprep.subr.mxu0 0.0
    %2075 = vmatpush1.msra.mxu0 %v49
    %2076 = vmatprep.subr.mxu0 0.0
    %2077 = vmatpush1.msra.mxu0 %v50
    %2078 = vmatprep.subr.mxu0 0.0
    %2079 = vmatpush1.msra.mxu0 0.0
    %2080 = vmatprep.subr.mxu0 0.0
    %2081 = vmatpush1.msra.mxu0 0.0
    %2082 = vmatprep.subr.mxu0 0.0
    %2083 = vmatpush1.msra.mxu0 0.0
    %2084 = vmatprep.subr.mxu0 0.0
    %2085 = vmatpush1.msra.mxu0 0.0
    %2086 = vmatprep.subr.mxu0 0.0
    %2087 = vmatpush1.msra.mxu0 0.0
    %2088 = vmatprep.subr.mxu0 0.0
    %2089 = vmatpush1.msra.mxu0 0.0
    %2090 = vmatprep.subr.mxu0 0.0
    %2091 = vmatpush1.msra.mxu0 0.0
    %2092 = vmatprep.subr.mxu0 0.0
    %2093 = vmatpush1.msra.mxu0 0.0
    %2094 = vmatprep.subr.mxu0 0.0
    %2095 = vmatpush1.msra.mxu0 0.0
    %2096 = vmatprep.subr.mxu0 0.0
    %2097 = vmatpush1.msra.mxu0 0.0
    %2098 = vmatprep.subr.mxu0 0.0
    %2099 = vmatpush1.msra.mxu0 0.0
    %2100 = vmatprep.subr.mxu0 0.0
    %2101 = vmatpush1.msra.mxu0 0.0
    %2102 = vmatprep.subr.mxu0 0.0
    %2103 = vmatpush1.msra.mxu0 0.0
    %2104 = vmatprep.subr.mxu0 0.0
    %2105 = vmatpush1.msra.mxu0 0.0
    %2106 = vmatprep.subr.mxu0 0.0
    %2107 = vmatpush1.msra.mxu0 0.0
    %2108 = vmatprep.subr.mxu0 0.0
    %2109 = vmatpush1.msra.mxu0 0.0
    %2110 = vmatprep.subr.mxu0 0.0
    %2111 = vmatpush1.msra.mxu0 0.0
    %2112 = vmatprep.subr.mxu0 0.0
    %2113 = vmatpush1.msra.mxu0 0.0
    %2114 = vmatprep.subr.mxu0 0.0
    %2115 = vmatpush1.msra.mxu0 0.0
    %2116 = vmatprep.subr.mxu0 0.0
    %2117 = vmatpush1.msra.mxu0 0.0
    %2118 = vmatprep.subr.mxu0 0.0
    %2119 = vmatpush1.msra.mxu0 0.0
    %2120 = vmatprep.subr.mxu0 0.0
    %2121 = vmatpush1.msra.mxu0 0.0
    %2122 = vmatprep.subr.mxu0 0.0
    %2123 = vmatpush1.msra.mxu0 0.0
    %2124 = vmatprep.subr.mxu0 0.0
    %2125 = vmatpush1.msra.mxu0 0.0
    %2126 = vmatprep.subr.mxu0 0.0
    %2127 = vmatpush1.msra.mxu0 0.0
    %2128 = vmatprep.subr.mxu0 0.0
    %2129 = vmatpush1.msra.mxu0 0.0
    %2130 = vmatprep.subr.mxu0 0.0
    %2131 = vmatpush1.msra.mxu0 0.0
    %2132 = vmatprep.subr.mxu0 0.0
    %2133 = vmatpush1.msra.mxu0 0.0
    %2134 = vmatprep.mubr.f32.mxu0 0.0
    %2135 = vmatmul.mubr.f32.gmra.mrb[0].mxu0 %v1551
    %v2136 = vpop.f32.mrb[0].mxu0
    %v2137 = vadd.f32 %v158, %v2136
    %v2138 = vpop.f32.mrb[0].mxu0
    %2139 = vdwg.mxu0
    %v2140 = vadd.f32 %v2069, %v2137
    %v2141 = vxor.u32 %v2140, 2147483648
    %v2142 = vmul.f32 %v2141, 1.442695
    %v2143 = vpow.pop %v2142
    %v2144 = vadd.f32 %v2143, 1.0
    %v2145 = vrcp.pop %v2144
    %v2146 = vmul.f32 1.0, %v2145
    %2148 = vrot.lane.b32.xlu0 %v2137, 64
    %v2149 = vpop.permute.xlu0 %2148
    %v2151 = vmul.f32 %v2146, %v2149
    %2153 = vrot.lane.b32.xlu0 %v2151, 64
    %v2154 = vpop.permute.xlu0 %2153
    %v2156 = vadd.f32 %v2069, %v2154
    %v2157 = vtanh.pop %v2156
    %v2158 = vsub.f32 1.0, %v2146
    %2160 = vrot.lane.b32.xlu0 %v2157, 96
    %v2161 = vpop.permute.xlu0 %2160
    %v2163 = vmul.f32 %v2158, %v2161
    %v2164 = vmul.f32 %v2146, %v1547
    %v2165 = vadd.f32 %v2163, %v2164
    %2167 = vrot.lane.b32.xlu0 %v2165, 96
    %v2168 = vpop.permute.xlu0 %2167
    %v2169 = vsel %vm80, %v2168, 0
    %2171 = vmatprep.subr.mxu0 0.0
    %2172 = vmatpush1.msra.mxu0 %v51
    %2173 = vmatprep.subr.mxu0 0.0
    %2174 = vmatpush1.msra.mxu0 %v52
    %2175 = vmatprep.subr.mxu0 0.0
    %2176 = vmatpush1.msra.mxu0 %v53
    %2177 = vmatprep.subr.mxu0 0.0
    %2178 = vmatpush1.msra.mxu0 %v54
    %2179 = vmatprep.subr.mxu0 0.0
    %2180 = vmatpush1.msra.mxu0 0.0
    %2181 = vmatprep.subr.mxu0 0.0
    %2182 = vmatpush1.msra.mxu0 0.0
    %2183 = vmatprep.subr.mxu0 0.0
    %2184 = vmatpush1.msra.mxu0 0.0
    %2185 = vmatprep.subr.mxu0 0.0
    %2186 = vmatpush1.msra.mxu0 0.0
    %2187 = vmatprep.subr.mxu0 0.0
    %2188 = vmatpush1.msra.mxu0 0.0
    %2189 = vmatprep.subr.mxu0 0.0
    %2190 = vmatpush1.msra.mxu0 0.0
    %2191 = vmatprep.subr.mxu0 0.0
    %2192 = vmatpush1.msra.mxu0 0.0
    %2193 = vmatprep.subr.mxu0 0.0
    %2194 = vmatpush1.msra.mxu0 0.0
    %2195 = vmatprep.subr.mxu0 0.0
    %2196 = vmatpush1.msra.mxu0 0.0
    %2197 = vmatprep.subr.mxu0 0.0
    %2198 = vmatpush1.msra.mxu0 0.0
    %2199 = vmatprep.subr.mxu0 0.0
    %2200 = vmatpush1.msra.mxu0 0.0
    %2201 = vmatprep.subr.mxu0 0.0
    %2202 = vmatpush1.msra.mxu0 0.0
    %2203 = vmatprep.subr.mxu0 0.0
    %2204 = vmatpush1.msra.mxu0 0.0
    %2205 = vmatprep.subr.mxu0 0.0
    %2206 = vmatpush1.msra.mxu0 0.0
    %2207 = vmatprep.subr.mxu0 0.0
    %2208 = vmatpush1.msra.mxu0 0.0
    %2209 = vmatprep.subr.mxu0 0.0
    %2210 = vmatpush1.msra.mxu0 0.0
    %2211 = vmatprep.subr.mxu0 0.0
    %2212 = vmatpush1.msra.mxu0 0.0
    %2213 = vmatprep.subr.mxu0 0.0
    %2214 = vmatpush1.msra.mxu0 0.0
    %2215 = vmatprep.subr.mxu0 0.0
    %2216 = vmatpush1.msra.mxu0 0.0
    %2217 = vmatprep.subr.mxu0 0.0
    %2218 = vmatpush1.msra.mxu0 0.0
    %2219 = vmatprep.subr.mxu0 0.0
    %2220 = vmatpush1.msra.mxu0 0.0
    %2221 = vmatprep.subr.mxu0 0.0
    %2222 = vmatpush1.msra.mxu0 0.0
    %2223 = vmatprep.subr.mxu0 0.0
    %2224 = vmatpush1.msra.mxu0 0.0
    %2225 = vmatprep.subr.mxu0 0.0
    %2226 = vmatpush1.msra.mxu0 0.0
    %2227 = vmatprep.subr.mxu0 0.0
    %2228 = vmatpush1.msra.mxu0 0.0
    %2229 = vmatprep.subr.mxu0 0.0
    %2230 = vmatpush1.msra.mxu0 0.0
    %2231 = vmatprep.subr.mxu0 0.0
    %2232 = vmatpush1.msra.mxu0 0.0
    %2233 = vmatprep.subr.mxu0 0.0
    %2234 = vmatpush1.msra.mxu0 0.0
    %2235 = vmatprep.mubr.f32.mxu0 0.0
    %2236 = vmatmul.mubr.f32.gmra.mrb[0].mxu0 %v2169
    %v2237 = vpop.f32.mrb[0].mxu0
    %v2238 = vadd.f32 %v264, %v2237
    %v2239 = vpop.f32.mrb[0].mxu0
    %2240 = vdwg.mxu0
    %2241 = vmatprep.subr.mxu0 0.0
    %2242 = vmatpush1.msra.mxu0 %v55
    %2243 = vmatprep.subr.mxu0 0.0
    %2244 = vmatpush1.msra.mxu0 %v56
    %2245 = vmatprep.subr.mxu0 0.0
    %2246 = vmatpush1.msra.mxu0 %v57
    %2247 = vmatprep.subr.mxu0 0.0
    %2248 = vmatpush1.msra.mxu0 %v58
    %2249 = vmatprep.subr.mxu0 0.0
    %2250 = vmatpush1.msra.mxu0 0.0
    %2251 = vmatprep.subr.mxu0 0.0
    %2252 = vmatpush1.msra.mxu0 0.0
    %2253 = vmatprep.subr.mxu0 0.0
    %2254 = vmatpush1.msra.mxu0 0.0
    %2255 = vmatprep.subr.mxu0 0.0
    %2256 = vmatpush1.msra.mxu0 0.0
    %2257 = vmatprep.subr.mxu0 0.0
    %2258 = vmatpush1.msra.mxu0 0.0
    %2259 = vmatprep.subr.mxu0 0.0
    %2260 = vmatpush1.msra.mxu0 0.0
    %2261 = vmatprep.subr.mxu0 0.0
    %2262 = vmatpush1.msra.mxu0 0.0
    %2263 = vmatprep.subr.mxu0 0.0
    %2264 = vmatpush1.msra.mxu0 0.0
    %2265 = vmatprep.subr.mxu0 0.0
    %2266 = vmatpush1.msra.mxu0 0.0
    %2267 = vmatprep.subr.mxu0 0.0
    %2268 = vmatpush1.msra.mxu0 0.0
    %2269 = vmatprep.subr.mxu0 0.0
    %2270 = vmatpush1.msra.mxu0 0.0
    %2271 = vmatprep.subr.mxu0 0.0
    %2272 = vmatpush1.msra.mxu0 0.0
    %2273 = vmatprep.subr.mxu0 0.0
    %2274 = vmatpush1.msra.mxu0 0.0
    %2275 = vmatprep.subr.mxu0 0.0
    %2276 = vmatpush1.msra.mxu0 0.0
    %2277 = vmatprep.subr.mxu0 0.0
    %2278 = vmatpush1.msra.mxu0 0.0
    %2279 = vmatprep.subr.mxu0 0.0
    %2280 = vmatpush1.msra.mxu0 0.0
    %2281 = vmatprep.subr.mxu0 0.0
    %2282 = vmatpush1.msra.mxu0 0.0
    %2283 = vmatprep.subr.mxu0 0.0
    %2284 = vmatpush1.msra.mxu0 0.0
    %2285 = vmatprep.subr.mxu0 0.0
    %2286 = vmatpush1.msra.mxu0 0.0
    %2287 = vmatprep.subr.mxu0 0.0
    %2288 = vmatpush1.msra.mxu0 0.0
    %2289 = vmatprep.subr.mxu0 0.0
    %2290 = vmatpush1.msra.mxu0 0.0
    %2291 = vmatprep.subr.mxu0 0.0
    %2292 = vmatpush1.msra.mxu0 0.0
    %2293 = vmatprep.subr.mxu0 0.0
    %2294 = vmatpush1.msra.mxu0 0.0
    %2295 = vmatprep.subr.mxu0 0.0
    %2296 = vmatpush1.msra.mxu0 0.0
    %2297 = vmatprep.subr.mxu0 0.0
    %2298 = vmatpush1.msra.mxu0 0.0
    %2299 = vmatprep.subr.mxu0 0.0
    %2300 = vmatpush1.msra.mxu0 0.0
    %2301 = vmatprep.subr.mxu0 0.0
    %2302 = vmatpush1.msra.mxu0 0.0
    %2303 = vmatprep.subr.mxu0 0.0
    %2304 = vmatpush1.msra.mxu0 0.0
    %2305 = vmatprep.mubr.f32.mxu0 0.0
    %2306 = vmatmul.mubr.f32.gmra.mrb[0].mxu0 %v1722
    %v2307 = vpop.f32.mrb[0].mxu0
    %v2308 = vadd.f32 %v343, %v2307
    %v2309 = vpop.f32.mrb[0].mxu0
    %2310 = vdwg.mxu0
    %v2311 = vadd.f32 %v2238, %v2308
    %v2312 = vxor.u32 %v2311, 2147483648
    %v2313 = vmul.f32 %v2312, 1.442695
    %v2314 = vpow.pop %v2313
    %v2315 = vadd.f32 %v2314, 1.0
    %v2316 = vrcp.pop %v2315
    %v2317 = vmul.f32 1.0, %v2316
    %2319 = vrot.lane.b32.xlu0 %v2308, 64
    %v2320 = vpop.permute.xlu0 %2319
    %v2322 = vmul.f32 %v2317, %v2320
    %2324 = vrot.lane.b32.xlu0 %v2322, 64
    %v2325 = vpop.permute.xlu0 %2324
    %v2327 = vadd.f32 %v2238, %v2325
    %v2328 = vtanh.pop %v2327
    %v2329 = vsub.f32 1.0, %v2317
    %2331 = vrot.lane.b32.xlu0 %v2328, 96
    %v2332 = vpop.permute.xlu0 %2331
    %v2334 = vmul.f32 %v2329, %v2332
    %v2335 = vmul.f32 %v2317, %v1718
    %v2336 = vadd.f32 %v2334, %v2335
    %2338 = vrot.lane.b32.xlu0 %v2336, 96
    %v2339 = vpop.permute.xlu0 %2338
    %v2340 = vsel %vm80, %v2339, 0
    %2342 = vmatprep.subr.mxu0 0.0
    %2343 = vmatpush1.msra.mxu0 %v59
    %2344 = vmatprep.subr.mxu0 0.0
    %2345 = vmatpush1.msra.mxu0 %v60
    %2346 = vmatprep.subr.mxu0 0.0
    %2347 = vmatpush1.msra.mxu0 %v61
    %2348 = vmatprep.subr.mxu0 0.0
    %2349 = vmatpush1.msra.mxu0 %v62
    %2350 = vmatprep.subr.mxu0 0.0
    %2351 = vmatpush1.msra.mxu0 0.0
    %2352 = vmatprep.subr.mxu0 0.0
    %2353 = vmatpush1.msra.mxu0 0.0
    %2354 = vmatprep.subr.mxu0 0.0
    %2355 = vmatpush1.msra.mxu0 0.0
    %2356 = vmatprep.subr.mxu0 0.0
    %2357 = vmatpush1.msra.mxu0 0.0
    %2358 = vmatprep.subr.mxu0 0.0
    %2359 = vmatpush1.msra.mxu0 0.0
    %2360 = vmatprep.subr.mxu0 0.0
    %2361 = vmatpush1.msra.mxu0 0.0
    %2362 = vmatprep.subr.mxu0 0.0
    %2363 = vmatpush1.msra.mxu0 0.0
    %2364 = vmatprep.subr.mxu0 0.0
    %2365 = vmatpush1.msra.mxu0 0.0
    %2366 = vmatprep.subr.mxu0 0.0
    %2367 = vmatpush1.msra.mxu0 0.0
    %2368 = vmatprep.subr.mxu0 0.0
    %2369 = vmatpush1.msra.mxu0 0.0
    %2370 = vmatprep.subr.mxu0 0.0
    %2371 = vmatpush1.msra.mxu0 0.0
    %2372 = vmatprep.subr.mxu0 0.0
    %2373 = vmatpush1.msra.mxu0 0.0
    %2374 = vmatprep.subr.mxu0 0.0
    %2375 = vmatpush1.msra.mxu0 0.0
    %2376 = vmatprep.subr.mxu0 0.0
    %2377 = vmatpush1.msra.mxu0 0.0
    %2378 = vmatprep.subr.mxu0 0.0
    %2379 = vmatpush1.msra.mxu0 0.0
    %2380 = vmatprep.subr.mxu0 0.0
    %2381 = vmatpush1.msra.mxu0 0.0
    %2382 = vmatprep.subr.mxu0 0.0
    %2383 = vmatpush1.msra.mxu0 0.0
    %2384 = vmatprep.subr.mxu0 0.0
    %2385 = vmatpush1.msra.mxu0 0.0
    %2386 = vmatprep.subr.mxu0 0.0
    %2387 = vmatpush1.msra.mxu0 0.0
    %2388 = vmatprep.subr.mxu0 0.0
    %2389 = vmatpush1.msra.mxu0 0.0
    %2390 = vmatprep.subr.mxu0 0.0
    %2391 = vmatpush1.msra.mxu0 0.0
    %2392 = vmatprep.subr.mxu0 0.0
    %2393 = vmatpush1.msra.mxu0 0.0
    %2394 = vmatprep.subr.mxu0 0.0
    %2395 = vmatpush1.msra.mxu0 0.0
    %2396 = vmatprep.subr.mxu0 0.0
    %2397 = vmatpush1.msra.mxu0 0.0
    %2398 = vmatprep.subr.mxu0 0.0
    %2399 = vmatpush1.msra.mxu0 0.0
    %2400 = vmatprep.subr.mxu0 0.0
    %2401 = vmatpush1.msra.mxu0 0.0
    %2402 = vmatprep.subr.mxu0 0.0
    %2403 = vmatpush1.msra.mxu0 0.0
    %2404 = vmatprep.subr.mxu0 0.0
    %2405 = vmatpush1.msra.mxu0 0.0
    %2406 = vmatprep.mubr.f32.mxu0 0.0
    %2407 = vmatmul.mubr.f32.gmra.mrb[0].mxu0 %v2340
    %v2408 = vpop.f32.mrb[0].mxu0
    %v2409 = vadd.f32 0.0, %v2408
    %v2410 = vpop.f32.mrb[0].mxu0
    %2411 = vdwg.mxu0
    %v2414 = vunpack.c.l.s4 1966171168
    %v2415 = vunpack.c.0.s8 %v2414
    %v2416 = vlaneseq
    %v2417 = vshrl.u32 %v2416, 7
    %v2418 = vsub.s32 %v2415, %v2417
    %v2419 = vrot.slane %v2409, %v2418
    %v2420 = vcombine.high %v2419, %v2419
    %v2422 = vunpack.c.l.s4 1966171168
    %v2423 = vunpack.c.0.s8 %v2422
    %v2424 = vlaneseq
    %v2425 = vshrl.u32 %v2424, 7
    %v2426 = vsub.s32 %v2423, %v2425
    %v2427 = vrot.slane %v2419, %v2426
    %v2429 = vunpack.c.l.s4 1966171168
    %v2430 = vunpack.c.0.s8 %v2429
    %v2431 = vlaneseq
    %v2432 = vshrl.u32 %v2431, 7
    %v2433 = vsub.s32 %v2430, %v2432
    %v2434 = vrot.slane %v2420, %v2433
    %v2435 = vlaneseq
    %v2436 = vshrl.u32 %v2435, 7
    %v2437 = vsub.s32 0, %v2436
    %v2438 = vrot.slane %v2427, %v2437
    %v2439 = vlaneseq
    %v2440 = vshrl.u32 %v2439, 7
    %v2441 = vsub.s32 0, %v2440
    %v2442 = vrot.slane %v2434, %v2441
    %v2445 = vadd.f32 %v38, %v2438
    %v2446 = vadd.f32 %v39, %v2442
    %v2447 = vtanh.pop %v2445
    %v2448 = vtanh.pop %v2446
    %v2449 = vmul.f32 %v2447, %v74
    %v2450 = vmul.f32 %v2448, %v74
    %v2451 = vsel %vm80, %v2449, 0.0
    %2452 = vadd.xlane.f32.xlu0 %v2451
    %v2453 = vpop.xlane.xlu0 %2452
    %v2454 = vsel %vm80, %v2450, 0.0
    %2455 = vadd.xlane.f32.xlu0 %v2454
    %v2456 = vpop.xlane.xlu0 %2455
    %v2457 = vmul.f32 %v2453, %v573
    %v2458 = vmul.f32 %v2456, %v580
    %v2459 = vadd.f32 %v2457, %v592
    %v2460 = vadd.f32 %v2458, %v599
    %v2461 = vmul.f32 %v2459, 1.442695
    %v2462 = vpow.pop %v2461
    %v2463 = vmul.f32 %v2460, 1.442695
    %v2464 = vpow.pop %v2463
    %2467 = vset.pattern.permute.xlu0 0
    %2468 = vperm.xlu0 %2467, %v2462
    %v2469 = vpop.permute.xlu0 %2468
    %2470 = vset.pattern.permute.xlu0 0
    %2471 = vperm.xlu0 %2470, %v2464
    %v2472 = vpop.permute.xlu0 %2471
    %v2473 = vlaneseq
    %v2474 = vshrl.u32 %v2473, 7
    %v2475 = vsub.s32 %v617, %v2474
    %v2476 = vrot.slane %v2469, %v2475
    %v2477 = vlaneseq
    %v2478 = vshrl.u32 %v2477, 7
    %v2479 = vsub.s32 %v617, %v2478
    %v2480 = vrot.slane %v2472, %v2479
    %v2481 = vsel %vm626, %v2480, %v2476
    %v2483 = vsel %vm629, %v2481, 0.0
    %2484 = vadd.xlane.f32.xlu0 %v2483
    %v2485 = vpop.xlane.xlu0 %2484
    %v2486 = vrcp.pop %v2485
    %v2488 = vlaneseq
    %v2489 = vshrl.u32 %v2488, 7
    %v2490 = vsub.s32 0, %v2489
    %v2491 = vrot.slane %v2486, %v2490
    %v2492 = vlaneseq
    %v2493 = vshrl.u32 %v2492, 7
    %v2494 = vsub.s32 1, %v2493
    %v2495 = vrot.slane %v2486, %v2494
    %v2498 = vmul.f32 %v2462, %v2491
    %v2499 = vmul.f32 %v2464, %v2495
    %2501 = vset.pattern.permute.xlu0 0
    %2502 = vperm.xlu0 %2501, %v2498
    %v2503 = vpop.permute.xlu0 %2502
    %2506 = vset.pattern.permute.xlu0 0
    %2507 = vperm.xlu0 %2506, %v2499
    %v2508 = vpop.permute.xlu0 %2507
    %v2510 = vmul.f32 %v2503, %v36
    %v2511 = vmul.f32 %v2508, %v37
    %v2512 = vsel %vm80, %v2510, 0.0
    %v2513 = vrot.slane %v2512, 4
    %v2514 = vadd.f32 %v2512, %v2513
    %v2515 = vrot.slane %v2514, 2
    %v2516 = vadd.f32 %v2514, %v2515
    %v2517 = vrot.slane %v2516, 1
    %v2518 = vadd.f32 %v2516, %v2517
    %v2519 = vsel %vm80, %v2511, 0.0
    %v2520 = vrot.slane %v2519, 4
    %v2521 = vadd.f32 %v2519, %v2520
    %v2522 = vrot.slane %v2521, 2
    %v2523 = vadd.f32 %v2521, %v2522
    %v2524 = vrot.slane %v2523, 1
    %v2525 = vadd.f32 %v2523, %v2524
    %s2526 = scalar_lea.vmem %s1, 6
    %v2527 = vld [vmem:[%s2526] sm:$0x3]
    %2528 = vrot.lane.b32.xlu0 %v2409, 96
    %v2529 = vpop.permute.xlu0 %2528
    %v2531 = vadd.f32 %v2527, %v2529
    %v2534 = vsel %vm626, %v2525, %v2518
    %v2535 = vsel %vm80, %v2534, 0
    %2537 = vmatprep.subr.mxu0 0.0
    %2538 = vmatpush1.msra.mxu0 %v63
    %2539 = vmatprep.subr.mxu0 0.0
    %2540 = vmatpush1.msra.mxu0 %v64
    %2541 = vmatprep.subr.mxu0 0.0
    %2542 = vmatpush1.msra.mxu0 %v65
    %2543 = vmatprep.subr.mxu0 0.0
    %2544 = vmatpush1.msra.mxu0 %v66
    %2545 = vmatprep.subr.mxu0 0.0
    %2546 = vmatpush1.msra.mxu0 0.0
    %2547 = vmatprep.subr.mxu0 0.0
    %2548 = vmatpush1.msra.mxu0 0.0
    %2549 = vmatprep.subr.mxu0 0.0
    %2550 = vmatpush1.msra.mxu0 0.0
    %2551 = vmatprep.subr.mxu0 0.0
    %2552 = vmatpush1.msra.mxu0 0.0
    %2553 = vmatprep.subr.mxu0 0.0
    %2554 = vmatpush1.msra.mxu0 0.0
    %2555 = vmatprep.subr.mxu0 0.0
    %2556 = vmatpush1.msra.mxu0 0.0
    %2557 = vmatprep.subr.mxu0 0.0
    %2558 = vmatpush1.msra.mxu0 0.0
    %2559 = vmatprep.subr.mxu0 0.0
    %2560 = vmatpush1.msra.mxu0 0.0
    %2561 = vmatprep.subr.mxu0 0.0
    %2562 = vmatpush1.msra.mxu0 0.0
    %2563 = vmatprep.subr.mxu0 0.0
    %2564 = vmatpush1.msra.mxu0 0.0
    %2565 = vmatprep.subr.mxu0 0.0
    %2566 = vmatpush1.msra.mxu0 0.0
    %2567 = vmatprep.subr.mxu0 0.0
    %2568 = vmatpush1.msra.mxu0 0.0
    %2569 = vmatprep.subr.mxu0 0.0
    %2570 = vmatpush1.msra.mxu0 0.0
    %2571 = vmatprep.subr.mxu0 0.0
    %2572 = vmatpush1.msra.mxu0 0.0
    %2573 = vmatprep.subr.mxu0 0.0
    %2574 = vmatpush1.msra.mxu0 0.0
    %2575 = vmatprep.subr.mxu0 0.0
    %2576 = vmatpush1.msra.mxu0 0.0
    %2577 = vmatprep.subr.mxu0 0.0
    %2578 = vmatpush1.msra.mxu0 0.0
    %2579 = vmatprep.subr.mxu0 0.0
    %2580 = vmatpush1.msra.mxu0 0.0
    %2581 = vmatprep.subr.mxu0 0.0
    %2582 = vmatpush1.msra.mxu0 0.0
    %2583 = vmatprep.subr.mxu0 0.0
    %2584 = vmatpush1.msra.mxu0 0.0
    %2585 = vmatprep.subr.mxu0 0.0
    %2586 = vmatpush1.msra.mxu0 0.0
    %2587 = vmatprep.subr.mxu0 0.0
    %2588 = vmatpush1.msra.mxu0 0.0
    %2589 = vmatprep.subr.mxu0 0.0
    %2590 = vmatpush1.msra.mxu0 0.0
    %2591 = vmatprep.subr.mxu0 0.0
    %2592 = vmatpush1.msra.mxu0 0.0
    %2593 = vmatprep.subr.mxu0 0.0
    %2594 = vmatpush1.msra.mxu0 0.0
    %2595 = vmatprep.subr.mxu0 0.0
    %2596 = vmatpush1.msra.mxu0 0.0
    %2597 = vmatprep.subr.mxu0 0.0
    %2598 = vmatpush1.msra.mxu0 0.0
    %2599 = vmatprep.subr.mxu0 0.0
    %2600 = vmatpush1.msra.mxu0 0.0
    %2601 = vmatprep.mubr.f32.mxu0 0.0
    %2602 = vmatmul.mubr.f32.gmra.mrb[0].mxu0 %v2535
    %v2603 = vpop.f32.mrb[0].mxu0
    %v2604 = vadd.f32 0.0, %v2603
    %v2605 = vpop.f32.mrb[0].mxu0
    %2606 = vdwg.mxu0
    %v2607 = vadd.f32 %v2531, %v2604
    %2609 = vrot.lane.b32.xlu0 %v2607, 112
    %v2610 = vpop.permute.xlu0 %2609
    %v2612 = vmax.f32 %v2607, %v2610
    %s2613 = scalar_lea.vmem [#allocation2], 6
    %2614 = vst.msk [vmem:[%s2613] sm:$0x3] %vm759, %v2612
    %s2615 = scalar_lea.vmem %s0, 8
    %v2616 = vld [vmem:[%s2615] sm:$0x3]
    %2617 = vmatprep.subr.mxu0 0.0
    %2618 = vmatpush1.msra.mxu0 %v43
    %2619 = vmatprep.subr.mxu0 0.0
    %2620 = vmatpush1.msra.mxu0 %v44
    %2621 = vmatprep.subr.mxu0 0.0
    %2622 = vmatpush1.msra.mxu0 %v45
    %2623 = vmatprep.subr.mxu0 0.0
    %2624 = vmatpush1.msra.mxu0 %v46
    %2625 = vmatprep.subr.mxu0 0.0
    %2626 = vmatpush1.msra.mxu0 0.0
    %2627 = vmatprep.subr.mxu0 0.0
    %2628 = vmatpush1.msra.mxu0 0.0
    %2629 = vmatprep.subr.mxu0 0.0
    %2630 = vmatpush1.msra.mxu0 0.0
    %2631 = vmatprep.subr.mxu0 0.0
    %2632 = vmatpush1.msra.mxu0 0.0
    %2633 = vmatprep.subr.mxu0 0.0
    %2634 = vmatpush1.msra.mxu0 0.0
    %2635 = vmatprep.subr.mxu0 0.0
    %2636 = vmatpush1.msra.mxu0 0.0
    %2637 = vmatprep.subr.mxu0 0.0
    %2638 = vmatpush1.msra.mxu0 0.0
    %2639 = vmatprep.subr.mxu0 0.0
    %2640 = vmatpush1.msra.mxu0 0.0
    %2641 = vmatprep.subr.mxu0 0.0
    %2642 = vmatpush1.msra.mxu0 0.0
    %2643 = vmatprep.subr.mxu0 0.0
    %2644 = vmatpush1.msra.mxu0 0.0
    %2645 = vmatprep.subr.mxu0 0.0
    %2646 = vmatpush1.msra.mxu0 0.0
    %2647 = vmatprep.subr.mxu0 0.0
    %2648 = vmatpush1.msra.mxu0 0.0
    %2649 = vmatprep.subr.mxu0 0.0
    %2650 = vmatpush1.msra.mxu0 0.0
    %2651 = vmatprep.subr.mxu0 0.0
    %2652 = vmatpush1.msra.mxu0 0.0
    %2653 = vmatprep.subr.mxu0 0.0
    %2654 = vmatpush1.msra.mxu0 0.0
    %2655 = vmatprep.subr.mxu0 0.0
    %2656 = vmatpush1.msra.mxu0 0.0
    %2657 = vmatprep.subr.mxu0 0.0
    %2658 = vmatpush1.msra.mxu0 0.0
    %2659 = vmatprep.subr.mxu0 0.0
    %2660 = vmatpush1.msra.mxu0 0.0
    %2661 = vmatprep.subr.mxu0 0.0
    %2662 = vmatpush1.msra.mxu0 0.0
    %2663 = vmatprep.subr.mxu0 0.0
    %2664 = vmatpush1.msra.mxu0 0.0
    %2665 = vmatprep.subr.mxu0 0.0
    %2666 = vmatpush1.msra.mxu0 0.0
    %2667 = vmatprep.subr.mxu0 0.0
    %2668 = vmatpush1.msra.mxu0 0.0
    %2669 = vmatprep.subr.mxu0 0.0
    %2670 = vmatpush1.msra.mxu0 0.0
    %2671 = vmatprep.subr.mxu0 0.0
    %2672 = vmatpush1.msra.mxu0 0.0
    %2673 = vmatprep.subr.mxu0 0.0
    %2674 = vmatpush1.msra.mxu0 0.0
    %2675 = vmatprep.subr.mxu0 0.0
    %2676 = vmatpush1.msra.mxu0 0.0
    %2677 = vmatprep.subr.mxu0 0.0
    %2678 = vmatpush1.msra.mxu0 0.0
    %2679 = vmatprep.subr.mxu0 0.0
    %2680 = vmatpush1.msra.mxu0 0.0
    %2681 = vmatprep.mubr.f32.mxu0 0.0
    %2682 = vmatmul.mubr.f32.gmra.mrb[0].mxu0 %v2535
    %v2683 = vpop.f32.mrb[0].mxu0
    %v2684 = vadd.f32 0.0, %v2683
    %v2685 = vpop.f32.mrb[0].mxu0
    %2686 = vdwg.mxu0
    %v2687 = vadd.f32 %v2616, %v2684
    %2688 = vmatprep.subr.mxu0 0.0
    %2689 = vmatpush1.msra.mxu0 %v47
    %2690 = vmatprep.subr.mxu0 0.0
    %2691 = vmatpush1.msra.mxu0 %v48
    %2692 = vmatprep.subr.mxu0 0.0
    %2693 = vmatpush1.msra.mxu0 %v49
    %2694 = vmatprep.subr.mxu0 0.0
    %2695 = vmatpush1.msra.mxu0 %v50
    %2696 = vmatprep.subr.mxu0 0.0
    %2697 = vmatpush1.msra.mxu0 0.0
    %2698 = vmatprep.subr.mxu0 0.0
    %2699 = vmatpush1.msra.mxu0 0.0
    %2700 = vmatprep.subr.mxu0 0.0
    %2701 = vmatpush1.msra.mxu0 0.0
    %2702 = vmatprep.subr.mxu0 0.0
    %2703 = vmatpush1.msra.mxu0 0.0
    %2704 = vmatprep.subr.mxu0 0.0
    %2705 = vmatpush1.msra.mxu0 0.0
    %2706 = vmatprep.subr.mxu0 0.0
    %2707 = vmatpush1.msra.mxu0 0.0
    %2708 = vmatprep.subr.mxu0 0.0
    %2709 = vmatpush1.msra.mxu0 0.0
    %2710 = vmatprep.subr.mxu0 0.0
    %2711 = vmatpush1.msra.mxu0 0.0
    %2712 = vmatprep.subr.mxu0 0.0
    %2713 = vmatpush1.msra.mxu0 0.0
    %2714 = vmatprep.subr.mxu0 0.0
    %2715 = vmatpush1.msra.mxu0 0.0
    %2716 = vmatprep.subr.mxu0 0.0
    %2717 = vmatpush1.msra.mxu0 0.0
    %2718 = vmatprep.subr.mxu0 0.0
    %2719 = vmatpush1.msra.mxu0 0.0
    %2720 = vmatprep.subr.mxu0 0.0
    %2721 = vmatpush1.msra.mxu0 0.0
    %2722 = vmatprep.subr.mxu0 0.0
    %2723 = vmatpush1.msra.mxu0 0.0
    %2724 = vmatprep.subr.mxu0 0.0
    %2725 = vmatpush1.msra.mxu0 0.0
    %2726 = vmatprep.subr.mxu0 0.0
    %2727 = vmatpush1.msra.mxu0 0.0
    %2728 = vmatprep.subr.mxu0 0.0
    %2729 = vmatpush1.msra.mxu0 0.0
    %2730 = vmatprep.subr.mxu0 0.0
    %2731 = vmatpush1.msra.mxu0 0.0
    %2732 = vmatprep.subr.mxu0 0.0
    %2733 = vmatpush1.msra.mxu0 0.0
    %2734 = vmatprep.subr.mxu0 0.0
    %2735 = vmatpush1.msra.mxu0 0.0
    %2736 = vmatprep.subr.mxu0 0.0
    %2737 = vmatpush1.msra.mxu0 0.0
    %2738 = vmatprep.subr.mxu0 0.0
    %2739 = vmatpush1.msra.mxu0 0.0
    %2740 = vmatprep.subr.mxu0 0.0
    %2741 = vmatpush1.msra.mxu0 0.0
    %2742 = vmatprep.subr.mxu0 0.0
    %2743 = vmatpush1.msra.mxu0 0.0
    %2744 = vmatprep.subr.mxu0 0.0
    %2745 = vmatpush1.msra.mxu0 0.0
    %2746 = vmatprep.subr.mxu0 0.0
    %2747 = vmatpush1.msra.mxu0 0.0
    %2748 = vmatprep.subr.mxu0 0.0
    %2749 = vmatpush1.msra.mxu0 0.0
    %2750 = vmatprep.subr.mxu0 0.0
    %2751 = vmatpush1.msra.mxu0 0.0
    %2752 = vmatprep.mubr.f32.mxu0 0.0
    %2753 = vmatmul.mubr.f32.gmra.mrb[0].mxu0 %v2169
    %v2754 = vpop.f32.mrb[0].mxu0
    %v2755 = vadd.f32 %v158, %v2754
    %v2756 = vpop.f32.mrb[0].mxu0
    %2757 = vdwg.mxu0
    %v2758 = vadd.f32 %v2687, %v2755
    %v2759 = vxor.u32 %v2758, 2147483648
    %v2760 = vmul.f32 %v2759, 1.442695
    %v2761 = vpow.pop %v2760
    %v2762 = vadd.f32 %v2761, 1.0
    %v2763 = vrcp.pop %v2762
    %v2764 = vmul.f32 1.0, %v2763
    %2766 = vrot.lane.b32.xlu0 %v2755, 64
    %v2767 = vpop.permute.xlu0 %2766
    %v2769 = vmul.f32 %v2764, %v2767
    %2771 = vrot.lane.b32.xlu0 %v2769, 64
    %v2772 = vpop.permute.xlu0 %2771
    %v2774 = vadd.f32 %v2687, %v2772
    %v2775 = vtanh.pop %v2774
    %v2776 = vsub.f32 1.0, %v2764
    %2778 = vrot.lane.b32.xlu0 %v2775, 96
    %v2779 = vpop.permute.xlu0 %2778
    %v2781 = vmul.f32 %v2776, %v2779
    %v2782 = vmul.f32 %v2764, %v2165
    %v2783 = vadd.f32 %v2781, %v2782
    %2785 = vrot.lane.b32.xlu0 %v2783, 96
    %v2786 = vpop.permute.xlu0 %2785
    %v2787 = vsel %vm80, %v2786, 0
    %2789 = vmatprep.subr.mxu0 0.0
    %2790 = vmatpush1.msra.mxu0 %v51
    %2791 = vmatprep.subr.mxu0 0.0
    %2792 = vmatpush1.msra.mxu0 %v52
    %2793 = vmatprep.subr.mxu0 0.0
    %2794 = vmatpush1.msra.mxu0 %v53
    %2795 = vmatprep.subr.mxu0 0.0
    %2796 = vmatpush1.msra.mxu0 %v54
    %2797 = vmatprep.subr.mxu0 0.0
    %2798 = vmatpush1.msra.mxu0 0.0
    %2799 = vmatprep.subr.mxu0 0.0
    %2800 = vmatpush1.msra.mxu0 0.0
    %2801 = vmatprep.subr.mxu0 0.0
    %2802 = vmatpush1.msra.mxu0 0.0
    %2803 = vmatprep.subr.mxu0 0.0
    %2804 = vmatpush1.msra.mxu0 0.0
    %2805 = vmatprep.subr.mxu0 0.0
    %2806 = vmatpush1.msra.mxu0 0.0
    %2807 = vmatprep.subr.mxu0 0.0
    %2808 = vmatpush1.msra.mxu0 0.0
    %2809 = vmatprep.subr.mxu0 0.0
    %2810 = vmatpush1.msra.mxu0 0.0
    %2811 = vmatprep.subr.mxu0 0.0
    %2812 = vmatpush1.msra.mxu0 0.0
    %2813 = vmatprep.subr.mxu0 0.0
    %2814 = vmatpush1.msra.mxu0 0.0
    %2815 = vmatprep.subr.mxu0 0.0
    %2816 = vmatpush1.msra.mxu0 0.0
    %2817 = vmatprep.subr.mxu0 0.0
    %2818 = vmatpush1.msra.mxu0 0.0
    %2819 = vmatprep.subr.mxu0 0.0
    %2820 = vmatpush1.msra.mxu0 0.0
    %2821 = vmatprep.subr.mxu0 0.0
    %2822 = vmatpush1.msra.mxu0 0.0
    %2823 = vmatprep.subr.mxu0 0.0
    %2824 = vmatpush1.msra.mxu0 0.0
    %2825 = vmatprep.subr.mxu0 0.0
    %2826 = vmatpush1.msra.mxu0 0.0
    %2827 = vmatprep.subr.mxu0 0.0
    %2828 = vmatpush1.msra.mxu0 0.0
    %2829 = vmatprep.subr.mxu0 0.0
    %2830 = vmatpush1.msra.mxu0 0.0
    %2831 = vmatprep.subr.mxu0 0.0
    %2832 = vmatpush1.msra.mxu0 0.0
    %2833 = vmatprep.subr.mxu0 0.0
    %2834 = vmatpush1.msra.mxu0 0.0
    %2835 = vmatprep.subr.mxu0 0.0
    %2836 = vmatpush1.msra.mxu0 0.0
    %2837 = vmatprep.subr.mxu0 0.0
    %2838 = vmatpush1.msra.mxu0 0.0
    %2839 = vmatprep.subr.mxu0 0.0
    %2840 = vmatpush1.msra.mxu0 0.0
    %2841 = vmatprep.subr.mxu0 0.0
    %2842 = vmatpush1.msra.mxu0 0.0
    %2843 = vmatprep.subr.mxu0 0.0
    %2844 = vmatpush1.msra.mxu0 0.0
    %2845 = vmatprep.subr.mxu0 0.0
    %2846 = vmatpush1.msra.mxu0 0.0
    %2847 = vmatprep.subr.mxu0 0.0
    %2848 = vmatpush1.msra.mxu0 0.0
    %2849 = vmatprep.subr.mxu0 0.0
    %2850 = vmatpush1.msra.mxu0 0.0
    %2851 = vmatprep.subr.mxu0 0.0
    %2852 = vmatpush1.msra.mxu0 0.0
    %2853 = vmatprep.mubr.f32.mxu0 0.0
    %2854 = vmatmul.mubr.f32.gmra.mrb[0].mxu0 %v2787
    %v2855 = vpop.f32.mrb[0].mxu0
    %v2856 = vadd.f32 %v264, %v2855
    %v2857 = vpop.f32.mrb[0].mxu0
    %2858 = vdwg.mxu0
    %2859 = vmatprep.subr.mxu0 0.0
    %2860 = vmatpush1.msra.mxu0 %v55
    %2861 = vmatprep.subr.mxu0 0.0
    %2862 = vmatpush1.msra.mxu0 %v56
    %2863 = vmatprep.subr.mxu0 0.0
    %2864 = vmatpush1.msra.mxu0 %v57
    %2865 = vmatprep.subr.mxu0 0.0
    %2866 = vmatpush1.msra.mxu0 %v58
    %2867 = vmatprep.subr.mxu0 0.0
    %2868 = vmatpush1.msra.mxu0 0.0
    %2869 = vmatprep.subr.mxu0 0.0
    %2870 = vmatpush1.msra.mxu0 0.0
    %2871 = vmatprep.subr.mxu0 0.0
    %2872 = vmatpush1.msra.mxu0 0.0
    %2873 = vmatprep.subr.mxu0 0.0
    %2874 = vmatpush1.msra.mxu0 0.0
    %2875 = vmatprep.subr.mxu0 0.0
    %2876 = vmatpush1.msra.mxu0 0.0
    %2877 = vmatprep.subr.mxu0 0.0
    %2878 = vmatpush1.msra.mxu0 0.0
    %2879 = vmatprep.subr.mxu0 0.0
    %2880 = vmatpush1.msra.mxu0 0.0
    %2881 = vmatprep.subr.mxu0 0.0
    %2882 = vmatpush1.msra.mxu0 0.0
    %2883 = vmatprep.subr.mxu0 0.0
    %2884 = vmatpush1.msra.mxu0 0.0
    %2885 = vmatprep.subr.mxu0 0.0
    %2886 = vmatpush1.msra.mxu0 0.0
    %2887 = vmatprep.subr.mxu0 0.0
    %2888 = vmatpush1.msra.mxu0 0.0
    %2889 = vmatprep.subr.mxu0 0.0
    %2890 = vmatpush1.msra.mxu0 0.0
    %2891 = vmatprep.subr.mxu0 0.0
    %2892 = vmatpush1.msra.mxu0 0.0
    %2893 = vmatprep.subr.mxu0 0.0
    %2894 = vmatpush1.msra.mxu0 0.0
    %2895 = vmatprep.subr.mxu0 0.0
    %2896 = vmatpush1.msra.mxu0 0.0
    %2897 = vmatprep.subr.mxu0 0.0
    %2898 = vmatpush1.msra.mxu0 0.0
    %2899 = vmatprep.subr.mxu0 0.0
    %2900 = vmatpush1.msra.mxu0 0.0
    %2901 = vmatprep.subr.mxu0 0.0
    %2902 = vmatpush1.msra.mxu0 0.0
    %2903 = vmatprep.subr.mxu0 0.0
    %2904 = vmatpush1.msra.mxu0 0.0
    %2905 = vmatprep.subr.mxu0 0.0
    %2906 = vmatpush1.msra.mxu0 0.0
    %2907 = vmatprep.subr.mxu0 0.0
    %2908 = vmatpush1.msra.mxu0 0.0
    %2909 = vmatprep.subr.mxu0 0.0
    %2910 = vmatpush1.msra.mxu0 0.0
    %2911 = vmatprep.subr.mxu0 0.0
    %2912 = vmatpush1.msra.mxu0 0.0
    %2913 = vmatprep.subr.mxu0 0.0
    %2914 = vmatpush1.msra.mxu0 0.0
    %2915 = vmatprep.subr.mxu0 0.0
    %2916 = vmatpush1.msra.mxu0 0.0
    %2917 = vmatprep.subr.mxu0 0.0
    %2918 = vmatpush1.msra.mxu0 0.0
    %2919 = vmatprep.subr.mxu0 0.0
    %2920 = vmatpush1.msra.mxu0 0.0
    %2921 = vmatprep.subr.mxu0 0.0
    %2922 = vmatpush1.msra.mxu0 0.0
    %2923 = vmatprep.mubr.f32.mxu0 0.0
    %2924 = vmatmul.mubr.f32.gmra.mrb[0].mxu0 %v2340
    %v2925 = vpop.f32.mrb[0].mxu0
    %v2926 = vadd.f32 %v343, %v2925
    %v2927 = vpop.f32.mrb[0].mxu0
    %2928 = vdwg.mxu0
    %v2929 = vadd.f32 %v2856, %v2926
    %v2930 = vxor.u32 %v2929, 2147483648
    %v2931 = vmul.f32 %v2930, 1.442695
    %v2932 = vpow.pop %v2931
    %v2933 = vadd.f32 %v2932, 1.0
    %v2934 = vrcp.pop %v2933
    %v2935 = vmul.f32 1.0, %v2934
    %2937 = vrot.lane.b32.xlu0 %v2926, 64
    %v2938 = vpop.permute.xlu0 %2937
    %v2940 = vmul.f32 %v2935, %v2938
    %2942 = vrot.lane.b32.xlu0 %v2940, 64
    %v2943 = vpop.permute.xlu0 %2942
    %v2945 = vadd.f32 %v2856, %v2943
    %v2946 = vtanh.pop %v2945
    %v2947 = vsub.f32 1.0, %v2935
    %2949 = vrot.lane.b32.xlu0 %v2946, 96
    %v2950 = vpop.permute.xlu0 %2949
    %v2952 = vmul.f32 %v2947, %v2950
    %v2953 = vmul.f32 %v2935, %v2336
    %v2954 = vadd.f32 %v2952, %v2953
    %2956 = vrot.lane.b32.xlu0 %v2954, 96
    %v2957 = vpop.permute.xlu0 %2956
    %v2958 = vsel %vm80, %v2957, 0
    %2960 = vmatprep.subr.mxu0 0.0
    %2961 = vmatpush1.msra.mxu0 %v59
    %2962 = vmatprep.subr.mxu0 0.0
    %2963 = vmatpush1.msra.mxu0 %v60
    %2964 = vmatprep.subr.mxu0 0.0
    %2965 = vmatpush1.msra.mxu0 %v61
    %2966 = vmatprep.subr.mxu0 0.0
    %2967 = vmatpush1.msra.mxu0 %v62
    %2968 = vmatprep.subr.mxu0 0.0
    %2969 = vmatpush1.msra.mxu0 0.0
    %2970 = vmatprep.subr.mxu0 0.0
    %2971 = vmatpush1.msra.mxu0 0.0
    %2972 = vmatprep.subr.mxu0 0.0
    %2973 = vmatpush1.msra.mxu0 0.0
    %2974 = vmatprep.subr.mxu0 0.0
    %2975 = vmatpush1.msra.mxu0 0.0
    %2976 = vmatprep.subr.mxu0 0.0
    %2977 = vmatpush1.msra.mxu0 0.0
    %2978 = vmatprep.subr.mxu0 0.0
    %2979 = vmatpush1.msra.mxu0 0.0
    %2980 = vmatprep.subr.mxu0 0.0
    %2981 = vmatpush1.msra.mxu0 0.0
    %2982 = vmatprep.subr.mxu0 0.0
    %2983 = vmatpush1.msra.mxu0 0.0
    %2984 = vmatprep.subr.mxu0 0.0
    %2985 = vmatpush1.msra.mxu0 0.0
    %2986 = vmatprep.subr.mxu0 0.0
    %2987 = vmatpush1.msra.mxu0 0.0
    %2988 = vmatprep.subr.mxu0 0.0
    %2989 = vmatpush1.msra.mxu0 0.0
    %2990 = vmatprep.subr.mxu0 0.0
    %2991 = vmatpush1.msra.mxu0 0.0
    %2992 = vmatprep.subr.mxu0 0.0
    %2993 = vmatpush1.msra.mxu0 0.0
    %2994 = vmatprep.subr.mxu0 0.0
    %2995 = vmatpush1.msra.mxu0 0.0
    %2996 = vmatprep.subr.mxu0 0.0
    %2997 = vmatpush1.msra.mxu0 0.0
    %2998 = vmatprep.subr.mxu0 0.0
    %2999 = vmatpush1.msra.mxu0 0.0
    %3000 = vmatprep.subr.mxu0 0.0
    %3001 = vmatpush1.msra.mxu0 0.0
    %3002 = vmatprep.subr.mxu0 0.0
    %3003 = vmatpush1.msra.mxu0 0.0
    %3004 = vmatprep.subr.mxu0 0.0
    %3005 = vmatpush1.msra.mxu0 0.0
    %3006 = vmatprep.subr.mxu0 0.0
    %3007 = vmatpush1.msra.mxu0 0.0
    %3008 = vmatprep.subr.mxu0 0.0
    %3009 = vmatpush1.msra.mxu0 0.0
    %3010 = vmatprep.subr.mxu0 0.0
    %3011 = vmatpush1.msra.mxu0 0.0
    %3012 = vmatprep.subr.mxu0 0.0
    %3013 = vmatpush1.msra.mxu0 0.0
    %3014 = vmatprep.subr.mxu0 0.0
    %3015 = vmatpush1.msra.mxu0 0.0
    %3016 = vmatprep.subr.mxu0 0.0
    %3017 = vmatpush1.msra.mxu0 0.0
    %3018 = vmatprep.subr.mxu0 0.0
    %3019 = vmatpush1.msra.mxu0 0.0
    %3020 = vmatprep.subr.mxu0 0.0
    %3021 = vmatpush1.msra.mxu0 0.0
    %3022 = vmatprep.subr.mxu0 0.0
    %3023 = vmatpush1.msra.mxu0 0.0
    %3024 = vmatprep.mubr.f32.mxu0 0.0
    %3025 = vmatmul.mubr.f32.gmra.mrb[0].mxu0 %v2958
    %v3026 = vpop.f32.mrb[0].mxu0
    %v3027 = vadd.f32 0.0, %v3026
    %v3028 = vpop.f32.mrb[0].mxu0
    %3029 = vdwg.mxu0
    %v3032 = vunpack.c.l.s4 1966171168
    %v3033 = vunpack.c.0.s8 %v3032
    %v3034 = vlaneseq
    %v3035 = vshrl.u32 %v3034, 7
    %v3036 = vsub.s32 %v3033, %v3035
    %v3037 = vrot.slane %v3027, %v3036
    %v3038 = vcombine.high %v3037, %v3037
    %v3040 = vunpack.c.l.s4 1966171168
    %v3041 = vunpack.c.0.s8 %v3040
    %v3042 = vlaneseq
    %v3043 = vshrl.u32 %v3042, 7
    %v3044 = vsub.s32 %v3041, %v3043
    %v3045 = vrot.slane %v3037, %v3044
    %v3047 = vunpack.c.l.s4 1966171168
    %v3048 = vunpack.c.0.s8 %v3047
    %v3049 = vlaneseq
    %v3050 = vshrl.u32 %v3049, 7
    %v3051 = vsub.s32 %v3048, %v3050
    %v3052 = vrot.slane %v3038, %v3051
    %v3053 = vlaneseq
    %v3054 = vshrl.u32 %v3053, 7
    %v3055 = vsub.s32 0, %v3054
    %v3056 = vrot.slane %v3045, %v3055
    %v3057 = vlaneseq
    %v3058 = vshrl.u32 %v3057, 7
    %v3059 = vsub.s32 0, %v3058
    %v3060 = vrot.slane %v3052, %v3059
    %v3063 = vadd.f32 %v38, %v3056
    %v3064 = vadd.f32 %v39, %v3060
    %v3065 = vtanh.pop %v3063
    %v3066 = vtanh.pop %v3064
    %v3067 = vmul.f32 %v3065, %v74
    %v3068 = vmul.f32 %v3066, %v74
    %v3069 = vsel %vm80, %v3067, 0.0
    %3070 = vadd.xlane.f32.xlu0 %v3069
    %v3071 = vpop.xlane.xlu0 %3070
    %v3072 = vsel %vm80, %v3068, 0.0
    %3073 = vadd.xlane.f32.xlu0 %v3072
    %v3074 = vpop.xlane.xlu0 %3073
    %v3075 = vmul.f32 %v3071, %v573
    %v3076 = vmul.f32 %v3074, %v580
    %v3077 = vadd.f32 %v3075, %v592
    %v3078 = vadd.f32 %v3076, %v599
    %v3079 = vmul.f32 %v3077, 1.442695
    %v3080 = vpow.pop %v3079
    %v3081 = vmul.f32 %v3078, 1.442695
    %v3082 = vpow.pop %v3081
    %3085 = vset.pattern.permute.xlu0 0
    %3086 = vperm.xlu0 %3085, %v3080
    %v3087 = vpop.permute.xlu0 %3086
    %3088 = vset.pattern.permute.xlu0 0
    %3089 = vperm.xlu0 %3088, %v3082
    %v3090 = vpop.permute.xlu0 %3089
    %v3091 = vlaneseq
    %v3092 = vshrl.u32 %v3091, 7
    %v3093 = vsub.s32 %v617, %v3092
    %v3094 = vrot.slane %v3087, %v3093
    %v3095 = vlaneseq
    %v3096 = vshrl.u32 %v3095, 7
    %v3097 = vsub.s32 %v617, %v3096
    %v3098 = vrot.slane %v3090, %v3097
    %v3099 = vsel %vm626, %v3098, %v3094
    %v3101 = vsel %vm629, %v3099, 0.0
    %3102 = vadd.xlane.f32.xlu0 %v3101
    %v3103 = vpop.xlane.xlu0 %3102
    %v3104 = vrcp.pop %v3103
    %v3106 = vlaneseq
    %v3107 = vshrl.u32 %v3106, 7
    %v3108 = vsub.s32 0, %v3107
    %v3109 = vrot.slane %v3104, %v3108
    %v3110 = vlaneseq
    %v3111 = vshrl.u32 %v3110, 7
    %v3112 = vsub.s32 1, %v3111
    %v3113 = vrot.slane %v3104, %v3112
    %v3116 = vmul.f32 %v3080, %v3109
    %v3117 = vmul.f32 %v3082, %v3113
    %3119 = vset.pattern.permute.xlu0 0
    %3120 = vperm.xlu0 %3119, %v3116
    %v3121 = vpop.permute.xlu0 %3120
    %3124 = vset.pattern.permute.xlu0 0
    %3125 = vperm.xlu0 %3124, %v3117
    %v3126 = vpop.permute.xlu0 %3125
    %v3128 = vmul.f32 %v3121, %v36
    %v3129 = vmul.f32 %v3126, %v37
    %v3130 = vsel %vm80, %v3128, 0.0
    %v3131 = vrot.slane %v3130, 4
    %v3132 = vadd.f32 %v3130, %v3131
    %v3133 = vrot.slane %v3132, 2
    %v3134 = vadd.f32 %v3132, %v3133
    %v3135 = vrot.slane %v3134, 1
    %v3136 = vadd.f32 %v3134, %v3135
    %v3137 = vsel %vm80, %v3129, 0.0
    %v3138 = vrot.slane %v3137, 4
    %v3139 = vadd.f32 %v3137, %v3138
    %v3140 = vrot.slane %v3139, 2
    %v3141 = vadd.f32 %v3139, %v3140
    %v3142 = vrot.slane %v3141, 1
    %v3143 = vadd.f32 %v3141, %v3142
    %s3144 = scalar_lea.vmem %s1, 8
    %v3145 = vld [vmem:[%s3144] sm:$0x3]
    %3146 = vrot.lane.b32.xlu0 %v3027, 96
    %v3147 = vpop.permute.xlu0 %3146
    %v3149 = vadd.f32 %v3145, %v3147
    %v3152 = vsel %vm626, %v3143, %v3136
    %v3153 = vsel %vm80, %v3152, 0
    %3155 = vmatprep.subr.mxu0 0.0
    %3156 = vmatpush1.msra.mxu0 %v63
    %3157 = vmatprep.subr.mxu0 0.0
    %3158 = vmatpush1.msra.mxu0 %v64
    %3159 = vmatprep.subr.mxu0 0.0
    %3160 = vmatpush1.msra.mxu0 %v65
    %3161 = vmatprep.subr.mxu0 0.0
    %3162 = vmatpush1.msra.mxu0 %v66
    %3163 = vmatprep.subr.mxu0 0.0
    %3164 = vmatpush1.msra.mxu0 0.0
    %3165 = vmatprep.subr.mxu0 0.0
    %3166 = vmatpush1.msra.mxu0 0.0
    %3167 = vmatprep.subr.mxu0 0.0
    %3168 = vmatpush1.msra.mxu0 0.0
    %3169 = vmatprep.subr.mxu0 0.0
    %3170 = vmatpush1.msra.mxu0 0.0
    %3171 = vmatprep.subr.mxu0 0.0
    %3172 = vmatpush1.msra.mxu0 0.0
    %3173 = vmatprep.subr.mxu0 0.0
    %3174 = vmatpush1.msra.mxu0 0.0
    %3175 = vmatprep.subr.mxu0 0.0
    %3176 = vmatpush1.msra.mxu0 0.0
    %3177 = vmatprep.subr.mxu0 0.0
    %3178 = vmatpush1.msra.mxu0 0.0
    %3179 = vmatprep.subr.mxu0 0.0
    %3180 = vmatpush1.msra.mxu0 0.0
    %3181 = vmatprep.subr.mxu0 0.0
    %3182 = vmatpush1.msra.mxu0 0.0
    %3183 = vmatprep.subr.mxu0 0.0
    %3184 = vmatpush1.msra.mxu0 0.0
    %3185 = vmatprep.subr.mxu0 0.0
    %3186 = vmatpush1.msra.mxu0 0.0
    %3187 = vmatprep.subr.mxu0 0.0
    %3188 = vmatpush1.msra.mxu0 0.0
    %3189 = vmatprep.subr.mxu0 0.0
    %3190 = vmatpush1.msra.mxu0 0.0
    %3191 = vmatprep.subr.mxu0 0.0
    %3192 = vmatpush1.msra.mxu0 0.0
    %3193 = vmatprep.subr.mxu0 0.0
    %3194 = vmatpush1.msra.mxu0 0.0
    %3195 = vmatprep.subr.mxu0 0.0
    %3196 = vmatpush1.msra.mxu0 0.0
    %3197 = vmatprep.subr.mxu0 0.0
    %3198 = vmatpush1.msra.mxu0 0.0
    %3199 = vmatprep.subr.mxu0 0.0
    %3200 = vmatpush1.msra.mxu0 0.0
    %3201 = vmatprep.subr.mxu0 0.0
    %3202 = vmatpush1.msra.mxu0 0.0
    %3203 = vmatprep.subr.mxu0 0.0
    %3204 = vmatpush1.msra.mxu0 0.0
    %3205 = vmatprep.subr.mxu0 0.0
    %3206 = vmatpush1.msra.mxu0 0.0
    %3207 = vmatprep.subr.mxu0 0.0
    %3208 = vmatpush1.msra.mxu0 0.0
    %3209 = vmatprep.subr.mxu0 0.0
    %3210 = vmatpush1.msra.mxu0 0.0
    %3211 = vmatprep.subr.mxu0 0.0
    %3212 = vmatpush1.msra.mxu0 0.0
    %3213 = vmatprep.subr.mxu0 0.0
    %3214 = vmatpush1.msra.mxu0 0.0
    %3215 = vmatprep.subr.mxu0 0.0
    %3216 = vmatpush1.msra.mxu0 0.0
    %3217 = vmatprep.subr.mxu0 0.0
    %3218 = vmatpush1.msra.mxu0 0.0
    %3219 = vmatprep.mubr.f32.mxu0 0.0
    %3220 = vmatmul.mubr.f32.gmra.mrb[0].mxu0 %v3153
    %v3221 = vpop.f32.mrb[0].mxu0
    %v3222 = vadd.f32 0.0, %v3221
    %v3223 = vpop.f32.mrb[0].mxu0
    %3224 = vdwg.mxu0
    %v3225 = vadd.f32 %v3149, %v3222
    %3227 = vrot.lane.b32.xlu0 %v3225, 112
    %v3228 = vpop.permute.xlu0 %3227
    %v3230 = vmax.f32 %v3225, %v3228
    %s3231 = scalar_lea.vmem [#allocation2], 8
    %3232 = vst.msk [vmem:[%s3231] sm:$0x3] %vm759, %v3230
    %vm3234 = vcmask 254976
    %3235 = vst.msk [vmem:[#allocation4] sm:$0x3] %vm3234, %v2786
    %s3237 = scalar_lea.vmem [#allocation4], 2
    %3238 = vst.msk [vmem:[%s3237] sm:$0x3] %vm3234, %v2957
    %v3239 = vlaneseq
    %v3240 = vshrl.u32 %v3239, 7
    %v3241 = vsub.s32 %v617, %v3240
    %v3242 = vrot.slane %v3121, %v3241
    %v3243 = vlaneseq
    %v3244 = vshrl.u32 %v3243, 7
    %v3245 = vsub.s32 %v617, %v3244
    %v3246 = vrot.slane %v3126, %v3245
    %v3247 = vsel %vm626, %v3246, %v3242
    %3249 = vst.msk [vmem:[#allocation6] sm:$0x3] %vm629, %v3247
    %3251 = vst.msk [vmem:[#allocation7] sm:$0x3] %vm3234, %v3152
    // Predicated region
    $region34: #{tpu_custom_call.1} parent=1 // pred_check
      _
    $region35: #{tpu_custom_call.1} parent=1 // pred_check_branch
      %3253 = sbr.rel (0) target = $region37
    $region36: #{tpu_custom_call.1} parent=1 // pred_region
      %s3255 = ssub.s32 160, 160
      %3256 = vsyncadd [#allocation3], %s3255
      %s3257 = sshll.u32 [#allocation2], 4
      %s3258 = int_to_ptr.vmem [resolvable:$true] %s3257
      %3263 = dma.vmem_to_hbm [thread:$0]  %s3258, 160, %s8, [#allocation3], 32, 32, 2
    $region37: #{tpu_custom_call.1} parent=1 // pred_fallthru
      _
    // Predicated region
    $region38: #{tpu_custom_call.1} parent=1 // pred_check
      _
    $region39: #{tpu_custom_call.1} parent=1 // pred_check_branch
      %3265 = sbr.rel (0) target = $region41
    $region40: #{tpu_custom_call.1} parent=1 // pred_region
      %s3267 = ssub.s32 64, 64
      %3268 = vsyncadd [#allocation5], %s3267
      %s3269 = sshll.u32 [#allocation4], 4
      %s3270 = int_to_ptr.vmem [resolvable:$true] %s3269
      %3275 = dma.vmem_to_hbm [thread:$0]  %s3270, 64, %s9, [#allocation5], 32, 32, 2
    $region41: #{tpu_custom_call.1} parent=1 // pred_fallthru
      _
    // Predicated region
    $region42: #{tpu_custom_call.1} parent=1 // pred_check
      _
    $region43: #{tpu_custom_call.1} parent=1 // pred_check_branch
      %3277 = sbr.rel (0) target = $region45
    $region44: #{tpu_custom_call.1} parent=1 // pred_region
      %s3279 = ssub.s32 32, 32
      %3280 = vsyncadd [#allocation5], %s3279
      %s3282 = sshll.u32 [#allocation6], 4
      %s3283 = int_to_ptr.vmem [resolvable:$true] %s3282
      %3285 = dma.vmem_to_hbm [thread:$0]  %s3283, 32, %s10, [#allocation5]
    $region45: #{tpu_custom_call.1} parent=1 // pred_fallthru
      _
    // Predicated region
    $region46: #{tpu_custom_call.1} parent=1 // pred_check
      _
    $region47: #{tpu_custom_call.1} parent=1 // pred_check_branch
      %3287 = sbr.rel (0) target = $region49
    $region48: #{tpu_custom_call.1} parent=1 // pred_region
      %s3289 = ssub.s32 32, 32
      %3290 = vsyncadd [#allocation8], %s3289
      %s3292 = sshll.u32 [#allocation7], 4
      %s3293 = int_to_ptr.vmem [resolvable:$true] %s3292
      %3295 = dma.vmem_to_hbm [thread:$0]  %s3293, 32, %s11, [#allocation8]
    $region49: #{tpu_custom_call.1} parent=1 // pred_fallthru
      _
    // Predicated region
    $region50: #{tpu_custom_call.1} parent=1 // pred_check
      _
    $region51: #{tpu_custom_call.1} parent=1 // pred_check_branch
      %3297 = sbr.rel (0) target = $region53
    $region52: #{tpu_custom_call.1} parent=1 // pred_region
      %3298 = dma.done [#allocation3], 160
    $region53: #{tpu_custom_call.1} parent=1 // pred_fallthru
      _
    // Predicated region
    $region54: #{tpu_custom_call.1} parent=1 // pred_check
      _
    $region55: #{tpu_custom_call.1} parent=1 // pred_check_branch
      %3300 = sbr.rel (0) target = $region57
    $region56: #{tpu_custom_call.1} parent=1 // pred_region
      %3301 = dma.done [#allocation5], 64
    $region57: #{tpu_custom_call.1} parent=1 // pred_fallthru
      _
    // Predicated region
    $region58: #{tpu_custom_call.1} parent=1 // pred_check
      _
    $region59: #{tpu_custom_call.1} parent=1 // pred_check_branch
      %3303 = sbr.rel (0) target = $region61
    $region60: #{tpu_custom_call.1} parent=1 // pred_region
      %3304 = dma.done [#allocation5], 32
    $region61: #{tpu_custom_call.1} parent=1 // pred_fallthru
      _
    // Predicated region
    $region62: #{tpu_custom_call.1} parent=1 // pred_check
      _
    $region63: #{tpu_custom_call.1} parent=1 // pred_check_branch
      %3306 = sbr.rel (0) target = $region65
    $region64: #{tpu_custom_call.1} parent=1 // pred_region
      %3307 = dma.done [#allocation8], 32
    $region65: #{tpu_custom_call.1} parent=1 // pred_fallthru
      _
    %3308 = vsyncpa [#allocation3], 1
    %3309 = vsyncpa [#allocation5], 1
    %3310 = vsyncpa [#allocation8], 1

</llo_original>
